<compile_context>
chip_gen: v7x
topology: tpu7x:2x2x1
jax: 0.10.0
libtpu: 0.0.40
codegen_flags: <defaults>
</compile_context>

<pallas_src>
import math

import jax
import jax.numpy as jnp
from jax.experimental import pallas as pl
from jax.experimental.pallas import tpu as pltpu

# ----------------------------- config ---------------------------------------
VOCAB = 100
BATCH = 2
SEQ = 8
HIDDEN = 32
HEADS = 2
HEAD_DIM = HIDDEN // HEADS
FFN = 64
LAYERS = 2
LN_EPS = 1e-12
NEG_INF = -1e9


# ----------------------------- fused kernel ----------------------------------
def _ln(x, g, b):
    mu = jnp.mean(x, axis=-1, keepdims=True)
    var = jnp.mean(jnp.square(x - mu), axis=-1, keepdims=True)
    return (x - mu) * jax.lax.rsqrt(var + LN_EPS) * g + b


def fused_encoder_pool_kernel(
    h0_ref, bias_ref, pool_ref,
    embg_ref, embb_ref,
    wqkv_ref, bqkv_ref, wo_ref, bo_ref, ln1g_ref, ln1b_ref,
    w1_ref, b1_ref, w2_ref, b2_ref, ln2g_ref, ln2b_ref,
    out_ref,
):
    """One grid program == one block of whole sequences; all activations stay
    in VMEM/vregs from embedding-LN through pooling."""
    n_layers = wqkv_ref.shape[0]
    n_heads = wqkv_ref.shape[2]

    x = _ln(h0_ref[...], embg_ref[...], embb_ref[...])            # (N, D) f32
    # Block-diagonal additive key bias (padding + cross-sequence), built once
    # in the wrapper and loaded ONCE here (hoisted out of layer/head loops).
    bias = bias_ref[0]                                            # (N, N) f32

    for l in range(n_layers):                                     # static unroll
        xb = x.astype(jnp.bfloat16)                               # MXU inputs in bf16
        attn = None
        for h in range(n_heads):                                  # head-major ref indexing
            q = jnp.dot(xb, wqkv_ref[l, 0, h],
                        preferred_element_type=jnp.float32) + bqkv_ref[l, 0, h]
            k = jnp.dot(xb, wqkv_ref[l, 1, h],
                        preferred_element_type=jnp.float32) + bqkv_ref[l, 1, h]
            v = jnp.dot(xb, wqkv_ref[l, 2, h],
                        preferred_element_type=jnp.float32) + bqkv_ref[l, 2, h]

            # q @ k^T without materializing the transpose (1/sqrt(Dh) folded in wq/bq)
            s = jax.lax.dot_general(
                q.astype(jnp.bfloat16), k.astype(jnp.bfloat16),
                (((1,), (1,)), ((), ())),
                preferred_element_type=jnp.float32,
            ) + bias                                              # (N, N) f32

            mx = jnp.max(s, axis=-1, keepdims=True)
            e = jnp.exp(s - mx)
            p = e * pl.reciprocal(jnp.sum(e, axis=-1, keepdims=True), approx=True)

            ctx = jnp.dot(p.astype(jnp.bfloat16), v.astype(jnp.bfloat16),
                          preferred_element_type=jnp.float32)     # (N, Dh)
            # merge-heads fused into the output projection:
            #   ctx_full @ Wo == sum_h ctx_h @ Wo[h]
            part = jnp.dot(ctx.astype(jnp.bfloat16), wo_ref[l, h],
                           preferred_element_type=jnp.float32)    # (N, D)
            attn = part if attn is None else attn + part

        x = _ln(attn + bo_ref[l] + x, ln1g_ref[l], ln1b_ref[l])   # residual + LN (f32)

        xb = x.astype(jnp.bfloat16)
        f = jnp.dot(xb, w1_ref[l], preferred_element_type=jnp.float32) + b1_ref[l]
        # TODO(synk): HF BERT default is exact erf GELU; tanh approximation kept
        # because erf lowering inside Mosaic is not guaranteed.
        f = jax.nn.gelu(f, approximate=True)
        f = jnp.dot(f.astype(jnp.bfloat16), w2_ref[l],
                    preferred_element_type=jnp.float32) + b2_ref[l]
        x = _ln(f + x, ln2g_ref[l], ln2b_ref[l])                  # residual + LN (f32)

    # Masked mean pooling as one matmul; mask is folded into the pooling matrix.
    pool = pool_ref[0]                                            # (NB, N) f32
    sum_emb = jnp.dot(pool, x, preferred_element_type=jnp.float32)        # (NB, D)
    denom = jnp.maximum(jnp.sum(pool, axis=-1, keepdims=True), 1e-9)      # clamp(min=1e-9)
    out_ref[...] = sum_emb / denom                                # exact final divide


# ----------------------------- wrapper ----------------------------------------
def _resident(shape):
    """Full-array block, constant block index across the grid -> weight stays
    VMEM-resident for every grid step.
    TODO(synk): add pipeline_mode=pl.Buffered(1) once the grid has multiple
    steps; with num_blocks=1 there is a single step so nothing to double-buffer."""
    nd = len(shape)
    return pl.BlockSpec(tuple(shape), lambda blk, nd=nd: (0,) * nd)


def custom_sentence_transformer(params, input_ids, attention_mask, num_blocks=1):
    """Equivalent of CustomSentenceTransformer.forward.

    num_blocks=1 -> one program over the whole batch (best for single-TC v5e/v6e);
    num_blocks=2 -> one program per TensorCore on v7x."""
    B, S = input_ids.shape
    assert B % num_blocks == 0
    nb = B // num_blocks                 # sequences per program
    n = nb * S                           # tokens per program
    mask_f = attention_mask.astype(jnp.float32)

    # TODO(synk): embedding gather kept in XLA (glue); could be fused via
    # scalar-prefetched input_ids + in-kernel jnp.take on a resident tok_emb.
    h0 = (params["tok_emb"][input_ids] + params["pos_emb"][None, :, :]).reshape(
        B * S, HIDDEN
    )

    # Block-diagonal additive attention bias: token i may attend to token j iff
    # both belong to the same sequence and j is not padding.
    seq_of = jnp.arange(n) // S                                   # (n,)
    same = (seq_of[:, None] == seq_of[None, :]).astype(jnp.float32)   # (n, n)
    mask_blk = mask_f.reshape(num_blocks, nb, S)
    key_valid = mask_blk.reshape(num_blocks, 1, n)                # (blk, 1, n)
    key_bias = (1.0 - same[None] * key_valid) * NEG_INF           # (blk, n, n)

    # Pooling matrix: pool[blk, b, t] = mask(t) if token t belongs to sequence b.
    eye = jnp.eye(nb, dtype=jnp.float32)
    pool = jnp.einsum("bc,kcs->kbcs", eye, mask_blk).reshape(num_blocks, nb, n)

    weight_args = (
        params["emb_ln_g"], params["emb_ln_b"],
        params["wqkv"], params["bqkv"],
        params["wo"], params["bo"], params["ln1_g"], params["ln1_b"],
        params["w1"], params["b1"], params["w2"], params["b2"],
        params["ln2_g"], params["ln2_b"],
    )

    in_specs = [
        pl.BlockSpec((n, HIDDEN), lambda blk: (blk, 0)),          # tokens of this block
        pl.BlockSpec((1, n, n), lambda blk: (blk, 0, 0)),         # additive key bias
        pl.BlockSpec((1, nb, n), lambda blk: (blk, 0, 0)),        # pooling matrix
    ] + [_resident(w.shape) for w in weight_args]

    out = pl.pallas_call(
        fused_encoder_pool_kernel,
        grid=(num_blocks,),
        in_specs=in_specs,
        out_specs=pl.BlockSpec((nb, HIDDEN), lambda blk: (blk, 0)),
        out_shape=jax.ShapeDtypeStruct((B, HIDDEN), jnp.float32),
        compiler_params=pltpu.CompilerParams(
            dimension_semantics=("parallel",),                    # megacore on v7x
        ),
    )(h0, key_bias, pool, *weight_args)

    return out                                                    # (B, HIDDEN)


# ----------------------------- synthetic encoder weights ----------------------
def init_params(key):
    def norm(k, shape, scale=0.02):
        return scale * jax.random.normal(k, shape, jnp.float32)

    def split_cols(w):   # (D, D) -> (H, D, Dh): per-head column blocks, head-major
        return jnp.transpose(w.reshape(HIDDEN, HEADS, HEAD_DIM), (1, 0, 2))

    keys = jax.random.split(key, 2 + LAYERS)
    attn_scale = 1.0 / math.sqrt(HEAD_DIM)

    wqkv, bqkv, wo, bo = [], [], [], []
    ln1_g, ln1_b, w1, b1 = [], [], [], []
    w2, b2, ln2_g, ln2_b = [], [], [], []
    for l in range(LAYERS):
        lk = jax.random.split(keys[2 + l], 6)
        # 1/sqrt(Dh) folded into BOTH wq and bq (exact for any checkpoint).
        wq = split_cols(norm(lk[0], (HIDDEN, HIDDEN))) * attn_scale
        wk = split_cols(norm(lk[1], (HIDDEN, HIDDEN)))
        wv = split_cols(norm(lk[2], (HIDDEN, HIDDEN)))
        wqkv.append(jnp.stack([wq, wk, wv], axis=0))              # (3, H, D, Dh)
        bq = jnp.zeros((HEADS, 1, HEAD_DIM), jnp.float32) * attn_scale
        bk = jnp.zeros((HEADS, 1, HEAD_DIM), jnp.float32)
        bv = jnp.zeros((HEADS, 1, HEAD_DIM), jnp.float32)
        bqkv.append(jnp.stack([bq, bk, bv], axis=0))              # (3, H, 1, Dh)
        wo.append(norm(lk[3], (HIDDEN, HIDDEN)).reshape(HEADS, HEAD_DIM, HIDDEN))
        bo.append(jnp.zeros((1, HIDDEN), jnp.float32))
        ln1_g.append(jnp.ones((1, HIDDEN), jnp.float32))
        ln1_b.append(jnp.zeros((1, HIDDEN), jnp.float32))
        w1.append(norm(lk[4], (HIDDEN, FFN)))
        b1.append(jnp.zeros((1, FFN), jnp.float32))
        w2.append(norm(lk[5], (FFN, HIDDEN)))
        b2.append(jnp.zeros((1, HIDDEN), jnp.float32))
        ln2_g.append(jnp.ones((1, HIDDEN), jnp.float32))
        ln2_b.append(jnp.zeros((1, HIDDEN), jnp.float32))

    stack = lambda xs: jnp.stack(xs, axis=0)
    bf16 = lambda x: x.astype(jnp.bfloat16)     # matmul weights in bf16
    return {
        "tok_emb": norm(keys[0], (VOCAB, HIDDEN)),
        "pos_emb": norm(keys[1], (SEQ, HIDDEN)),
        "emb_ln_g": jnp.ones((1, HIDDEN), jnp.float32),
        "emb_ln_b": jnp.zeros((1, HIDDEN), jnp.float32),
        "wqkv": bf16(stack(wqkv)), "bqkv": stack(bqkv),
        "wo": bf16(stack(wo)), "bo": stack(bo),
        "ln1_g": stack(ln1_g), "ln1_b": stack(ln1_b),
        "w1": bf16(stack(w1)), "b1": stack(b1),
        "w2": bf16(stack(w2)), "b2": stack(b2),
        "ln2_g": stack(ln2_g), "ln2_b": stack(ln2_b),
    }


# ----------------------------- main -------------------------------------------
if __name__ == "__main__":
    key = jax.random.PRNGKey(0)
    pkey, ikey = jax.random.split(key)
    params = init_params(pkey)

    input_ids = jax.random.randint(ikey, (BATCH, SEQ), 0, VOCAB, dtype=jnp.int32)
    # first sequence fully valid, second sequence has 3 padding tokens
    attention_mask = jnp.array(
        [[1, 1, 1, 1, 1, 1, 1, 1],
         [1, 1, 1, 1, 1, 0, 0, 0]],
        dtype=jnp.int32,
    )

    out = jax.jit(custom_sentence_transformer)(params, input_ids, attention_mask)
    out = jax.block_until_ready(out)
    assert out.shape == (BATCH, HIDDEN) and out.dtype == jnp.float32
    assert bool(jnp.all(jnp.isfinite(out)))
    print("KERNEL_OK")
</pallas_src>

<mosaic_0001>
module attributes {stable_mosaic.version = 11 : i64} {
  func.func @fused_encoder_pool_kernel(%arg0: i32, %arg1: memref<16x32xf32, #tpu.memory_space<vmem>>, %arg2: memref<1x16x16xf32, #tpu.memory_space<vmem>>, %arg3: memref<1x2x16xf32, #tpu.memory_space<vmem>>, %arg4: memref<1x32xf32, #tpu.memory_space<vmem>>, %arg5: memref<1x32xf32, #tpu.memory_space<vmem>>, %arg6: memref<2x3x2x32x16xbf16, #tpu.memory_space<vmem>>, %arg7: memref<2x3x2x1x16xf32, #tpu.memory_space<vmem>>, %arg8: memref<2x2x16x32xbf16, #tpu.memory_space<vmem>>, %arg9: memref<2x1x32xf32, #tpu.memory_space<vmem>>, %arg10: memref<2x1x32xf32, #tpu.memory_space<vmem>>, %arg11: memref<2x1x32xf32, #tpu.memory_space<vmem>>, %arg12: memref<2x32x64xbf16, #tpu.memory_space<vmem>>, %arg13: memref<2x1x64xf32, #tpu.memory_space<vmem>>, %arg14: memref<2x64x32xbf16, #tpu.memory_space<vmem>>, %arg15: memref<2x1x32xf32, #tpu.memory_space<vmem>>, %arg16: memref<2x1x32xf32, #tpu.memory_space<vmem>>, %arg17: memref<2x1x32xf32, #tpu.memory_space<vmem>>, %arg18: memref<2x32xf32, #tpu.memory_space<vmem>>) attributes {dimension_semantics = [#tpu.dimension_semantics<parallel>], iteration_bounds = array<i64: 1>, scalar_prefetch = 0 : i64, scratch_operands = 0 : i64, tpu.core_type = #tpu.core_type<tc>, window_params = [{transform_indices = @transform_0, window_bounds = array<i64: 16, 32>}, {transform_indices = @transform_1, window_bounds = array<i64: 1, 16, 16>}, {transform_indices = @transform_2, window_bounds = array<i64: 1, 2, 16>}, {pipeline_mode = #tpu.pipeline_mode<synchronous>, transform_indices = @transform_3, window_bounds = array<i64: 1, 32>}, {pipeline_mode = #tpu.pipeline_mode<synchronous>, transform_indices = @transform_4, window_bounds = array<i64: 1, 32>}, {pipeline_mode = #tpu.pipeline_mode<synchronous>, transform_indices = @transform_5, window_bounds = array<i64: 2, 3, 2, 32, 16>}, {pipeline_mode = #tpu.pipeline_mode<synchronous>, transform_indices = @transform_6, window_bounds = array<i64: 2, 3, 2, 1, 16>}, {pipeline_mode = #tpu.pipeline_mode<synchronous>, transform_indices = @transform_7, window_bounds = array<i64: 2, 2, 16, 32>}, {pipeline_mode = #tpu.pipeline_mode<synchronous>, transform_indices = @transform_8, window_bounds = array<i64: 2, 1, 32>}, {pipeline_mode = #tpu.pipeline_mode<synchronous>, transform_indices = @transform_9, window_bounds = array<i64: 2, 1, 32>}, {pipeline_mode = #tpu.pipeline_mode<synchronous>, transform_indices = @transform_10, window_bounds = array<i64: 2, 1, 32>}, {pipeline_mode = #tpu.pipeline_mode<synchronous>, transform_indices = @transform_11, window_bounds = array<i64: 2, 32, 64>}, {pipeline_mode = #tpu.pipeline_mode<synchronous>, transform_indices = @transform_12, window_bounds = array<i64: 2, 1, 64>}, {pipeline_mode = #tpu.pipeline_mode<synchronous>, transform_indices = @transform_13, window_bounds = array<i64: 2, 64, 32>}, {pipeline_mode = #tpu.pipeline_mode<synchronous>, transform_indices = @transform_14, window_bounds = array<i64: 2, 1, 32>}, {pipeline_mode = #tpu.pipeline_mode<synchronous>, transform_indices = @transform_15, window_bounds = array<i64: 2, 1, 32>}, {pipeline_mode = #tpu.pipeline_mode<synchronous>, transform_indices = @transform_16, window_bounds = array<i64: 2, 1, 32>}, {transform_indices = @transform_17, window_bounds = array<i64: 2, 32>}]} {
    %c0 = arith.constant 0 : index
    %c0_0 = arith.constant 0 : index
    %0 = vector.load %arg1[%c0, %c0_0] : memref<16x32xf32, #tpu.memory_space<vmem>>, vector<16x32xf32>
    %c0_1 = arith.constant 0 : index
    %c0_2 = arith.constant 0 : index
    %1 = vector.load %arg4[%c0_1, %c0_2] : memref<1x32xf32, #tpu.memory_space<vmem>>, vector<1x32xf32>
    %c0_3 = arith.constant 0 : index
    %c0_4 = arith.constant 0 : index
    %2 = vector.load %arg5[%c0_3, %c0_4] : memref<1x32xf32, #tpu.memory_space<vmem>>, vector<1x32xf32>
    %cst = arith.constant dense<0.000000e+00> : vector<16xf32>
    %3 = vector.multi_reduction <add>, %0, %cst [1] : vector<16x32xf32> to vector<16xf32>
    %4 = vector.shape_cast %3 : vector<16xf32> to vector<16x1xf32>
    %cst_5 = arith.constant 3.200000e+01 : f32
    %5 = vector.broadcast %cst_5 : f32 to vector<16x1xf32>
    %6 = arith.divf %4, %5 : vector<16x1xf32>
    %7 = vector.broadcast %6 : vector<16x1xf32> to vector<16x32xf32>
    %8 = arith.subf %0, %7 : vector<16x32xf32>
    %9 = arith.mulf %8, %8 : vector<16x32xf32>
    %cst_6 = arith.constant dense<0.000000e+00> : vector<16xf32>
    %10 = vector.multi_reduction <add>, %9, %cst_6 [1] : vector<16x32xf32> to vector<16xf32>
    %11 = vector.shape_cast %10 : vector<16xf32> to vector<16x1xf32>
    %cst_7 = arith.constant 3.200000e+01 : f32
    %12 = vector.broadcast %cst_7 : f32 to vector<16x1xf32>
    %13 = arith.divf %11, %12 : vector<16x1xf32>
    %14 = vector.broadcast %6 : vector<16x1xf32> to vector<16x32xf32>
    %15 = arith.subf %0, %14 : vector<16x32xf32>
    %cst_8 = arith.constant 9.99999996E-13 : f32
    %16 = vector.broadcast %cst_8 : f32 to vector<16x1xf32>
    %17 = arith.addf %13, %16 : vector<16x1xf32>
    %18 = math.rsqrt %17 : vector<16x1xf32>
    %19 = vector.broadcast %18 : vector<16x1xf32> to vector<16x32xf32>
    %20 = arith.mulf %15, %19 : vector<16x32xf32>
    %21 = vector.broadcast %1 : vector<1x32xf32> to vector<16x32xf32>
    %22 = arith.mulf %20, %21 : vector<16x32xf32>
    %23 = vector.broadcast %2 : vector<1x32xf32> to vector<16x32xf32>
    %24 = arith.addf %22, %23 : vector<16x32xf32>
    %c0_9 = arith.constant 0 : index
    %c0_10 = arith.constant 0 : index
    %c0_11 = arith.constant 0 : index
    %25 = vector.load %arg2[%c0_9, %c0_10, %c0_11] : memref<1x16x16xf32, #tpu.memory_space<vmem>>, vector<1x16x16xf32>
    %26 = vector.shape_cast %25 : vector<1x16x16xf32> to vector<16x16xf32>
    %27 = arith.truncf %24 : vector<16x32xf32> to vector<16x32xbf16>
    %c0_12 = arith.constant 0 : index
    %c0_13 = arith.constant 0 : index
    %c0_14 = arith.constant 0 : index
    %c0_15 = arith.constant 0 : index
    %c0_16 = arith.constant 0 : index
    %28 = vector.load %arg6[%c0_12, %c0_13, %c0_14, %c0_15, %c0_16] : memref<2x3x2x32x16xbf16, #tpu.memory_space<vmem>>, vector<1x1x1x32x16xbf16>
    %29 = vector.shape_cast %28 : vector<1x1x1x32x16xbf16> to vector<32x16xbf16>
    %cst_17 = arith.constant dense<0.000000e+00> : vector<16x16xf32>
    %30 = tpu.matmul %27, %29, %cst_17 {dimension_numbers = #tpu.dot_dimension_numbers<[1], [0], [0], [1], [0, 0, 1, 1], [], []>} : vector<16x32xbf16>, vector<32x16xbf16>, vector<16x16xf32> -> vector<16x16xf32>
    %c0_18 = arith.constant 0 : index
    %c0_19 = arith.constant 0 : index
    %c0_20 = arith.constant 0 : index
    %c0_21 = arith.constant 0 : index
    %c0_22 = arith.constant 0 : index
    %31 = vector.load %arg7[%c0_18, %c0_19, %c0_20, %c0_21, %c0_22] : memref<2x3x2x1x16xf32, #tpu.memory_space<vmem>>, vector<1x1x1x1x16xf32>
    %32 = vector.shape_cast %31 : vector<1x1x1x1x16xf32> to vector<1x16xf32>
    %33 = vector.broadcast %32 : vector<1x16xf32> to vector<16x16xf32>
    %34 = arith.addf %30, %33 : vector<16x16xf32>
    %c0_23 = arith.constant 0 : index
    %c1 = arith.constant 1 : index
    %c0_24 = arith.constant 0 : index
    %c0_25 = arith.constant 0 : index
    %c0_26 = arith.constant 0 : index
    %35 = vector.load %arg6[%c0_23, %c1, %c0_24, %c0_25, %c0_26] : memref<2x3x2x32x16xbf16, #tpu.memory_space<vmem>>, vector<1x1x1x32x16xbf16>
    %36 = vector.shape_cast %35 : vector<1x1x1x32x16xbf16> to vector<32x16xbf16>
    %cst_27 = arith.constant dense<0.000000e+00> : vector<16x16xf32>
    %37 = tpu.matmul %27, %36, %cst_27 {dimension_numbers = #tpu.dot_dimension_numbers<[1], [0], [0], [1], [0, 0, 1, 1], [], []>} : vector<16x32xbf16>, vector<32x16xbf16>, vector<16x16xf32> -> vector<16x16xf32>
    %c0_28 = arith.constant 0 : index
    %c1_29 = arith.constant 1 : index
    %c0_30 = arith.constant 0 : index
    %c0_31 = arith.constant 0 : index
    %c0_32 = arith.constant 0 : index
    %38 = vector.load %arg7[%c0_28, %c1_29, %c0_30, %c0_31, %c0_32] : memref<2x3x2x1x16xf32, #tpu.memory_space<vmem>>, vector<1x1x1x1x16xf32>
    %39 = vector.shape_cast %38 : vector<1x1x1x1x16xf32> to vector<1x16xf32>
    %40 = vector.broadcast %39 : vector<1x16xf32> to vector<16x16xf32>
    %41 = arith.addf %37, %40 : vector<16x16xf32>
    %c0_33 = arith.constant 0 : index
    %c2 = arith.constant 2 : index
    %c0_34 = arith.constant 0 : index
    %c0_35 = arith.constant 0 : index
    %c0_36 = arith.constant 0 : index
    %42 = vector.load %arg6[%c0_33, %c2, %c0_34, %c0_35, %c0_36] : memref<2x3x2x32x16xbf16, #tpu.memory_space<vmem>>, vector<1x1x1x32x16xbf16>
    %43 = vector.shape_cast %42 : vector<1x1x1x32x16xbf16> to vector<32x16xbf16>
    %cst_37 = arith.constant dense<0.000000e+00> : vector<16x16xf32>
    %44 = tpu.matmul %27, %43, %cst_37 {dimension_numbers = #tpu.dot_dimension_numbers<[1], [0], [0], [1], [0, 0, 1, 1], [], []>} : vector<16x32xbf16>, vector<32x16xbf16>, vector<16x16xf32> -> vector<16x16xf32>
    %c0_38 = arith.constant 0 : index
    %c2_39 = arith.constant 2 : index
    %c0_40 = arith.constant 0 : index
    %c0_41 = arith.constant 0 : index
    %c0_42 = arith.constant 0 : index
    %45 = vector.load %arg7[%c0_38, %c2_39, %c0_40, %c0_41, %c0_42] : memref<2x3x2x1x16xf32, #tpu.memory_space<vmem>>, vector<1x1x1x1x16xf32>
    %46 = vector.shape_cast %45 : vector<1x1x1x1x16xf32> to vector<1x16xf32>
    %47 = vector.broadcast %46 : vector<1x16xf32> to vector<16x16xf32>
    %48 = arith.addf %44, %47 : vector<16x16xf32>
    %49 = arith.truncf %34 : vector<16x16xf32> to vector<16x16xbf16>
    %50 = arith.truncf %41 : vector<16x16xf32> to vector<16x16xbf16>
    %cst_43 = arith.constant dense<0.000000e+00> : vector<16x16xf32>
    %51 = tpu.matmul %49, %50, %cst_43 {dimension_numbers = #tpu.dot_dimension_numbers<[1], [1], [0], [0], [0, 0, 1, 0], [], []>} : vector<16x16xbf16>, vector<16x16xbf16>, vector<16x16xf32> -> vector<16x16xf32>
    %52 = arith.addf %51, %26 : vector<16x16xf32>
    %cst_44 = arith.constant dense<0xFF800000> : vector<16xf32>
    %53 = vector.multi_reduction <maximumf>, %52, %cst_44 [1] : vector<16x16xf32> to vector<16xf32>
    %54 = vector.shape_cast %53 : vector<16xf32> to vector<16x1xf32>
    %55 = vector.broadcast %54 : vector<16x1xf32> to vector<16x16xf32>
    %56 = arith.subf %52, %55 : vector<16x16xf32>
    %57 = math.exp %56 : vector<16x16xf32>
    %cst_45 = arith.constant dense<0.000000e+00> : vector<16xf32>
    %58 = vector.multi_reduction <add>, %57, %cst_45 [1] : vector<16x16xf32> to vector<16xf32>
    %59 = vector.shape_cast %58 : vector<16xf32> to vector<16x1xf32>
    %60 = tpu.reciprocal %59 {approx = true} : vector<16x1xf32> -> vector<16x1xf32>
    %61 = vector.broadcast %60 : vector<16x1xf32> to vector<16x16xf32>
    %62 = arith.mulf %57, %61 : vector<16x16xf32>
    %63 = arith.truncf %62 : vector<16x16xf32> to vector<16x16xbf16>
    %64 = arith.truncf %48 : vector<16x16xf32> to vector<16x16xbf16>
    %cst_46 = arith.constant dense<0.000000e+00> : vector<16x16xf32>
    %65 = tpu.matmul %63, %64, %cst_46 {dimension_numbers = #tpu.dot_dimension_numbers<[1], [0], [0], [1], [0, 0, 1, 1], [], []>} : vector<16x16xbf16>, vector<16x16xbf16>, vector<16x16xf32> -> vector<16x16xf32>
    %66 = arith.truncf %65 : vector<16x16xf32> to vector<16x16xbf16>
    %c0_47 = arith.constant 0 : index
    %c0_48 = arith.constant 0 : index
    %c0_49 = arith.constant 0 : index
    %c0_50 = arith.constant 0 : index
    %67 = vector.load %arg8[%c0_47, %c0_48, %c0_49, %c0_50] : memref<2x2x16x32xbf16, #tpu.memory_space<vmem>>, vector<1x1x16x32xbf16>
    %68 = vector.shape_cast %67 : vector<1x1x16x32xbf16> to vector<16x32xbf16>
    %cst_51 = arith.constant dense<0.000000e+00> : vector<16x32xf32>
    %69 = tpu.matmul %66, %68, %cst_51 {dimension_numbers = #tpu.dot_dimension_numbers<[1], [0], [0], [1], [0, 0, 1, 1], [], []>} : vector<16x16xbf16>, vector<16x32xbf16>, vector<16x32xf32> -> vector<16x32xf32>
    %c0_52 = arith.constant 0 : index
    %c0_53 = arith.constant 0 : index
    %c1_54 = arith.constant 1 : index
    %c0_55 = arith.constant 0 : index
    %c0_56 = arith.constant 0 : index
    %70 = vector.load %arg6[%c0_52, %c0_53, %c1_54, %c0_55, %c0_56] : memref<2x3x2x32x16xbf16, #tpu.memory_space<vmem>>, vector<1x1x1x32x16xbf16>
    %71 = vector.shape_cast %70 : vector<1x1x1x32x16xbf16> to vector<32x16xbf16>
    %cst_57 = arith.constant dense<0.000000e+00> : vector<16x16xf32>
    %72 = tpu.matmul %27, %71, %cst_57 {dimension_numbers = #tpu.dot_dimension_numbers<[1], [0], [0], [1], [0, 0, 1, 1], [], []>} : vector<16x32xbf16>, vector<32x16xbf16>, vector<16x16xf32> -> vector<16x16xf32>
    %c0_58 = arith.constant 0 : index
    %c0_59 = arith.constant 0 : index
    %c1_60 = arith.constant 1 : index
    %c0_61 = arith.constant 0 : index
    %c0_62 = arith.constant 0 : index
    %73 = vector.load %arg7[%c0_58, %c0_59, %c1_60, %c0_61, %c0_62] : memref<2x3x2x1x16xf32, #tpu.memory_space<vmem>>, vector<1x1x1x1x16xf32>
    %74 = vector.shape_cast %73 : vector<1x1x1x1x16xf32> to vector<1x16xf32>
    %75 = vector.broadcast %74 : vector<1x16xf32> to vector<16x16xf32>
    %76 = arith.addf %72, %75 : vector<16x16xf32>
    %c0_63 = arith.constant 0 : index
    %c1_64 = arith.constant 1 : index
    %c1_65 = arith.constant 1 : index
    %c0_66 = arith.constant 0 : index
    %c0_67 = arith.constant 0 : index
    %77 = vector.load %arg6[%c0_63, %c1_64, %c1_65, %c0_66, %c0_67] : memref<2x3x2x32x16xbf16, #tpu.memory_space<vmem>>, vector<1x1x1x32x16xbf16>
    %78 = vector.shape_cast %77 : vector<1x1x1x32x16xbf16> to vector<32x16xbf16>
    %cst_68 = arith.constant dense<0.000000e+00> : vector<16x16xf32>
    %79 = tpu.matmul %27, %78, %cst_68 {dimension_numbers = #tpu.dot_dimension_numbers<[1], [0], [0], [1], [0, 0, 1, 1], [], []>} : vector<16x32xbf16>, vector<32x16xbf16>, vector<16x16xf32> -> vector<16x16xf32>
    %c0_69 = arith.constant 0 : index
    %c1_70 = arith.constant 1 : index
    %c1_71 = arith.constant 1 : index
    %c0_72 = arith.constant 0 : index
    %c0_73 = arith.constant 0 : index
    %80 = vector.load %arg7[%c0_69, %c1_70, %c1_71, %c0_72, %c0_73] : memref<2x3x2x1x16xf32, #tpu.memory_space<vmem>>, vector<1x1x1x1x16xf32>
    %81 = vector.shape_cast %80 : vector<1x1x1x1x16xf32> to vector<1x16xf32>
    %82 = vector.broadcast %81 : vector<1x16xf32> to vector<16x16xf32>
    %83 = arith.addf %79, %82 : vector<16x16xf32>
    %c0_74 = arith.constant 0 : index
    %c2_75 = arith.constant 2 : index
    %c1_76 = arith.constant 1 : index
    %c0_77 = arith.constant 0 : index
    %c0_78 = arith.constant 0 : index
    %84 = vector.load %arg6[%c0_74, %c2_75, %c1_76, %c0_77, %c0_78] : memref<2x3x2x32x16xbf16, #tpu.memory_space<vmem>>, vector<1x1x1x32x16xbf16>
    %85 = vector.shape_cast %84 : vector<1x1x1x32x16xbf16> to vector<32x16xbf16>
    %cst_79 = arith.constant dense<0.000000e+00> : vector<16x16xf32>
    %86 = tpu.matmul %27, %85, %cst_79 {dimension_numbers = #tpu.dot_dimension_numbers<[1], [0], [0], [1], [0, 0, 1, 1], [], []>} : vector<16x32xbf16>, vector<32x16xbf16>, vector<16x16xf32> -> vector<16x16xf32>
    %c0_80 = arith.constant 0 : index
    %c2_81 = arith.constant 2 : index
    %c1_82 = arith.constant 1 : index
    %c0_83 = arith.constant 0 : index
    %c0_84 = arith.constant 0 : index
    %87 = vector.load %arg7[%c0_80, %c2_81, %c1_82, %c0_83, %c0_84] : memref<2x3x2x1x16xf32, #tpu.memory_space<vmem>>, vector<1x1x1x1x16xf32>
    %88 = vector.shape_cast %87 : vector<1x1x1x1x16xf32> to vector<1x16xf32>
    %89 = vector.broadcast %88 : vector<1x16xf32> to vector<16x16xf32>
    %90 = arith.addf %86, %89 : vector<16x16xf32>
    %91 = arith.truncf %76 : vector<16x16xf32> to vector<16x16xbf16>
    %92 = arith.truncf %83 : vector<16x16xf32> to vector<16x16xbf16>
    %cst_85 = arith.constant dense<0.000000e+00> : vector<16x16xf32>
    %93 = tpu.matmul %91, %92, %cst_85 {dimension_numbers = #tpu.dot_dimension_numbers<[1], [1], [0], [0], [0, 0, 1, 0], [], []>} : vector<16x16xbf16>, vector<16x16xbf16>, vector<16x16xf32> -> vector<16x16xf32>
    %94 = arith.addf %93, %26 : vector<16x16xf32>
    %cst_86 = arith.constant dense<0xFF800000> : vector<16xf32>
    %95 = vector.multi_reduction <maximumf>, %94, %cst_86 [1] : vector<16x16xf32> to vector<16xf32>
    %96 = vector.shape_cast %95 : vector<16xf32> to vector<16x1xf32>
    %97 = vector.broadcast %96 : vector<16x1xf32> to vector<16x16xf32>
    %98 = arith.subf %94, %97 : vector<16x16xf32>
    %99 = math.exp %98 : vector<16x16xf32>
    %cst_87 = arith.constant dense<0.000000e+00> : vector<16xf32>
    %100 = vector.multi_reduction <add>, %99, %cst_87 [1] : vector<16x16xf32> to vector<16xf32>
    %101 = vector.shape_cast %100 : vector<16xf32> to vector<16x1xf32>
    %102 = tpu.reciprocal %101 {approx = true} : vector<16x1xf32> -> vector<16x1xf32>
    %103 = vector.broadcast %102 : vector<16x1xf32> to vector<16x16xf32>
    %104 = arith.mulf %99, %103 : vector<16x16xf32>
    %105 = arith.truncf %104 : vector<16x16xf32> to vector<16x16xbf16>
    %106 = arith.truncf %90 : vector<16x16xf32> to vector<16x16xbf16>
    %cst_88 = arith.constant dense<0.000000e+00> : vector<16x16xf32>
    %107 = tpu.matmul %105, %106, %cst_88 {dimension_numbers = #tpu.dot_dimension_numbers<[1], [0], [0], [1], [0, 0, 1, 1], [], []>} : vector<16x16xbf16>, vector<16x16xbf16>, vector<16x16xf32> -> vector<16x16xf32>
    %108 = arith.truncf %107 : vector<16x16xf32> to vector<16x16xbf16>
    %c0_89 = arith.constant 0 : index
    %c1_90 = arith.constant 1 : index
    %c0_91 = arith.constant 0 : index
    %c0_92 = arith.constant 0 : index
    %109 = vector.load %arg8[%c0_89, %c1_90, %c0_91, %c0_92] : memref<2x2x16x32xbf16, #tpu.memory_space<vmem>>, vector<1x1x16x32xbf16>
    %110 = vector.shape_cast %109 : vector<1x1x16x32xbf16> to vector<16x32xbf16>
    %cst_93 = arith.constant dense<0.000000e+00> : vector<16x32xf32>
    %111 = tpu.matmul %108, %110, %cst_93 {dimension_numbers = #tpu.dot_dimension_numbers<[1], [0], [0], [1], [0, 0, 1, 1], [], []>} : vector<16x16xbf16>, vector<16x32xbf16>, vector<16x32xf32> -> vector<16x32xf32>
    %112 = arith.addf %69, %111 : vector<16x32xf32>
    %c0_94 = arith.constant 0 : index
    %c0_95 = arith.constant 0 : index
    %c0_96 = arith.constant 0 : index
    %113 = vector.load %arg9[%c0_94, %c0_95, %c0_96] : memref<2x1x32xf32, #tpu.memory_space<vmem>>, vector<1x1x32xf32>
    %114 = vector.shape_cast %113 : vector<1x1x32xf32> to vector<1x32xf32>
    %115 = vector.broadcast %114 : vector<1x32xf32> to vector<16x32xf32>
    %116 = arith.addf %112, %115 : vector<16x32xf32>
    %117 = arith.addf %116, %24 : vector<16x32xf32>
    %c0_97 = arith.constant 0 : index
    %c0_98 = arith.constant 0 : index
    %c0_99 = arith.constant 0 : index
    %118 = vector.load %arg10[%c0_97, %c0_98, %c0_99] : memref<2x1x32xf32, #tpu.memory_space<vmem>>, vector<1x1x32xf32>
    %119 = vector.shape_cast %118 : vector<1x1x32xf32> to vector<1x32xf32>
    %c0_100 = arith.constant 0 : index
    %c0_101 = arith.constant 0 : index
    %c0_102 = arith.constant 0 : index
    %120 = vector.load %arg11[%c0_100, %c0_101, %c0_102] : memref<2x1x32xf32, #tpu.memory_space<vmem>>, vector<1x1x32xf32>
    %121 = vector.shape_cast %120 : vector<1x1x32xf32> to vector<1x32xf32>
    %cst_103 = arith.constant dense<0.000000e+00> : vector<16xf32>
    %122 = vector.multi_reduction <add>, %117, %cst_103 [1] : vector<16x32xf32> to vector<16xf32>
    %123 = vector.shape_cast %122 : vector<16xf32> to vector<16x1xf32>
    %cst_104 = arith.constant 3.200000e+01 : f32
    %124 = vector.broadcast %cst_104 : f32 to vector<16x1xf32>
    %125 = arith.divf %123, %124 : vector<16x1xf32>
    %126 = vector.broadcast %125 : vector<16x1xf32> to vector<16x32xf32>
    %127 = arith.subf %117, %126 : vector<16x32xf32>
    %128 = arith.mulf %127, %127 : vector<16x32xf32>
    %cst_105 = arith.constant dense<0.000000e+00> : vector<16xf32>
    %129 = vector.multi_reduction <add>, %128, %cst_105 [1] : vector<16x32xf32> to vector<16xf32>
    %130 = vector.shape_cast %129 : vector<16xf32> to vector<16x1xf32>
    %cst_106 = arith.constant 3.200000e+01 : f32
    %131 = vector.broadcast %cst_106 : f32 to vector<16x1xf32>
    %132 = arith.divf %130, %131 : vector<16x1xf32>
    %133 = vector.broadcast %125 : vector<16x1xf32> to vector<16x32xf32>
    %134 = arith.subf %117, %133 : vector<16x32xf32>
    %cst_107 = arith.constant 9.99999996E-13 : f32
    %135 = vector.broadcast %cst_107 : f32 to vector<16x1xf32>
    %136 = arith.addf %132, %135 : vector<16x1xf32>
    %137 = math.rsqrt %136 : vector<16x1xf32>
    %138 = vector.broadcast %137 : vector<16x1xf32> to vector<16x32xf32>
    %139 = arith.mulf %134, %138 : vector<16x32xf32>
    %140 = vector.broadcast %119 : vector<1x32xf32> to vector<16x32xf32>
    %141 = arith.mulf %139, %140 : vector<16x32xf32>
    %142 = vector.broadcast %121 : vector<1x32xf32> to vector<16x32xf32>
    %143 = arith.addf %141, %142 : vector<16x32xf32>
    %144 = arith.truncf %143 : vector<16x32xf32> to vector<16x32xbf16>
    %c0_108 = arith.constant 0 : index
    %c0_109 = arith.constant 0 : index
    %c0_110 = arith.constant 0 : index
    %145 = vector.load %arg12[%c0_108, %c0_109, %c0_110] : memref<2x32x64xbf16, #tpu.memory_space<vmem>>, vector<1x32x64xbf16>
    %146 = vector.shape_cast %145 : vector<1x32x64xbf16> to vector<32x64xbf16>
    %cst_111 = arith.constant dense<0.000000e+00> : vector<16x64xf32>
    %147 = tpu.matmul %144, %146, %cst_111 {dimension_numbers = #tpu.dot_dimension_numbers<[1], [0], [0], [1], [0, 0, 1, 1], [], []>} : vector<16x32xbf16>, vector<32x64xbf16>, vector<16x64xf32> -> vector<16x64xf32>
    %c0_112 = arith.constant 0 : index
    %c0_113 = arith.constant 0 : index
    %c0_114 = arith.constant 0 : index
    %148 = vector.load %arg13[%c0_112, %c0_113, %c0_114] : memref<2x1x64xf32, #tpu.memory_space<vmem>>, vector<1x1x64xf32>
    %149 = vector.shape_cast %148 : vector<1x1x64xf32> to vector<1x64xf32>
    %150 = vector.broadcast %149 : vector<1x64xf32> to vector<16x64xf32>
    %151 = arith.addf %147, %150 : vector<16x64xf32>
    %152 = arith.mulf %151, %151 : vector<16x64xf32>
    %153 = arith.mulf %151, %152 : vector<16x64xf32>
    %cst_115 = arith.constant 4.471500e-02 : f32
    %154 = vector.broadcast %cst_115 : f32 to vector<16x64xf32>
    %155 = arith.mulf %154, %153 : vector<16x64xf32>
    %156 = arith.addf %151, %155 : vector<16x64xf32>
    %cst_116 = arith.constant 0.797884583 : f32
    %157 = vector.broadcast %cst_116 : f32 to vector<16x64xf32>
    %158 = arith.mulf %157, %156 : vector<16x64xf32>
    %159 = math.tanh %158 : vector<16x64xf32>
    %cst_117 = arith.constant 1.000000e+00 : f32
    %160 = vector.broadcast %cst_117 : f32 to vector<16x64xf32>
    %161 = arith.addf %160, %159 : vector<16x64xf32>
    %cst_118 = arith.constant 5.000000e-01 : f32
    %162 = vector.broadcast %cst_118 : f32 to vector<16x64xf32>
    %163 = arith.mulf %162, %161 : vector<16x64xf32>
    %164 = arith.mulf %151, %163 : vector<16x64xf32>
    %165 = arith.truncf %164 : vector<16x64xf32> to vector<16x64xbf16>
    %c0_119 = arith.constant 0 : index
    %c0_120 = arith.constant 0 : index
    %c0_121 = arith.constant 0 : index
    %166 = vector.load %arg14[%c0_119, %c0_120, %c0_121] : memref<2x64x32xbf16, #tpu.memory_space<vmem>>, vector<1x64x32xbf16>
    %167 = vector.shape_cast %166 : vector<1x64x32xbf16> to vector<64x32xbf16>
    %cst_122 = arith.constant dense<0.000000e+00> : vector<16x32xf32>
    %168 = tpu.matmul %165, %167, %cst_122 {dimension_numbers = #tpu.dot_dimension_numbers<[1], [0], [0], [1], [0, 0, 1, 1], [], []>} : vector<16x64xbf16>, vector<64x32xbf16>, vector<16x32xf32> -> vector<16x32xf32>
    %c0_123 = arith.constant 0 : index
    %c0_124 = arith.constant 0 : index
    %c0_125 = arith.constant 0 : index
    %169 = vector.load %arg15[%c0_123, %c0_124, %c0_125] : memref<2x1x32xf32, #tpu.memory_space<vmem>>, vector<1x1x32xf32>
    %170 = vector.shape_cast %169 : vector<1x1x32xf32> to vector<1x32xf32>
    %171 = vector.broadcast %170 : vector<1x32xf32> to vector<16x32xf32>
    %172 = arith.addf %168, %171 : vector<16x32xf32>
    %173 = arith.addf %172, %143 : vector<16x32xf32>
    %c0_126 = arith.constant 0 : index
    %c0_127 = arith.constant 0 : index
    %c0_128 = arith.constant 0 : index
    %174 = vector.load %arg16[%c0_126, %c0_127, %c0_128] : memref<2x1x32xf32, #tpu.memory_space<vmem>>, vector<1x1x32xf32>
    %175 = vector.shape_cast %174 : vector<1x1x32xf32> to vector<1x32xf32>
    %c0_129 = arith.constant 0 : index
    %c0_130 = arith.constant 0 : index
    %c0_131 = arith.constant 0 : index
    %176 = vector.load %arg17[%c0_129, %c0_130, %c0_131] : memref<2x1x32xf32, #tpu.memory_space<vmem>>, vector<1x1x32xf32>
    %177 = vector.shape_cast %176 : vector<1x1x32xf32> to vector<1x32xf32>
    %cst_132 = arith.constant dense<0.000000e+00> : vector<16xf32>
    %178 = vector.multi_reduction <add>, %173, %cst_132 [1] : vector<16x32xf32> to vector<16xf32>
    %179 = vector.shape_cast %178 : vector<16xf32> to vector<16x1xf32>
    %cst_133 = arith.constant 3.200000e+01 : f32
    %180 = vector.broadcast %cst_133 : f32 to vector<16x1xf32>
    %181 = arith.divf %179, %180 : vector<16x1xf32>
    %182 = vector.broadcast %181 : vector<16x1xf32> to vector<16x32xf32>
    %183 = arith.subf %173, %182 : vector<16x32xf32>
    %184 = arith.mulf %183, %183 : vector<16x32xf32>
    %cst_134 = arith.constant dense<0.000000e+00> : vector<16xf32>
    %185 = vector.multi_reduction <add>, %184, %cst_134 [1] : vector<16x32xf32> to vector<16xf32>
    %186 = vector.shape_cast %185 : vector<16xf32> to vector<16x1xf32>
    %cst_135 = arith.constant 3.200000e+01 : f32
    %187 = vector.broadcast %cst_135 : f32 to vector<16x1xf32>
    %188 = arith.divf %186, %187 : vector<16x1xf32>
    %189 = vector.broadcast %181 : vector<16x1xf32> to vector<16x32xf32>
    %190 = arith.subf %173, %189 : vector<16x32xf32>
    %cst_136 = arith.constant 9.99999996E-13 : f32
    %191 = vector.broadcast %cst_136 : f32 to vector<16x1xf32>
    %192 = arith.addf %188, %191 : vector<16x1xf32>
    %193 = math.rsqrt %192 : vector<16x1xf32>
    %194 = vector.broadcast %193 : vector<16x1xf32> to vector<16x32xf32>
    %195 = arith.mulf %190, %194 : vector<16x32xf32>
    %196 = vector.broadcast %175 : vector<1x32xf32> to vector<16x32xf32>
    %197 = arith.mulf %195, %196 : vector<16x32xf32>
    %198 = vector.broadcast %177 : vector<1x32xf32> to vector<16x32xf32>
    %199 = arith.addf %197, %198 : vector<16x32xf32>
    %200 = arith.truncf %199 : vector<16x32xf32> to vector<16x32xbf16>
    %c1_137 = arith.constant 1 : index
    %c0_138 = arith.constant 0 : index
    %c0_139 = arith.constant 0 : index
    %c0_140 = arith.constant 0 : index
    %c0_141 = arith.constant 0 : index
    %201 = vector.load %arg6[%c1_137, %c0_138, %c0_139, %c0_140, %c0_141] : memref<2x3x2x32x16xbf16, #tpu.memory_space<vmem>>, vector<1x1x1x32x16xbf16>
    %202 = vector.shape_cast %201 : vector<1x1x1x32x16xbf16> to vector<32x16xbf16>
    %cst_142 = arith.constant dense<0.000000e+00> : vector<16x16xf32>
    %203 = tpu.matmul %200, %202, %cst_142 {dimension_numbers = #tpu.dot_dimension_numbers<[1], [0], [0], [1], [0, 0, 1, 1], [], []>} : vector<16x32xbf16>, vector<32x16xbf16>, vector<16x16xf32> -> vector<16x16xf32>
    %c1_143 = arith.constant 1 : index
    %c0_144 = arith.constant 0 : index
    %c0_145 = arith.constant 0 : index
    %c0_146 = arith.constant 0 : index
    %c0_147 = arith.constant 0 : index
    %204 = vector.load %arg7[%c1_143, %c0_144, %c0_145, %c0_146, %c0_147] : memref<2x3x2x1x16xf32, #tpu.memory_space<vmem>>, vector<1x1x1x1x16xf32>
    %205 = vector.shape_cast %204 : vector<1x1x1x1x16xf32> to vector<1x16xf32>
    %206 = vector.broadcast %205 : vector<1x16xf32> to vector<16x16xf32>
    %207 = arith.addf %203, %206 : vector<16x16xf32>
    %c1_148 = arith.constant 1 : index
    %c1_149 = arith.constant 1 : index
    %c0_150 = arith.constant 0 : index
    %c0_151 = arith.constant 0 : index
    %c0_152 = arith.constant 0 : index
    %208 = vector.load %arg6[%c1_148, %c1_149, %c0_150, %c0_151, %c0_152] : memref<2x3x2x32x16xbf16, #tpu.memory_space<vmem>>, vector<1x1x1x32x16xbf16>
    %209 = vector.shape_cast %208 : vector<1x1x1x32x16xbf16> to vector<32x16xbf16>
    %cst_153 = arith.constant dense<0.000000e+00> : vector<16x16xf32>
    %210 = tpu.matmul %200, %209, %cst_153 {dimension_numbers = #tpu.dot_dimension_numbers<[1], [0], [0], [1], [0, 0, 1, 1], [], []>} : vector<16x32xbf16>, vector<32x16xbf16>, vector<16x16xf32> -> vector<16x16xf32>
    %c1_154 = arith.constant 1 : index
    %c1_155 = arith.constant 1 : index
    %c0_156 = arith.constant 0 : index
    %c0_157 = arith.constant 0 : index
    %c0_158 = arith.constant 0 : index
    %211 = vector.load %arg7[%c1_154, %c1_155, %c0_156, %c0_157, %c0_158] : memref<2x3x2x1x16xf32, #tpu.memory_space<vmem>>, vector<1x1x1x1x16xf32>
    %212 = vector.shape_cast %211 : vector<1x1x1x1x16xf32> to vector<1x16xf32>
    %213 = vector.broadcast %212 : vector<1x16xf32> to vector<16x16xf32>
    %214 = arith.addf %210, %213 : vector<16x16xf32>
    %c1_159 = arith.constant 1 : index
    %c2_160 = arith.constant 2 : index
    %c0_161 = arith.constant 0 : index
    %c0_162 = arith.constant 0 : index
    %c0_163 = arith.constant 0 : index
    %215 = vector.load %arg6[%c1_159, %c2_160, %c0_161, %c0_162, %c0_163] : memref<2x3x2x32x16xbf16, #tpu.memory_space<vmem>>, vector<1x1x1x32x16xbf16>
    %216 = vector.shape_cast %215 : vector<1x1x1x32x16xbf16> to vector<32x16xbf16>
    %cst_164 = arith.constant dense<0.000000e+00> : vector<16x16xf32>
    %217 = tpu.matmul %200, %216, %cst_164 {dimension_numbers = #tpu.dot_dimension_numbers<[1], [0], [0], [1], [0, 0, 1, 1], [], []>} : vector<16x32xbf16>, vector<32x16xbf16>, vector<16x16xf32> -> vector<16x16xf32>
    %c1_165 = arith.constant 1 : index
    %c2_166 = arith.constant 2 : index
    %c0_167 = arith.constant 0 : index
    %c0_168 = arith.constant 0 : index
    %c0_169 = arith.constant 0 : index
    %218 = vector.load %arg7[%c1_165, %c2_166, %c0_167, %c0_168, %c0_169] : memref<2x3x2x1x16xf32, #tpu.memory_space<vmem>>, vector<1x1x1x1x16xf32>
    %219 = vector.shape_cast %218 : vector<1x1x1x1x16xf32> to vector<1x16xf32>
    %220 = vector.broadcast %219 : vector<1x16xf32> to vector<16x16xf32>
    %221 = arith.addf %217, %220 : vector<16x16xf32>
    %222 = arith.truncf %207 : vector<16x16xf32> to vector<16x16xbf16>
    %223 = arith.truncf %214 : vector<16x16xf32> to vector<16x16xbf16>
    %cst_170 = arith.constant dense<0.000000e+00> : vector<16x16xf32>
    %224 = tpu.matmul %222, %223, %cst_170 {dimension_numbers = #tpu.dot_dimension_numbers<[1], [1], [0], [0], [0, 0, 1, 0], [], []>} : vector<16x16xbf16>, vector<16x16xbf16>, vector<16x16xf32> -> vector<16x16xf32>
    %225 = arith.addf %224, %26 : vector<16x16xf32>
    %cst_171 = arith.constant dense<0xFF800000> : vector<16xf32>
    %226 = vector.multi_reduction <maximumf>, %225, %cst_171 [1] : vector<16x16xf32> to vector<16xf32>
    %227 = vector.shape_cast %226 : vector<16xf32> to vector<16x1xf32>
    %228 = vector.broadcast %227 : vector<16x1xf32> to vector<16x16xf32>
    %229 = arith.subf %225, %228 : vector<16x16xf32>
    %230 = math.exp %229 : vector<16x16xf32>
    %cst_172 = arith.constant dense<0.000000e+00> : vector<16xf32>
    %231 = vector.multi_reduction <add>, %230, %cst_172 [1] : vector<16x16xf32> to vector<16xf32>
    %232 = vector.shape_cast %231 : vector<16xf32> to vector<16x1xf32>
    %233 = tpu.reciprocal %232 {approx = true} : vector<16x1xf32> -> vector<16x1xf32>
    %234 = vector.broadcast %233 : vector<16x1xf32> to vector<16x16xf32>
    %235 = arith.mulf %230, %234 : vector<16x16xf32>
    %236 = arith.truncf %235 : vector<16x16xf32> to vector<16x16xbf16>
    %237 = arith.truncf %221 : vector<16x16xf32> to vector<16x16xbf16>
    %cst_173 = arith.constant dense<0.000000e+00> : vector<16x16xf32>
    %238 = tpu.matmul %236, %237, %cst_173 {dimension_numbers = #tpu.dot_dimension_numbers<[1], [0], [0], [1], [0, 0, 1, 1], [], []>} : vector<16x16xbf16>, vector<16x16xbf16>, vector<16x16xf32> -> vector<16x16xf32>
    %239 = arith.truncf %238 : vector<16x16xf32> to vector<16x16xbf16>
    %c1_174 = arith.constant 1 : index
    %c0_175 = arith.constant 0 : index
    %c0_176 = arith.constant 0 : index
    %c0_177 = arith.constant 0 : index
    %240 = vector.load %arg8[%c1_174, %c0_175, %c0_176, %c0_177] : memref<2x2x16x32xbf16, #tpu.memory_space<vmem>>, vector<1x1x16x32xbf16>
    %241 = vector.shape_cast %240 : vector<1x1x16x32xbf16> to vector<16x32xbf16>
    %cst_178 = arith.constant dense<0.000000e+00> : vector<16x32xf32>
    %242 = tpu.matmul %239, %241, %cst_178 {dimension_numbers = #tpu.dot_dimension_numbers<[1], [0], [0], [1], [0, 0, 1, 1], [], []>} : vector<16x16xbf16>, vector<16x32xbf16>, vector<16x32xf32> -> vector<16x32xf32>
    %c1_179 = arith.constant 1 : index
    %c0_180 = arith.constant 0 : index
    %c1_181 = arith.constant 1 : index
    %c0_182 = arith.constant 0 : index
    %c0_183 = arith.constant 0 : index
    %243 = vector.load %arg6[%c1_179, %c0_180, %c1_181, %c0_182, %c0_183] : memref<2x3x2x32x16xbf16, #tpu.memory_space<vmem>>, vector<1x1x1x32x16xbf16>
    %244 = vector.shape_cast %243 : vector<1x1x1x32x16xbf16> to vector<32x16xbf16>
    %cst_184 = arith.constant dense<0.000000e+00> : vector<16x16xf32>
    %245 = tpu.matmul %200, %244, %cst_184 {dimension_numbers = #tpu.dot_dimension_numbers<[1], [0], [0], [1], [0, 0, 1, 1], [], []>} : vector<16x32xbf16>, vector<32x16xbf16>, vector<16x16xf32> -> vector<16x16xf32>
    %c1_185 = arith.constant 1 : index
    %c0_186 = arith.constant 0 : index
    %c1_187 = arith.constant 1 : index
    %c0_188 = arith.constant 0 : index
    %c0_189 = arith.constant 0 : index
    %246 = vector.load %arg7[%c1_185, %c0_186, %c1_187, %c0_188, %c0_189] : memref<2x3x2x1x16xf32, #tpu.memory_space<vmem>>, vector<1x1x1x1x16xf32>
    %247 = vector.shape_cast %246 : vector<1x1x1x1x16xf32> to vector<1x16xf32>
    %248 = vector.broadcast %247 : vector<1x16xf32> to vector<16x16xf32>
    %249 = arith.addf %245, %248 : vector<16x16xf32>
    %c1_190 = arith.constant 1 : index
    %c1_191 = arith.constant 1 : index
    %c1_192 = arith.constant 1 : index
    %c0_193 = arith.constant 0 : index
    %c0_194 = arith.constant 0 : index
    %250 = vector.load %arg6[%c1_190, %c1_191, %c1_192, %c0_193, %c0_194] : memref<2x3x2x32x16xbf16, #tpu.memory_space<vmem>>, vector<1x1x1x32x16xbf16>
    %251 = vector.shape_cast %250 : vector<1x1x1x32x16xbf16> to vector<32x16xbf16>
    %cst_195 = arith.constant dense<0.000000e+00> : vector<16x16xf32>
    %252 = tpu.matmul %200, %251, %cst_195 {dimension_numbers = #tpu.dot_dimension_numbers<[1], [0], [0], [1], [0, 0, 1, 1], [], []>} : vector<16x32xbf16>, vector<32x16xbf16>, vector<16x16xf32> -> vector<16x16xf32>
    %c1_196 = arith.constant 1 : index
    %c1_197 = arith.constant 1 : index
    %c1_198 = arith.constant 1 : index
    %c0_199 = arith.constant 0 : index
    %c0_200 = arith.constant 0 : index
    %253 = vector.load %arg7[%c1_196, %c1_197, %c1_198, %c0_199, %c0_200] : memref<2x3x2x1x16xf32, #tpu.memory_space<vmem>>, vector<1x1x1x1x16xf32>
    %254 = vector.shape_cast %253 : vector<1x1x1x1x16xf32> to vector<1x16xf32>
    %255 = vector.broadcast %254 : vector<1x16xf32> to vector<16x16xf32>
    %256 = arith.addf %252, %255 : vector<16x16xf32>
    %c1_201 = arith.constant 1 : index
    %c2_202 = arith.constant 2 : index
    %c1_203 = arith.constant 1 : index
    %c0_204 = arith.constant 0 : index
    %c0_205 = arith.constant 0 : index
    %257 = vector.load %arg6[%c1_201, %c2_202, %c1_203, %c0_204, %c0_205] : memref<2x3x2x32x16xbf16, #tpu.memory_space<vmem>>, vector<1x1x1x32x16xbf16>
    %258 = vector.shape_cast %257 : vector<1x1x1x32x16xbf16> to vector<32x16xbf16>
    %cst_206 = arith.constant dense<0.000000e+00> : vector<16x16xf32>
    %259 = tpu.matmul %200, %258, %cst_206 {dimension_numbers = #tpu.dot_dimension_numbers<[1], [0], [0], [1], [0, 0, 1, 1], [], []>} : vector<16x32xbf16>, vector<32x16xbf16>, vector<16x16xf32> -> vector<16x16xf32>
    %c1_207 = arith.constant 1 : index
    %c2_208 = arith.constant 2 : index
    %c1_209 = arith.constant 1 : index
    %c0_210 = arith.constant 0 : index
    %c0_211 = arith.constant 0 : index
    %260 = vector.load %arg7[%c1_207, %c2_208, %c1_209, %c0_210, %c0_211] : memref<2x3x2x1x16xf32, #tpu.memory_space<vmem>>, vector<1x1x1x1x16xf32>
    %261 = vector.shape_cast %260 : vector<1x1x1x1x16xf32> to vector<1x16xf32>
    %262 = vector.broadcast %261 : vector<1x16xf32> to vector<16x16xf32>
    %263 = arith.addf %259, %262 : vector<16x16xf32>
    %264 = arith.truncf %249 : vector<16x16xf32> to vector<16x16xbf16>
    %265 = arith.truncf %256 : vector<16x16xf32> to vector<16x16xbf16>
    %cst_212 = arith.constant dense<0.000000e+00> : vector<16x16xf32>
    %266 = tpu.matmul %264, %265, %cst_212 {dimension_numbers = #tpu.dot_dimension_numbers<[1], [1], [0], [0], [0, 0, 1, 0], [], []>} : vector<16x16xbf16>, vector<16x16xbf16>, vector<16x16xf32> -> vector<16x16xf32>
    %267 = arith.addf %266, %26 : vector<16x16xf32>
    %cst_213 = arith.constant dense<0xFF800000> : vector<16xf32>
    %268 = vector.multi_reduction <maximumf>, %267, %cst_213 [1] : vector<16x16xf32> to vector<16xf32>
    %269 = vector.shape_cast %268 : vector<16xf32> to vector<16x1xf32>
    %270 = vector.broadcast %269 : vector<16x1xf32> to vector<16x16xf32>
    %271 = arith.subf %267, %270 : vector<16x16xf32>
    %272 = math.exp %271 : vector<16x16xf32>
    %cst_214 = arith.constant dense<0.000000e+00> : vector<16xf32>
    %273 = vector.multi_reduction <add>, %272, %cst_214 [1] : vector<16x16xf32> to vector<16xf32>
    %274 = vector.shape_cast %273 : vector<16xf32> to vector<16x1xf32>
    %275 = tpu.reciprocal %274 {approx = true} : vector<16x1xf32> -> vector<16x1xf32>
    %276 = vector.broadcast %275 : vector<16x1xf32> to vector<16x16xf32>
    %277 = arith.mulf %272, %276 : vector<16x16xf32>
    %278 = arith.truncf %277 : vector<16x16xf32> to vector<16x16xbf16>
    %279 = arith.truncf %263 : vector<16x16xf32> to vector<16x16xbf16>
    %cst_215 = arith.constant dense<0.000000e+00> : vector<16x16xf32>
    %280 = tpu.matmul %278, %279, %cst_215 {dimension_numbers = #tpu.dot_dimension_numbers<[1], [0], [0], [1], [0, 0, 1, 1], [], []>} : vector<16x16xbf16>, vector<16x16xbf16>, vector<16x16xf32> -> vector<16x16xf32>
    %281 = arith.truncf %280 : vector<16x16xf32> to vector<16x16xbf16>
    %c1_216 = arith.constant 1 : index
    %c1_217 = arith.constant 1 : index
    %c0_218 = arith.constant 0 : index
    %c0_219 = arith.constant 0 : index
    %282 = vector.load %arg8[%c1_216, %c1_217, %c0_218, %c0_219] : memref<2x2x16x32xbf16, #tpu.memory_space<vmem>>, vector<1x1x16x32xbf16>
    %283 = vector.shape_cast %282 : vector<1x1x16x32xbf16> to vector<16x32xbf16>
    %cst_220 = arith.constant dense<0.000000e+00> : vector<16x32xf32>
    %284 = tpu.matmul %281, %283, %cst_220 {dimension_numbers = #tpu.dot_dimension_numbers<[1], [0], [0], [1], [0, 0, 1, 1], [], []>} : vector<16x16xbf16>, vector<16x32xbf16>, vector<16x32xf32> -> vector<16x32xf32>
    %285 = arith.addf %242, %284 : vector<16x32xf32>
    %c1_221 = arith.constant 1 : index
    %c0_222 = arith.constant 0 : index
    %c0_223 = arith.constant 0 : index
    %286 = vector.load %arg9[%c1_221, %c0_222, %c0_223] : memref<2x1x32xf32, #tpu.memory_space<vmem>>, vector<1x1x32xf32>
    %287 = vector.shape_cast %286 : vector<1x1x32xf32> to vector<1x32xf32>
    %288 = vector.broadcast %287 : vector<1x32xf32> to vector<16x32xf32>
    %289 = arith.addf %285, %288 : vector<16x32xf32>
    %290 = arith.addf %289, %199 : vector<16x32xf32>
    %c1_224 = arith.constant 1 : index
    %c0_225 = arith.constant 0 : index
    %c0_226 = arith.constant 0 : index
    %291 = vector.load %arg10[%c1_224, %c0_225, %c0_226] : memref<2x1x32xf32, #tpu.memory_space<vmem>>, vector<1x1x32xf32>
    %292 = vector.shape_cast %291 : vector<1x1x32xf32> to vector<1x32xf32>
    %c1_227 = arith.constant 1 : index
    %c0_228 = arith.constant 0 : index
    %c0_229 = arith.constant 0 : index
    %293 = vector.load %arg11[%c1_227, %c0_228, %c0_229] : memref<2x1x32xf32, #tpu.memory_space<vmem>>, vector<1x1x32xf32>
    %294 = vector.shape_cast %293 : vector<1x1x32xf32> to vector<1x32xf32>
    %cst_230 = arith.constant dense<0.000000e+00> : vector<16xf32>
    %295 = vector.multi_reduction <add>, %290, %cst_230 [1] : vector<16x32xf32> to vector<16xf32>
    %296 = vector.shape_cast %295 : vector<16xf32> to vector<16x1xf32>
    %cst_231 = arith.constant 3.200000e+01 : f32
    %297 = vector.broadcast %cst_231 : f32 to vector<16x1xf32>
    %298 = arith.divf %296, %297 : vector<16x1xf32>
    %299 = vector.broadcast %298 : vector<16x1xf32> to vector<16x32xf32>
    %300 = arith.subf %290, %299 : vector<16x32xf32>
    %301 = arith.mulf %300, %300 : vector<16x32xf32>
    %cst_232 = arith.constant dense<0.000000e+00> : vector<16xf32>
    %302 = vector.multi_reduction <add>, %301, %cst_232 [1] : vector<16x32xf32> to vector<16xf32>
    %303 = vector.shape_cast %302 : vector<16xf32> to vector<16x1xf32>
    %cst_233 = arith.constant 3.200000e+01 : f32
    %304 = vector.broadcast %cst_233 : f32 to vector<16x1xf32>
    %305 = arith.divf %303, %304 : vector<16x1xf32>
    %306 = vector.broadcast %298 : vector<16x1xf32> to vector<16x32xf32>
    %307 = arith.subf %290, %306 : vector<16x32xf32>
    %cst_234 = arith.constant 9.99999996E-13 : f32
    %308 = vector.broadcast %cst_234 : f32 to vector<16x1xf32>
    %309 = arith.addf %305, %308 : vector<16x1xf32>
    %310 = math.rsqrt %309 : vector<16x1xf32>
    %311 = vector.broadcast %310 : vector<16x1xf32> to vector<16x32xf32>
    %312 = arith.mulf %307, %311 : vector<16x32xf32>
    %313 = vector.broadcast %292 : vector<1x32xf32> to vector<16x32xf32>
    %314 = arith.mulf %312, %313 : vector<16x32xf32>
    %315 = vector.broadcast %294 : vector<1x32xf32> to vector<16x32xf32>
    %316 = arith.addf %314, %315 : vector<16x32xf32>
    %317 = arith.truncf %316 : vector<16x32xf32> to vector<16x32xbf16>
    %c1_235 = arith.constant 1 : index
    %c0_236 = arith.constant 0 : index
    %c0_237 = arith.constant 0 : index
    %318 = vector.load %arg12[%c1_235, %c0_236, %c0_237] : memref<2x32x64xbf16, #tpu.memory_space<vmem>>, vector<1x32x64xbf16>
    %319 = vector.shape_cast %318 : vector<1x32x64xbf16> to vector<32x64xbf16>
    %cst_238 = arith.constant dense<0.000000e+00> : vector<16x64xf32>
    %320 = tpu.matmul %317, %319, %cst_238 {dimension_numbers = #tpu.dot_dimension_numbers<[1], [0], [0], [1], [0, 0, 1, 1], [], []>} : vector<16x32xbf16>, vector<32x64xbf16>, vector<16x64xf32> -> vector<16x64xf32>
    %c1_239 = arith.constant 1 : index
    %c0_240 = arith.constant 0 : index
    %c0_241 = arith.constant 0 : index
    %321 = vector.load %arg13[%c1_239, %c0_240, %c0_241] : memref<2x1x64xf32, #tpu.memory_space<vmem>>, vector<1x1x64xf32>
    %322 = vector.shape_cast %321 : vector<1x1x64xf32> to vector<1x64xf32>
    %323 = vector.broadcast %322 : vector<1x64xf32> to vector<16x64xf32>
    %324 = arith.addf %320, %323 : vector<16x64xf32>
    %325 = arith.mulf %324, %324 : vector<16x64xf32>
    %326 = arith.mulf %324, %325 : vector<16x64xf32>
    %cst_242 = arith.constant 4.471500e-02 : f32
    %327 = vector.broadcast %cst_242 : f32 to vector<16x64xf32>
    %328 = arith.mulf %327, %326 : vector<16x64xf32>
    %329 = arith.addf %324, %328 : vector<16x64xf32>
    %cst_243 = arith.constant 0.797884583 : f32
    %330 = vector.broadcast %cst_243 : f32 to vector<16x64xf32>
    %331 = arith.mulf %330, %329 : vector<16x64xf32>
    %332 = math.tanh %331 : vector<16x64xf32>
    %cst_244 = arith.constant 1.000000e+00 : f32
    %333 = vector.broadcast %cst_244 : f32 to vector<16x64xf32>
    %334 = arith.addf %333, %332 : vector<16x64xf32>
    %cst_245 = arith.constant 5.000000e-01 : f32
    %335 = vector.broadcast %cst_245 : f32 to vector<16x64xf32>
    %336 = arith.mulf %335, %334 : vector<16x64xf32>
    %337 = arith.mulf %324, %336 : vector<16x64xf32>
    %338 = arith.truncf %337 : vector<16x64xf32> to vector<16x64xbf16>
    %c1_246 = arith.constant 1 : index
    %c0_247 = arith.constant 0 : index
    %c0_248 = arith.constant 0 : index
    %339 = vector.load %arg14[%c1_246, %c0_247, %c0_248] : memref<2x64x32xbf16, #tpu.memory_space<vmem>>, vector<1x64x32xbf16>
    %340 = vector.shape_cast %339 : vector<1x64x32xbf16> to vector<64x32xbf16>
    %cst_249 = arith.constant dense<0.000000e+00> : vector<16x32xf32>
    %341 = tpu.matmul %338, %340, %cst_249 {dimension_numbers = #tpu.dot_dimension_numbers<[1], [0], [0], [1], [0, 0, 1, 1], [], []>} : vector<16x64xbf16>, vector<64x32xbf16>, vector<16x32xf32> -> vector<16x32xf32>
    %c1_250 = arith.constant 1 : index
    %c0_251 = arith.constant 0 : index
    %c0_252 = arith.constant 0 : index
    %342 = vector.load %arg15[%c1_250, %c0_251, %c0_252] : memref<2x1x32xf32, #tpu.memory_space<vmem>>, vector<1x1x32xf32>
    %343 = vector.shape_cast %342 : vector<1x1x32xf32> to vector<1x32xf32>
    %344 = vector.broadcast %343 : vector<1x32xf32> to vector<16x32xf32>
    %345 = arith.addf %341, %344 : vector<16x32xf32>
    %346 = arith.addf %345, %316 : vector<16x32xf32>
    %c1_253 = arith.constant 1 : index
    %c0_254 = arith.constant 0 : index
    %c0_255 = arith.constant 0 : index
    %347 = vector.load %arg16[%c1_253, %c0_254, %c0_255] : memref<2x1x32xf32, #tpu.memory_space<vmem>>, vector<1x1x32xf32>
    %348 = vector.shape_cast %347 : vector<1x1x32xf32> to vector<1x32xf32>
    %c1_256 = arith.constant 1 : index
    %c0_257 = arith.constant 0 : index
    %c0_258 = arith.constant 0 : index
    %349 = vector.load %arg17[%c1_256, %c0_257, %c0_258] : memref<2x1x32xf32, #tpu.memory_space<vmem>>, vector<1x1x32xf32>
    %350 = vector.shape_cast %349 : vector<1x1x32xf32> to vector<1x32xf32>
    %cst_259 = arith.constant dense<0.000000e+00> : vector<16xf32>
    %351 = vector.multi_reduction <add>, %346, %cst_259 [1] : vector<16x32xf32> to vector<16xf32>
    %352 = vector.shape_cast %351 : vector<16xf32> to vector<16x1xf32>
    %cst_260 = arith.constant 3.200000e+01 : f32
    %353 = vector.broadcast %cst_260 : f32 to vector<16x1xf32>
    %354 = arith.divf %352, %353 : vector<16x1xf32>
    %355 = vector.broadcast %354 : vector<16x1xf32> to vector<16x32xf32>
    %356 = arith.subf %346, %355 : vector<16x32xf32>
    %357 = arith.mulf %356, %356 : vector<16x32xf32>
    %cst_261 = arith.constant dense<0.000000e+00> : vector<16xf32>
    %358 = vector.multi_reduction <add>, %357, %cst_261 [1] : vector<16x32xf32> to vector<16xf32>
    %359 = vector.shape_cast %358 : vector<16xf32> to vector<16x1xf32>
    %cst_262 = arith.constant 3.200000e+01 : f32
    %360 = vector.broadcast %cst_262 : f32 to vector<16x1xf32>
    %361 = arith.divf %359, %360 : vector<16x1xf32>
    %362 = vector.broadcast %354 : vector<16x1xf32> to vector<16x32xf32>
    %363 = arith.subf %346, %362 : vector<16x32xf32>
    %cst_263 = arith.constant 9.99999996E-13 : f32
    %364 = vector.broadcast %cst_263 : f32 to vector<16x1xf32>
    %365 = arith.addf %361, %364 : vector<16x1xf32>
    %366 = math.rsqrt %365 : vector<16x1xf32>
    %367 = vector.broadcast %366 : vector<16x1xf32> to vector<16x32xf32>
    %368 = arith.mulf %363, %367 : vector<16x32xf32>
    %369 = vector.broadcast %348 : vector<1x32xf32> to vector<16x32xf32>
    %370 = arith.mulf %368, %369 : vector<16x32xf32>
    %371 = vector.broadcast %350 : vector<1x32xf32> to vector<16x32xf32>
    %372 = arith.addf %370, %371 : vector<16x32xf32>
    %c0_264 = arith.constant 0 : index
    %c0_265 = arith.constant 0 : index
    %c0_266 = arith.constant 0 : index
    %373 = vector.load %arg3[%c0_264, %c0_265, %c0_266] : memref<1x2x16xf32, #tpu.memory_space<vmem>>, vector<1x2x16xf32>
    %374 = vector.shape_cast %373 : vector<1x2x16xf32> to vector<2x16xf32>
    %cst_267 = arith.constant dense<0.000000e+00> : vector<2x32xf32>
    %375 = tpu.matmul %374, %372, %cst_267 {dimension_numbers = #tpu.dot_dimension_numbers<[1], [0], [0], [1], [0, 0, 1, 1], [], []>} : vector<2x16xf32>, vector<16x32xf32>, vector<2x32xf32> -> vector<2x32xf32>
    %cst_268 = arith.constant dense<0.000000e+00> : vector<2xf32>
    %376 = vector.multi_reduction <add>, %374, %cst_268 [1] : vector<2x16xf32> to vector<2xf32>
    %377 = vector.shape_cast %376 : vector<2xf32> to vector<2x1xf32>
    %cst_269 = arith.constant 9.99999971E-10 : f32
    %378 = vector.broadcast %cst_269 : f32 to vector<2x1xf32>
    %379 = arith.maximumf %377, %378 : vector<2x1xf32>
    %380 = vector.broadcast %379 : vector<2x1xf32> to vector<2x32xf32>
    %381 = arith.divf %375, %380 : vector<2x32xf32>
    %c0_270 = arith.constant 0 : index
    %c0_271 = arith.constant 0 : index
    %382 = vector.load %arg18[%c0_270, %c0_271] : memref<2x32xf32, #tpu.memory_space<vmem>>, vector<2x32xf32>
    tpu.vector_store %arg18[%c0_270, %c0_271], %381 {strides = array<i32>} : memref<2x32xf32, #tpu.memory_space<vmem>>, vector<2x32xf32>,
    return
  }
  func.func @transform_0(%arg0: i32) -> (i32, i32) {
    %c0_i32 = arith.constant 0 : i32
    %c0_i32_0 = arith.constant 0 : i32
    return %arg0, %c0_i32 : i32, i32
  }
  func.func @transform_1(%arg0: i32) -> (i32, i32, i32) {
    %c0_i32 = arith.constant 0 : i32
    %c0_i32_0 = arith.constant 0 : i32
    %c0_i32_1 = arith.constant 0 : i32
    return %arg0, %c0_i32, %c0_i32_0 : i32, i32, i32
  }
  func.func @transform_2(%arg0: i32) -> (i32, i32, i32) {
    %c0_i32 = arith.constant 0 : i32
    %c0_i32_0 = arith.constant 0 : i32
    %c0_i32_1 = arith.constant 0 : i32
    return %arg0, %c0_i32, %c0_i32_0 : i32, i32, i32
  }
  func.func @transform_3(%arg0: i32) -> (i32, i32) {
    %c0_i32 = arith.constant 0 : i32
    %c0_i32_0 = arith.constant 0 : i32
    %c0_i32_1 = arith.constant 0 : i32
    return %c0_i32, %c0_i32_0 : i32, i32
  }
  func.func @transform_4(%arg0: i32) -> (i32, i32) {
    %c0_i32 = arith.constant 0 : i32
    %c0_i32_0 = arith.constant 0 : i32
    %c0_i32_1 = arith.constant 0 : i32
    return %c0_i32, %c0_i32_0 : i32, i32
  }
  func.func @transform_5(%arg0: i32) -> (i32, i32, i32, i32, i32) {
    %c0_i32 = arith.constant 0 : i32
    %c0_i32_0 = arith.constant 0 : i32
    %c0_i32_1 = arith.constant 0 : i32
    %c0_i32_2 = arith.constant 0 : i32
    %c0_i32_3 = arith.constant 0 : i32
    %c0_i32_4 = arith.constant 0 : i32
    return %c0_i32, %c0_i32_0, %c0_i32_1, %c0_i32_2, %c0_i32_3 : i32, i32, i32, i32, i32
  }
  func.func @transform_6(%arg0: i32) -> (i32, i32, i32, i32, i32) {
    %c0_i32 = arith.constant 0 : i32
    %c0_i32_0 = arith.constant 0 : i32
    %c0_i32_1 = arith.constant 0 : i32
    %c0_i32_2 = arith.constant 0 : i32
    %c0_i32_3 = arith.constant 0 : i32
    %c0_i32_4 = arith.constant 0 : i32
    return %c0_i32, %c0_i32_0, %c0_i32_1, %c0_i32_2, %c0_i32_3 : i32, i32, i32, i32, i32
  }
  func.func @transform_7(%arg0: i32) -> (i32, i32, i32, i32) {
    %c0_i32 = arith.constant 0 : i32
    %c0_i32_0 = arith.constant 0 : i32
    %c0_i32_1 = arith.constant 0 : i32
    %c0_i32_2 = arith.constant 0 : i32
    %c0_i32_3 = arith.constant 0 : i32
    return %c0_i32, %c0_i32_0, %c0_i32_1, %c0_i32_2 : i32, i32, i32, i32
  }
  func.func @transform_8(%arg0: i32) -> (i32, i32, i32) {
    %c0_i32 = arith.constant 0 : i32
    %c0_i32_0 = arith.constant 0 : i32
    %c0_i32_1 = arith.constant 0 : i32
    %c0_i32_2 = arith.constant 0 : i32
    return %c0_i32, %c0_i32_0, %c0_i32_1 : i32, i32, i32
  }
  func.func @transform_9(%arg0: i32) -> (i32, i32, i32) {
    %c0_i32 = arith.constant 0 : i32
    %c0_i32_0 = arith.constant 0 : i32
    %c0_i32_1 = arith.constant 0 : i32
    %c0_i32_2 = arith.constant 0 : i32
    return %c0_i32, %c0_i32_0, %c0_i32_1 : i32, i32, i32
  }
  func.func @transform_10(%arg0: i32) -> (i32, i32, i32) {
    %c0_i32 = arith.constant 0 : i32
    %c0_i32_0 = arith.constant 0 : i32
    %c0_i32_1 = arith.constant 0 : i32
    %c0_i32_2 = arith.constant 0 : i32
    return %c0_i32, %c0_i32_0, %c0_i32_1 : i32, i32, i32
  }
  func.func @transform_11(%arg0: i32) -> (i32, i32, i32) {
    %c0_i32 = arith.constant 0 : i32
    %c0_i32_0 = arith.constant 0 : i32
    %c0_i32_1 = arith.constant 0 : i32
    %c0_i32_2 = arith.constant 0 : i32
    return %c0_i32, %c0_i32_0, %c0_i32_1 : i32, i32, i32
  }
  func.func @transform_12(%arg0: i32) -> (i32, i32, i32) {
    %c0_i32 = arith.constant 0 : i32
    %c0_i32_0 = arith.constant 0 : i32
    %c0_i32_1 = arith.constant 0 : i32
    %c0_i32_2 = arith.constant 0 : i32
    return %c0_i32, %c0_i32_0, %c0_i32_1 : i32, i32, i32
  }
  func.func @transform_13(%arg0: i32) -> (i32, i32, i32) {
    %c0_i32 = arith.constant 0 : i32
    %c0_i32_0 = arith.constant 0 : i32
    %c0_i32_1 = arith.constant 0 : i32
    %c0_i32_2 = arith.constant 0 : i32
    return %c0_i32, %c0_i32_0, %c0_i32_1 : i32, i32, i32
  }
  func.func @transform_14(%arg0: i32) -> (i32, i32, i32) {
    %c0_i32 = arith.constant 0 : i32
    %c0_i32_0 = arith.constant 0 : i32
    %c0_i32_1 = arith.constant 0 : i32
    %c0_i32_2 = arith.constant 0 : i32
    return %c0_i32, %c0_i32_0, %c0_i32_1 : i32, i32, i32
  }
  func.func @transform_15(%arg0: i32) -> (i32, i32, i32) {
    %c0_i32 = arith.constant 0 : i32
    %c0_i32_0 = arith.constant 0 : i32
    %c0_i32_1 = arith.constant 0 : i32
    %c0_i32_2 = arith.constant 0 : i32
    return %c0_i32, %c0_i32_0, %c0_i32_1 : i32, i32, i32
  }
  func.func @transform_16(%arg0: i32) -> (i32, i32, i32) {
    %c0_i32 = arith.constant 0 : i32
    %c0_i32_0 = arith.constant 0 : i32
    %c0_i32_1 = arith.constant 0 : i32
    %c0_i32_2 = arith.constant 0 : i32
    return %c0_i32, %c0_i32_0, %c0_i32_1 : i32, i32, i32
  }
  func.func @transform_17(%arg0: i32) -> (i32, i32) {
    %c0_i32 = arith.constant 0 : i32
    %c0_i32_0 = arith.constant 0 : i32
    return %arg0, %c0_i32 : i32, i32
  }
}

</mosaic_0001>

<llo_original>
// kernel: custom_sentence_transformer.1
$region0: #{custom_sentence_transformer.1}
  #allocation0 [shape = 'u32[]', space=smem, size = 0x4, offset = 0x4, fixed_abs, tag = 'smem constant byte address 0x4 - core index']
  #allocation1 [shape = 'u32[144,128]{1,0:T(1,128)}', space=vmem, size = 0x12000, scoped, tag = 'internal scratch']
  %s0 = inlined_call_operand.vmem [shape: f32[16,32], index: 0, kind: input, shape index: {}]
  %s1 = inlined_call_operand.vmem [shape: f32[1,16,16], index: 1, kind: input, shape index: {}]
  %s2 = inlined_call_operand.vmem [shape: f32[1,2,16], index: 2, kind: input, shape index: {}]
  %s3 = inlined_call_operand.vmem [shape: f32[1,32], index: 3, kind: input, shape index: {}]
  %s4 = inlined_call_operand.vmem [shape: f32[1,32], index: 4, kind: input, shape index: {}]
  %s5 = inlined_call_operand.vmem [shape: bf16[2,3,2,32,16], index: 5, kind: input, shape index: {}]
  %s6 = inlined_call_operand.vmem [shape: f32[2,3,2,1,16], index: 6, kind: input, shape index: {}]
  %s7 = inlined_call_operand.vmem [shape: bf16[2,2,16,32], index: 7, kind: input, shape index: {}]
  %s8 = inlined_call_operand.vmem [shape: f32[2,1,32], index: 8, kind: input, shape index: {}]
  %s9 = inlined_call_operand.vmem [shape: f32[2,1,32], index: 9, kind: input, shape index: {}]
  %s10 = inlined_call_operand.vmem [shape: f32[2,1,32], index: 10, kind: input, shape index: {}]
  %s11 = inlined_call_operand.vmem [shape: bf16[2,32,64], index: 11, kind: input, shape index: {}]
  %s12 = inlined_call_operand.vmem [shape: f32[2,1,64], index: 12, kind: input, shape index: {}]
  %s13 = inlined_call_operand.vmem [shape: bf16[2,64,32], index: 13, kind: input, shape index: {}]
  %s14 = inlined_call_operand.vmem [shape: f32[2,1,32], index: 14, kind: input, shape index: {}]
  %s15 = inlined_call_operand.vmem [shape: f32[2,1,32], index: 15, kind: input, shape index: {}]
  %s16 = inlined_call_operand.vmem [shape: f32[2,1,32], index: 16, kind: input, shape index: {}]
  %s17 = inlined_call_operand.hbm [shape: f32[2,32], index: 17, kind: output, shape index: {}]
  %s18 = sld [smem:[#allocation0]]
  $region78: #{custom_sentence_transformer.1} parent=0
    _
  %s20 = ssub.s32 1, %s18
  %s21 = scalar_select 0, %s20, %s18
  $region1: #{custom_sentence_transformer.1} parent=0
    #allocation2 [shape = 'u8[1024]{0}', space=vmem, size = 0x400, scoped, tag = 'output window, operand 0, single buffered']
    #allocation3 [shape = 's32[1]{0}', space=sflag, size = 0x4, scoped, tag = 'scoped memory for custom_sentence_transformer.1']
    %22 = vsyncpa [#allocation3], 0
    // Predicated region
    $region2: #{custom_sentence_transformer.1} parent=1 // pred_check
      _
    $region3: #{custom_sentence_transformer.1} parent=1 // pred_check_branch
      %24 = sbr.rel (0) target = $region5
    $region4: #{custom_sentence_transformer.1} parent=1 // pred_region
      _
    $region5: #{custom_sentence_transformer.1} parent=1 // pred_fallthru
      _
    // Predicated region
    $region6: #{custom_sentence_transformer.1} parent=1 // pred_check
      _
    $region7: #{custom_sentence_transformer.1} parent=1 // pred_check_branch
      %26 = sbr.rel (0) target = $region9
    $region8: #{custom_sentence_transformer.1} parent=1 // pred_region
      _
    $region9: #{custom_sentence_transformer.1} parent=1 // pred_fallthru
      _
    // Predicated region
    $region10: #{custom_sentence_transformer.1} parent=1 // pred_check
      _
    $region11: #{custom_sentence_transformer.1} parent=1 // pred_check_branch
      %28 = sbr.rel (0) target = $region13
    $region12: #{custom_sentence_transformer.1} parent=1 // pred_region
      _
    $region13: #{custom_sentence_transformer.1} parent=1 // pred_fallthru
      _
    // Predicated region
    $region14: #{custom_sentence_transformer.1} parent=1 // pred_check
      _
    $region15: #{custom_sentence_transformer.1} parent=1 // pred_check_branch
      %30 = sbr.rel (0) target = $region17
    $region16: #{custom_sentence_transformer.1} parent=1 // pred_region
      _
    $region17: #{custom_sentence_transformer.1} parent=1 // pred_fallthru
      _
    // Predicated region
    $region18: #{custom_sentence_transformer.1} parent=1 // pred_check
      _
    $region19: #{custom_sentence_transformer.1} parent=1 // pred_check_branch
      %32 = sbr.rel (0) target = $region21
    $region20: #{custom_sentence_transformer.1} parent=1 // pred_region
      _
    $region21: #{custom_sentence_transformer.1} parent=1 // pred_fallthru
      _
    // Predicated region
    $region22: #{custom_sentence_transformer.1} parent=1 // pred_check
      _
    $region23: #{custom_sentence_transformer.1} parent=1 // pred_check_branch
      %34 = sbr.rel (0) target = $region25
    $region24: #{custom_sentence_transformer.1} parent=1 // pred_region
      _
    $region25: #{custom_sentence_transformer.1} parent=1 // pred_fallthru
      _
    // Predicated region
    $region26: #{custom_sentence_transformer.1} parent=1 // pred_check
      _
    $region27: #{custom_sentence_transformer.1} parent=1 // pred_check_branch
      %36 = sbr.rel (0) target = $region29
    $region28: #{custom_sentence_transformer.1} parent=1 // pred_region
      _
    $region29: #{custom_sentence_transformer.1} parent=1 // pred_fallthru
      _
    // Predicated region
    $region30: #{custom_sentence_transformer.1} parent=1 // pred_check
      _
    $region31: #{custom_sentence_transformer.1} parent=1 // pred_check_branch
      %38 = sbr.rel (0) target = $region33
    $region32: #{custom_sentence_transformer.1} parent=1 // pred_region
      _
    $region33: #{custom_sentence_transformer.1} parent=1 // pred_fallthru
      _
    // Predicated region
    $region34: #{custom_sentence_transformer.1} parent=1 // pred_check
      _
    $region35: #{custom_sentence_transformer.1} parent=1 // pred_check_branch
      %40 = sbr.rel (0) target = $region37
    $region36: #{custom_sentence_transformer.1} parent=1 // pred_region
      _
    $region37: #{custom_sentence_transformer.1} parent=1 // pred_fallthru
      _
    // Predicated region
    $region38: #{custom_sentence_transformer.1} parent=1 // pred_check
      _
    $region39: #{custom_sentence_transformer.1} parent=1 // pred_check_branch
      %42 = sbr.rel (0) target = $region41
    $region40: #{custom_sentence_transformer.1} parent=1 // pred_region
      _
    $region41: #{custom_sentence_transformer.1} parent=1 // pred_fallthru
      _
    // Predicated region
    $region42: #{custom_sentence_transformer.1} parent=1 // pred_check
      _
    $region43: #{custom_sentence_transformer.1} parent=1 // pred_check_branch
      %44 = sbr.rel (0) target = $region45
    $region44: #{custom_sentence_transformer.1} parent=1 // pred_region
      _
    $region45: #{custom_sentence_transformer.1} parent=1 // pred_fallthru
      _
    // Predicated region
    $region46: #{custom_sentence_transformer.1} parent=1 // pred_check
      _
    $region47: #{custom_sentence_transformer.1} parent=1 // pred_check_branch
      %46 = sbr.rel (0) target = $region49
    $region48: #{custom_sentence_transformer.1} parent=1 // pred_region
      _
    $region49: #{custom_sentence_transformer.1} parent=1 // pred_fallthru
      _
    // Predicated region
    $region50: #{custom_sentence_transformer.1} parent=1 // pred_check
      _
    $region51: #{custom_sentence_transformer.1} parent=1 // pred_check_branch
      %48 = sbr.rel (0) target = $region53
    $region52: #{custom_sentence_transformer.1} parent=1 // pred_region
      _
    $region53: #{custom_sentence_transformer.1} parent=1 // pred_fallthru
      _
    // Predicated region
    $region54: #{custom_sentence_transformer.1} parent=1 // pred_check
      _
    $region55: #{custom_sentence_transformer.1} parent=1 // pred_check_branch
      %50 = sbr.rel (0) target = $region57
    $region56: #{custom_sentence_transformer.1} parent=1 // pred_region
      _
    $region57: #{custom_sentence_transformer.1} parent=1 // pred_fallthru
      _
    // Predicated region
    $region58: #{custom_sentence_transformer.1} parent=1 // pred_check
      _
    $region59: #{custom_sentence_transformer.1} parent=1 // pred_check_branch
      %52 = sbr.rel (0) target = $region61
    $region60: #{custom_sentence_transformer.1} parent=1 // pred_region
      _
    $region61: #{custom_sentence_transformer.1} parent=1 // pred_fallthru
      _
    // Predicated region
    $region62: #{custom_sentence_transformer.1} parent=1 // pred_check
      _
    $region63: #{custom_sentence_transformer.1} parent=1 // pred_check_branch
      %54 = sbr.rel (0) target = $region65
    $region64: #{custom_sentence_transformer.1} parent=1 // pred_region
      _
    $region65: #{custom_sentence_transformer.1} parent=1 // pred_fallthru
      _
    // Predicated region
    $region66: #{custom_sentence_transformer.1} parent=1 // pred_check
      _
    $region67: #{custom_sentence_transformer.1} parent=1 // pred_check_branch
      %56 = sbr.rel (0) target = $region69
    $region68: #{custom_sentence_transformer.1} parent=1 // pred_region
      _
    $region69: #{custom_sentence_transformer.1} parent=1 // pred_fallthru
      _
    %v58 = vld [vmem:[%s0] sm:$0xff]
    %v59 = vld [vmem:[%s0 + $0x8] sm:$0xff]
    %v60 = vld [vmem:[%s3] sm:$0x1]
    %v61 = vld [vmem:[%s4] sm:$0x1]
    %vm62 = vcmask 261120
    %v63 = vsel %vm62, %v58, 0.0
    %64 = vadd.xlane.f32.xlu0 %v63
    %v65 = vpop.xlane.xlu0 %64
    %v66 = vsel %vm62, %v59, 0.0
    %67 = vadd.xlane.f32.xlu0 %v66
    %v68 = vpop.xlane.xlu0 %67
    %v69 = vrcp.pop 32.0
    %v70 = vmul.f32 %v65, %v69
    %v71 = vmul.f32 %v68, %v69
    %v72 = vsub.f32 %v58, %v70
    %v73 = vsub.f32 %v59, %v71
    %v74 = vmul.f32 %v72, %v72
    %v75 = vmul.f32 %v73, %v73
    %v76 = vsel %vm62, %v74, 0.0
    %77 = vadd.xlane.f32.xlu0 %v76
    %v78 = vpop.xlane.xlu0 %77
    %v79 = vsel %vm62, %v75, 0.0
    %80 = vadd.xlane.f32.xlu0 %v79
    %v81 = vpop.xlane.xlu0 %80
    %v82 = vmul.f32 %v78, %v69
    %v83 = vmul.f32 %v81, %v69
    %v84 = vadd.f32 %v82, 1e-12
    %v85 = vadd.f32 %v83, 1e-12
    %v86 = vrsqrt.pop %v84
    %v87 = vrsqrt.pop %v85
    %v88 = vmul.f32 %v72, %v86
    %v89 = vmul.f32 %v73, %v87
    %v91 = vlaneseq
    %v92 = vshrl.u32 %v91, 7
    %v93 = vsub.s32 0, %v92
    %v94 = vrot.slane %v60, %v93
    %v96 = vmul.f32 %v88, %v94
    %v97 = vmul.f32 %v89, %v94
    %v99 = vlaneseq
    %v100 = vshrl.u32 %v99, 7
    %v101 = vsub.s32 0, %v100
    %v102 = vrot.slane %v61, %v101
    %v104 = vadd.f32 %v96, %v102
    %v105 = vadd.f32 %v97, %v102
    %v106 = vld [vmem:[%s1] sm:$0xff]
    %v107 = vld [vmem:[%s1 + $0x8] sm:$0xff]
    %v108 = vpack.c.bf16 %v105, %v104
    %v109 = vld [vmem:[%s5] sm:$0xf]
    %v110 = vld [vmem:[%s5 + $0x4] sm:$0xf]
    %v111 = vld [vmem:[%s5 + $0x8] sm:$0xf]
    %v112 = vld [vmem:[%s5 + $0xc] sm:$0xf]
    %v113 = vld [vmem:[%s6] sm:$0x1]
    %v115 = vlaneseq
    %v116 = vshrl.u32 %v115, 7
    %v117 = vsub.s32 0, %v116
    %v118 = vrot.slane %v113, %v117
    %v124 = vunpack.c.l.b16 %v109
    %v125 = vunpack.c.l.b16 %v110
    %v126 = vunpack.c.l.b16 %v111
    %v127 = vunpack.c.l.b16 %v112
    %v128 = vpack.c.b16 %v125, %v124
    %v129 = vpack.c.b16 %v127, %v126
    %v133 = vsel %vm62, %v108, 0
    %135 = vmatprep.subr.bf16.mxu0 0
    %136 = vmatpush1.bf16.msra.mxu0 %v128
    %137 = vmatprep.subr.bf16.mxu0 0
    %138 = vmatpush1.bf16.msra.mxu0 %v129
    %139 = vmatprep.subr.bf16.mxu0 0
    %140 = vmatpush1.bf16.msra.mxu0 0
    %141 = vmatprep.subr.bf16.mxu0 0
    %142 = vmatpush1.bf16.msra.mxu0 0
    %143 = vmatprep.subr.bf16.mxu0 0
    %144 = vmatpush1.bf16.msra.mxu0 0
    %145 = vmatprep.subr.bf16.mxu0 0
    %146 = vmatpush1.bf16.msra.mxu0 0
    %147 = vmatprep.subr.bf16.mxu0 0
    %148 = vmatpush1.bf16.msra.mxu0 0
    %149 = vmatprep.subr.bf16.mxu0 0
    %150 = vmatpush1.bf16.msra.mxu0 0
    %151 = vmatprep.subr.bf16.mxu0 0
    %152 = vmatpush1.bf16.msra.mxu0 0
    %153 = vmatprep.subr.bf16.mxu0 0
    %154 = vmatpush1.bf16.msra.mxu0 0
    %155 = vmatprep.subr.bf16.mxu0 0
    %156 = vmatpush1.bf16.msra.mxu0 0
    %157 = vmatprep.subr.bf16.mxu0 0
    %158 = vmatpush1.bf16.msra.mxu0 0
    %159 = vmatprep.subr.bf16.mxu0 0
    %160 = vmatpush1.bf16.msra.mxu0 0
    %161 = vmatprep.subr.bf16.mxu0 0
    %162 = vmatpush1.bf16.msra.mxu0 0
    %163 = vmatprep.subr.bf16.mxu0 0
    %164 = vmatpush1.bf16.msra.mxu0 0
    %165 = vmatprep.subr.bf16.mxu0 0
    %166 = vmatpush1.bf16.msra.mxu0 0
    %167 = vmatprep.mubr.bf16.mxu0 0
    %168 = vmatmul.mubr.bf16.gmra.mrb[0].mxu0 %v133
    %v169 = vpop.f32.mrb[0].mxu0
    %v170 = vadd.f32 %v118, %v169
    %v171 = vpop.f32.mrb[0].mxu0
    %v172 = vpop.f32.mrb[0].mxu0
    %v173 = vadd.f32 %v118, %v172
    %v174 = vpop.f32.mrb[0].mxu0
    %175 = vdwg.mxu0
    %s176 = scalar_lea.vmem %s5, 32
    %v177 = vld [vmem:[%s176] sm:$0xf]
    %v178 = vld [vmem:[%s176 + $0x4] sm:$0xf]
    %v179 = vld [vmem:[%s176 + $0x8] sm:$0xf]
    %v180 = vld [vmem:[%s176 + $0xc] sm:$0xf]
    %s181 = scalar_lea.vmem %s6, 2
    %v182 = vld [vmem:[%s181] sm:$0x1]
    %v184 = vlaneseq
    %v185 = vshrl.u32 %v184, 7
    %v186 = vsub.s32 0, %v185
    %v187 = vrot.slane %v182, %v186
    %v193 = vunpack.c.l.b16 %v177
    %v194 = vunpack.c.l.b16 %v178
    %v195 = vunpack.c.l.b16 %v179
    %v196 = vunpack.c.l.b16 %v180
    %v197 = vpack.c.b16 %v194, %v193
    %v198 = vpack.c.b16 %v196, %v195
    %201 = vmatprep.subr.bf16.mxu0 0
    %202 = vmatpush1.bf16.msra.mxu0 %v197
    %203 = vmatprep.subr.bf16.mxu0 0
    %204 = vmatpush1.bf16.msra.mxu0 %v198
    %205 = vmatprep.subr.bf16.mxu0 0
    %206 = vmatpush1.bf16.msra.mxu0 0
    %207 = vmatprep.subr.bf16.mxu0 0
    %208 = vmatpush1.bf16.msra.mxu0 0
    %209 = vmatprep.subr.bf16.mxu0 0
    %210 = vmatpush1.bf16.msra.mxu0 0
    %211 = vmatprep.subr.bf16.mxu0 0
    %212 = vmatpush1.bf16.msra.mxu0 0
    %213 = vmatprep.subr.bf16.mxu0 0
    %214 = vmatpush1.bf16.msra.mxu0 0
    %215 = vmatprep.subr.bf16.mxu0 0
    %216 = vmatpush1.bf16.msra.mxu0 0
    %217 = vmatprep.subr.bf16.mxu0 0
    %218 = vmatpush1.bf16.msra.mxu0 0
    %219 = vmatprep.subr.bf16.mxu0 0
    %220 = vmatpush1.bf16.msra.mxu0 0
    %221 = vmatprep.subr.bf16.mxu0 0
    %222 = vmatpush1.bf16.msra.mxu0 0
    %223 = vmatprep.subr.bf16.mxu0 0
    %224 = vmatpush1.bf16.msra.mxu0 0
    %225 = vmatprep.subr.bf16.mxu0 0
    %226 = vmatpush1.bf16.msra.mxu0 0
    %227 = vmatprep.subr.bf16.mxu0 0
    %228 = vmatpush1.bf16.msra.mxu0 0
    %229 = vmatprep.subr.bf16.mxu0 0
    %230 = vmatpush1.bf16.msra.mxu0 0
    %231 = vmatprep.subr.bf16.mxu0 0
    %232 = vmatpush1.bf16.msra.mxu0 0
    %233 = vmatprep.mubr.bf16.mxu0 0
    %234 = vmatmul.mubr.bf16.gmra.mrb[0].mxu0 %v133
    %v235 = vpop.f32.mrb[0].mxu0
    %v236 = vadd.f32 %v187, %v235
    %v237 = vpop.f32.mrb[0].mxu0
    %v238 = vpop.f32.mrb[0].mxu0
    %v239 = vadd.f32 %v187, %v238
    %v240 = vpop.f32.mrb[0].mxu0
    %241 = vdwg.mxu0
    %s242 = scalar_lea.vmem %s5, 64
    %v243 = vld [vmem:[%s242] sm:$0xf]
    %v244 = vld [vmem:[%s242 + $0x4] sm:$0xf]
    %v245 = vld [vmem:[%s242 + $0x8] sm:$0xf]
    %v246 = vld [vmem:[%s242 + $0xc] sm:$0xf]
    %s247 = scalar_lea.vmem %s6, 4
    %v248 = vld [vmem:[%s247] sm:$0x1]
    %v250 = vlaneseq
    %v251 = vshrl.u32 %v250, 7
    %v252 = vsub.s32 0, %v251
    %v253 = vrot.slane %v248, %v252
    %v259 = vunpack.c.l.b16 %v243
    %v260 = vunpack.c.l.b16 %v244
    %v261 = vunpack.c.l.b16 %v245
    %v262 = vunpack.c.l.b16 %v246
    %v263 = vpack.c.b16 %v260, %v259
    %v264 = vpack.c.b16 %v262, %v261
    %267 = vmatprep.subr.bf16.mxu0 0
    %268 = vmatpush1.bf16.msra.mxu0 %v263
    %269 = vmatprep.subr.bf16.mxu0 0
    %270 = vmatpush1.bf16.msra.mxu0 %v264
    %271 = vmatprep.subr.bf16.mxu0 0
    %272 = vmatpush1.bf16.msra.mxu0 0
    %273 = vmatprep.subr.bf16.mxu0 0
    %274 = vmatpush1.bf16.msra.mxu0 0
    %275 = vmatprep.subr.bf16.mxu0 0
    %276 = vmatpush1.bf16.msra.mxu0 0
    %277 = vmatprep.subr.bf16.mxu0 0
    %278 = vmatpush1.bf16.msra.mxu0 0
    %279 = vmatprep.subr.bf16.mxu0 0
    %280 = vmatpush1.bf16.msra.mxu0 0
    %281 = vmatprep.subr.bf16.mxu0 0
    %282 = vmatpush1.bf16.msra.mxu0 0
    %283 = vmatprep.subr.bf16.mxu0 0
    %284 = vmatpush1.bf16.msra.mxu0 0
    %285 = vmatprep.subr.bf16.mxu0 0
    %286 = vmatpush1.bf16.msra.mxu0 0
    %287 = vmatprep.subr.bf16.mxu0 0
    %288 = vmatpush1.bf16.msra.mxu0 0
    %289 = vmatprep.subr.bf16.mxu0 0
    %290 = vmatpush1.bf16.msra.mxu0 0
    %291 = vmatprep.subr.bf16.mxu0 0
    %292 = vmatpush1.bf16.msra.mxu0 0
    %293 = vmatprep.subr.bf16.mxu0 0
    %294 = vmatpush1.bf16.msra.mxu0 0
    %295 = vmatprep.subr.bf16.mxu0 0
    %296 = vmatpush1.bf16.msra.mxu0 0
    %297 = vmatprep.subr.bf16.mxu0 0
    %298 = vmatpush1.bf16.msra.mxu0 0
    %299 = vmatprep.mubr.bf16.mxu0 0
    %300 = vmatmul.mubr.bf16.gmra.mrb[0].mxu0 %v133
    %v301 = vpop.f32.mrb[0].mxu0
    %v302 = vadd.f32 %v253, %v301
    %v303 = vpop.f32.mrb[0].mxu0
    %v304 = vpop.f32.mrb[0].mxu0
    %v305 = vadd.f32 %v253, %v304
    %v306 = vpop.f32.mrb[0].mxu0
    %307 = vdwg.mxu0
    %v308 = vpack.c.bf16 %v173, %v170
    %v309 = vpack.c.bf16 %v239, %v236
    %vm310 = vcmask 130048
    %v312 = vsel %vm310, %v308, 0
    %v315 = vsel %vm310, %v309, 0
    %317 = vmatprep.subr.bf16.mxu0 0
    %318 = vmatpush1.bf16.xpose.msra.mxu0 %v315
    %319 = vmatprep.subr.bf16.mxu0 0
    %320 = vmatpush1.bf16.xpose.msra.mxu0 0
    %321 = vmatprep.subr.bf16.mxu0 0
    %322 = vmatpush1.bf16.xpose.msra.mxu0 0
    %323 = vmatprep.subr.bf16.mxu0 0
    %324 = vmatpush1.bf16.xpose.msra.mxu0 0
    %325 = vmatprep.subr.bf16.mxu0 0
    %326 = vmatpush1.bf16.xpose.msra.mxu0 0
    %327 = vmatprep.subr.bf16.mxu0 0
    %328 = vmatpush1.bf16.xpose.msra.mxu0 0
    %329 = vmatprep.subr.bf16.mxu0 0
    %330 = vmatpush1.bf16.xpose.msra.mxu0 0
    %331 = vmatprep.subr.bf16.mxu0 0
    %332 = vmatpush1.bf16.xpose.msra.mxu0 0
    %333 = vmatprep.subr.bf16.mxu0 0
    %334 = vmatpush1.bf16.xpose.msra.mxu0 0
    %335 = vmatprep.subr.bf16.mxu0 0
    %336 = vmatpush1.bf16.xpose.msra.mxu0 0
    %337 = vmatprep.subr.bf16.mxu0 0
    %338 = vmatpush1.bf16.xpose.msra.mxu0 0
    %339 = vmatprep.subr.bf16.mxu0 0
    %340 = vmatpush1.bf16.xpose.msra.mxu0 0
    %341 = vmatprep.subr.bf16.mxu0 0
    %342 = vmatpush1.bf16.xpose.msra.mxu0 0
    %343 = vmatprep.subr.bf16.mxu0 0
    %344 = vmatpush1.bf16.xpose.msra.mxu0 0
    %345 = vmatprep.subr.bf16.mxu0 0
    %346 = vmatpush1.bf16.xpose.msra.mxu0 0
    %347 = vmatprep.subr.bf16.mxu0 0
    %348 = vmatpush1.bf16.xpose.msra.mxu0 0
    %349 = vmatprep.mubr.bf16.mxu0 0
    %350 = vmatmul.mubr.bf16.gmra.mrb[0].mxu0 %v312
    %v351 = vpop.f32.mrb[0].mxu0
    %v352 = vadd.f32 %v106, %v351
    %v353 = vpop.f32.mrb[0].mxu0
    %v354 = vpop.f32.mrb[0].mxu0
    %v355 = vadd.f32 %v107, %v354
    %v356 = vpop.f32.mrb[0].mxu0
    %357 = vdwg.mxu0
    %v358 = vsel %vm310, %v352, -inf
    %359 = vmax.xlane.f32.xlu0 %v358
    %v360 = vpop.xlane.xlu0 %359
    %v361 = vsel %vm310, %v355, -inf
    %362 = vmax.xlane.f32.xlu0 %v361
    %v363 = vpop.xlane.xlu0 %362
    %v364 = vsub.f32 %v352, %v360
    %v365 = vsub.f32 %v355, %v363
    %v366 = vmul.f32 %v364, 1.442695
    %v367 = vpow.pop %v366
    %v368 = vmul.f32 %v365, 1.442695
    %v369 = vpow.pop %v368
    %v370 = vsel %vm310, %v367, 0.0
    %371 = vadd.xlane.f32.xlu0 %v370
    %v372 = vpop.xlane.xlu0 %371
    %v373 = vsel %vm310, %v369, 0.0
    %374 = vadd.xlane.f32.xlu0 %v373
    %v375 = vpop.xlane.xlu0 %374
    %v376 = vrcp.pop %v372
    %v377 = vrcp.pop %v375
    %v378 = vmul.f32 %v367, %v376
    %v379 = vmul.f32 %v369, %v377
    %v380 = vpack.c.bf16 %v379, %v378
    %v381 = vpack.c.bf16 %v305, %v302
    %v383 = vsel %vm310, %v380, 0
    %385 = vmatprep.subr.bf16.mxu0 0
    %386 = vmatpush1.bf16.msra.mxu0 %v381
    %387 = vmatprep.subr.bf16.mxu0 0
    %388 = vmatpush1.bf16.msra.mxu0 0
    %389 = vmatprep.subr.bf16.mxu0 0
    %390 = vmatpush1.bf16.msra.mxu0 0
    %391 = vmatprep.subr.bf16.mxu0 0
    %392 = vmatpush1.bf16.msra.mxu0 0
    %393 = vmatprep.subr.bf16.mxu0 0
    %394 = vmatpush1.bf16.msra.mxu0 0
    %395 = vmatprep.subr.bf16.mxu0 0
    %396 = vmatpush1.bf16.msra.mxu0 0
    %397 = vmatprep.subr.bf16.mxu0 0
    %398 = vmatpush1.bf16.msra.mxu0 0
    %399 = vmatprep.subr.bf16.mxu0 0
    %400 = vmatpush1.bf16.msra.mxu0 0
    %401 = vmatprep.subr.bf16.mxu0 0
    %402 = vmatpush1.bf16.msra.mxu0 0
    %403 = vmatprep.subr.bf16.mxu0 0
    %404 = vmatpush1.bf16.msra.mxu0 0
    %405 = vmatprep.subr.bf16.mxu0 0
    %406 = vmatpush1.bf16.msra.mxu0 0
    %407 = vmatprep.subr.bf16.mxu0 0
    %408 = vmatpush1.bf16.msra.mxu0 0
    %409 = vmatprep.subr.bf16.mxu0 0
    %410 = vmatpush1.bf16.msra.mxu0 0
    %411 = vmatprep.subr.bf16.mxu0 0
    %412 = vmatpush1.bf16.msra.mxu0 0
    %413 = vmatprep.subr.bf16.mxu0 0
    %414 = vmatpush1.bf16.msra.mxu0 0
    %415 = vmatprep.subr.bf16.mxu0 0
    %416 = vmatpush1.bf16.msra.mxu0 0
    %417 = vmatprep.mubr.bf16.mxu0 0
    %418 = vmatmul.mubr.bf16.gmra.mrb[0].mxu0 %v383
    %v419 = vpop.f32.mrb[0].mxu0
    %v420 = vadd.f32 0.0, %v419
    %v421 = vpop.f32.mrb[0].mxu0
    %v422 = vpop.f32.mrb[0].mxu0
    %v423 = vadd.f32 0.0, %v422
    %v424 = vpop.f32.mrb[0].mxu0
    %425 = vdwg.mxu0
    %v426 = vpack.c.bf16 %v423, %v420
    %v427 = vld [vmem:[%s7] sm:$0xf]
    %v428 = vld [vmem:[%s7 + $0x4] sm:$0xf]
    %s429 = scalar_lea.vmem %s5, 16
    %v430 = vld [vmem:[%s429] sm:$0xf]
    %v431 = vld [vmem:[%s429 + $0x4] sm:$0xf]
    %v432 = vld [vmem:[%s429 + $0x8] sm:$0xf]
    %v433 = vld [vmem:[%s429 + $0xc] sm:$0xf]
    %s434 = scalar_lea.vmem %s6, 1
    %v435 = vld [vmem:[%s434] sm:$0x1]
    %v437 = vlaneseq
    %v438 = vshrl.u32 %v437, 7
    %v439 = vsub.s32 0, %v438
    %v440 = vrot.slane %v435, %v439
    %v446 = vunpack.c.l.b16 %v430
    %v447 = vunpack.c.l.b16 %v431
    %v448 = vunpack.c.l.b16 %v432
    %v449 = vunpack.c.l.b16 %v433
    %v450 = vpack.c.b16 %v447, %v446
    %v451 = vpack.c.b16 %v449, %v448
    %454 = vmatprep.subr.bf16.mxu0 0
    %455 = vmatpush1.bf16.msra.mxu0 %v450
    %456 = vmatprep.subr.bf16.mxu0 0
    %457 = vmatpush1.bf16.msra.mxu0 %v451
    %458 = vmatprep.subr.bf16.mxu0 0
    %459 = vmatpush1.bf16.msra.mxu0 0
    %460 = vmatprep.subr.bf16.mxu0 0
    %461 = vmatpush1.bf16.msra.mxu0 0
    %462 = vmatprep.subr.bf16.mxu0 0
    %463 = vmatpush1.bf16.msra.mxu0 0
    %464 = vmatprep.subr.bf16.mxu0 0
    %465 = vmatpush1.bf16.msra.mxu0 0
    %466 = vmatprep.subr.bf16.mxu0 0
    %467 = vmatpush1.bf16.msra.mxu0 0
    %468 = vmatprep.subr.bf16.mxu0 0
    %469 = vmatpush1.bf16.msra.mxu0 0
    %470 = vmatprep.subr.bf16.mxu0 0
    %471 = vmatpush1.bf16.msra.mxu0 0
    %472 = vmatprep.subr.bf16.mxu0 0
    %473 = vmatpush1.bf16.msra.mxu0 0
    %474 = vmatprep.subr.bf16.mxu0 0
    %475 = vmatpush1.bf16.msra.mxu0 0
    %476 = vmatprep.subr.bf16.mxu0 0
    %477 = vmatpush1.bf16.msra.mxu0 0
    %478 = vmatprep.subr.bf16.mxu0 0
    %479 = vmatpush1.bf16.msra.mxu0 0
    %480 = vmatprep.subr.bf16.mxu0 0
    %481 = vmatpush1.bf16.msra.mxu0 0
    %482 = vmatprep.subr.bf16.mxu0 0
    %483 = vmatpush1.bf16.msra.mxu0 0
    %484 = vmatprep.subr.bf16.mxu0 0
    %485 = vmatpush1.bf16.msra.mxu0 0
    %486 = vmatprep.mubr.bf16.mxu0 0
    %487 = vmatmul.mubr.bf16.gmra.mrb[0].mxu0 %v133
    %v488 = vpop.f32.mrb[0].mxu0
    %v489 = vadd.f32 %v440, %v488
    %v490 = vpop.f32.mrb[0].mxu0
    %v491 = vpop.f32.mrb[0].mxu0
    %v492 = vadd.f32 %v440, %v491
    %v493 = vpop.f32.mrb[0].mxu0
    %494 = vdwg.mxu0
    %s495 = scalar_lea.vmem %s5, 48
    %v496 = vld [vmem:[%s495] sm:$0xf]
    %v497 = vld [vmem:[%s495 + $0x4] sm:$0xf]
    %v498 = vld [vmem:[%s495 + $0x8] sm:$0xf]
    %v499 = vld [vmem:[%s495 + $0xc] sm:$0xf]
    %s500 = scalar_lea.vmem %s6, 3
    %v501 = vld [vmem:[%s500] sm:$0x1]
    %v503 = vlaneseq
    %v504 = vshrl.u32 %v503, 7
    %v505 = vsub.s32 0, %v504
    %v506 = vrot.slane %v501, %v505
    %v512 = vunpack.c.l.b16 %v496
    %v513 = vunpack.c.l.b16 %v497
    %v514 = vunpack.c.l.b16 %v498
    %v515 = vunpack.c.l.b16 %v499
    %v516 = vpack.c.b16 %v513, %v512
    %v517 = vpack.c.b16 %v515, %v514
    %520 = vmatprep.subr.bf16.mxu0 0
    %521 = vmatpush1.bf16.msra.mxu0 %v516
    %522 = vmatprep.subr.bf16.mxu0 0
    %523 = vmatpush1.bf16.msra.mxu0 %v517
    %524 = vmatprep.subr.bf16.mxu0 0
    %525 = vmatpush1.bf16.msra.mxu0 0
    %526 = vmatprep.subr.bf16.mxu0 0
    %527 = vmatpush1.bf16.msra.mxu0 0
    %528 = vmatprep.subr.bf16.mxu0 0
    %529 = vmatpush1.bf16.msra.mxu0 0
    %530 = vmatprep.subr.bf16.mxu0 0
    %531 = vmatpush1.bf16.msra.mxu0 0
    %532 = vmatprep.subr.bf16.mxu0 0
    %533 = vmatpush1.bf16.msra.mxu0 0
    %534 = vmatprep.subr.bf16.mxu0 0
    %535 = vmatpush1.bf16.msra.mxu0 0
    %536 = vmatprep.subr.bf16.mxu0 0
    %537 = vmatpush1.bf16.msra.mxu0 0
    %538 = vmatprep.subr.bf16.mxu0 0
    %539 = vmatpush1.bf16.msra.mxu0 0
    %540 = vmatprep.subr.bf16.mxu0 0
    %541 = vmatpush1.bf16.msra.mxu0 0
    %542 = vmatprep.subr.bf16.mxu0 0
    %543 = vmatpush1.bf16.msra.mxu0 0
    %544 = vmatprep.subr.bf16.mxu0 0
    %545 = vmatpush1.bf16.msra.mxu0 0
    %546 = vmatprep.subr.bf16.mxu0 0
    %547 = vmatpush1.bf16.msra.mxu0 0
    %548 = vmatprep.subr.bf16.mxu0 0
    %549 = vmatpush1.bf16.msra.mxu0 0
    %550 = vmatprep.subr.bf16.mxu0 0
    %551 = vmatpush1.bf16.msra.mxu0 0
    %552 = vmatprep.mubr.bf16.mxu0 0
    %553 = vmatmul.mubr.bf16.gmra.mrb[0].mxu0 %v133
    %v554 = vpop.f32.mrb[0].mxu0
    %v555 = vadd.f32 %v506, %v554
    %v556 = vpop.f32.mrb[0].mxu0
    %v557 = vpop.f32.mrb[0].mxu0
    %v558 = vadd.f32 %v506, %v557
    %v559 = vpop.f32.mrb[0].mxu0
    %560 = vdwg.mxu0
    %s561 = scalar_lea.vmem %s5, 80
    %v562 = vld [vmem:[%s561] sm:$0xf]
    %v563 = vld [vmem:[%s561 + $0x4] sm:$0xf]
    %v564 = vld [vmem:[%s561 + $0x8] sm:$0xf]
    %v565 = vld [vmem:[%s561 + $0xc] sm:$0xf]
    %s566 = scalar_lea.vmem %s6, 5
    %v567 = vld [vmem:[%s566] sm:$0x1]
    %v569 = vlaneseq
    %v570 = vshrl.u32 %v569, 7
    %v571 = vsub.s32 0, %v570
    %v572 = vrot.slane %v567, %v571
    %v578 = vunpack.c.l.b16 %v562
    %v579 = vunpack.c.l.b16 %v563
    %v580 = vunpack.c.l.b16 %v564
    %v581 = vunpack.c.l.b16 %v565
    %v582 = vpack.c.b16 %v579, %v578
    %v583 = vpack.c.b16 %v581, %v580
    %586 = vmatprep.subr.bf16.mxu0 0
    %587 = vmatpush1.bf16.msra.mxu0 %v582
    %588 = vmatprep.subr.bf16.mxu0 0
    %589 = vmatpush1.bf16.msra.mxu0 %v583
    %590 = vmatprep.subr.bf16.mxu0 0
    %591 = vmatpush1.bf16.msra.mxu0 0
    %592 = vmatprep.subr.bf16.mxu0 0
    %593 = vmatpush1.bf16.msra.mxu0 0
    %594 = vmatprep.subr.bf16.mxu0 0
    %595 = vmatpush1.bf16.msra.mxu0 0
    %596 = vmatprep.subr.bf16.mxu0 0
    %597 = vmatpush1.bf16.msra.mxu0 0
    %598 = vmatprep.subr.bf16.mxu0 0
    %599 = vmatpush1.bf16.msra.mxu0 0
    %600 = vmatprep.subr.bf16.mxu0 0
    %601 = vmatpush1.bf16.msra.mxu0 0
    %602 = vmatprep.subr.bf16.mxu0 0
    %603 = vmatpush1.bf16.msra.mxu0 0
    %604 = vmatprep.subr.bf16.mxu0 0
    %605 = vmatpush1.bf16.msra.mxu0 0
    %606 = vmatprep.subr.bf16.mxu0 0
    %607 = vmatpush1.bf16.msra.mxu0 0
    %608 = vmatprep.subr.bf16.mxu0 0
    %609 = vmatpush1.bf16.msra.mxu0 0
    %610 = vmatprep.subr.bf16.mxu0 0
    %611 = vmatpush1.bf16.msra.mxu0 0
    %612 = vmatprep.subr.bf16.mxu0 0
    %613 = vmatpush1.bf16.msra.mxu0 0
    %614 = vmatprep.subr.bf16.mxu0 0
    %615 = vmatpush1.bf16.msra.mxu0 0
    %616 = vmatprep.subr.bf16.mxu0 0
    %617 = vmatpush1.bf16.msra.mxu0 0
    %618 = vmatprep.mubr.bf16.mxu0 0
    %619 = vmatmul.mubr.bf16.gmra.mrb[0].mxu0 %v133
    %v620 = vpop.f32.mrb[0].mxu0
    %v621 = vadd.f32 %v572, %v620
    %v622 = vpop.f32.mrb[0].mxu0
    %v623 = vpop.f32.mrb[0].mxu0
    %v624 = vadd.f32 %v572, %v623
    %v625 = vpop.f32.mrb[0].mxu0
    %626 = vdwg.mxu0
    %v627 = vpack.c.bf16 %v492, %v489
    %v628 = vpack.c.bf16 %v558, %v555
    %v630 = vsel %vm310, %v627, 0
    %v633 = vsel %vm310, %v628, 0
    %635 = vmatprep.subr.bf16.mxu0 0
    %636 = vmatpush1.bf16.xpose.msra.mxu0 %v633
    %637 = vmatprep.subr.bf16.mxu0 0
    %638 = vmatpush1.bf16.xpose.msra.mxu0 0
    %639 = vmatprep.subr.bf16.mxu0 0
    %640 = vmatpush1.bf16.xpose.msra.mxu0 0
    %641 = vmatprep.subr.bf16.mxu0 0
    %642 = vmatpush1.bf16.xpose.msra.mxu0 0
    %643 = vmatprep.subr.bf16.mxu0 0
    %644 = vmatpush1.bf16.xpose.msra.mxu0 0
    %645 = vmatprep.subr.bf16.mxu0 0
    %646 = vmatpush1.bf16.xpose.msra.mxu0 0
    %647 = vmatprep.subr.bf16.mxu0 0
    %648 = vmatpush1.bf16.xpose.msra.mxu0 0
    %649 = vmatprep.subr.bf16.mxu0 0
    %650 = vmatpush1.bf16.xpose.msra.mxu0 0
    %651 = vmatprep.subr.bf16.mxu0 0
    %652 = vmatpush1.bf16.xpose.msra.mxu0 0
    %653 = vmatprep.subr.bf16.mxu0 0
    %654 = vmatpush1.bf16.xpose.msra.mxu0 0
    %655 = vmatprep.subr.bf16.mxu0 0
    %656 = vmatpush1.bf16.xpose.msra.mxu0 0
    %657 = vmatprep.subr.bf16.mxu0 0
    %658 = vmatpush1.bf16.xpose.msra.mxu0 0
    %659 = vmatprep.subr.bf16.mxu0 0
    %660 = vmatpush1.bf16.xpose.msra.mxu0 0
    %661 = vmatprep.subr.bf16.mxu0 0
    %662 = vmatpush1.bf16.xpose.msra.mxu0 0
    %663 = vmatprep.subr.bf16.mxu0 0
    %664 = vmatpush1.bf16.xpose.msra.mxu0 0
    %665 = vmatprep.subr.bf16.mxu0 0
    %666 = vmatpush1.bf16.xpose.msra.mxu0 0
    %667 = vmatprep.mubr.bf16.mxu0 0
    %668 = vmatmul.mubr.bf16.gmra.mrb[0].mxu0 %v630
    %v669 = vpop.f32.mrb[0].mxu0
    %v670 = vadd.f32 %v106, %v669
    %v671 = vpop.f32.mrb[0].mxu0
    %v672 = vpop.f32.mrb[0].mxu0
    %v673 = vadd.f32 %v107, %v672
    %v674 = vpop.f32.mrb[0].mxu0
    %675 = vdwg.mxu0
    %v676 = vsel %vm310, %v670, -inf
    %677 = vmax.xlane.f32.xlu0 %v676
    %v678 = vpop.xlane.xlu0 %677
    %v679 = vsel %vm310, %v673, -inf
    %680 = vmax.xlane.f32.xlu0 %v679
    %v681 = vpop.xlane.xlu0 %680
    %v682 = vsub.f32 %v670, %v678
    %v683 = vsub.f32 %v673, %v681
    %v684 = vmul.f32 %v682, 1.442695
    %v685 = vpow.pop %v684
    %v686 = vmul.f32 %v683, 1.442695
    %v687 = vpow.pop %v686
    %v688 = vsel %vm310, %v685, 0.0
    %689 = vadd.xlane.f32.xlu0 %v688
    %v690 = vpop.xlane.xlu0 %689
    %v691 = vsel %vm310, %v687, 0.0
    %692 = vadd.xlane.f32.xlu0 %v691
    %v693 = vpop.xlane.xlu0 %692
    %v694 = vrcp.pop %v690
    %v695 = vrcp.pop %v693
    %v696 = vmul.f32 %v685, %v694
    %v697 = vmul.f32 %v687, %v695
    %v698 = vpack.c.bf16 %v697, %v696
    %v699 = vpack.c.bf16 %v624, %v621
    %v701 = vsel %vm310, %v698, 0
    %703 = vmatprep.subr.bf16.mxu0 0
    %704 = vmatpush1.bf16.msra.mxu0 %v699
    %705 = vmatprep.subr.bf16.mxu0 0
    %706 = vmatpush1.bf16.msra.mxu0 0
    %707 = vmatprep.subr.bf16.mxu0 0
    %708 = vmatpush1.bf16.msra.mxu0 0
    %709 = vmatprep.subr.bf16.mxu0 0
    %710 = vmatpush1.bf16.msra.mxu0 0
    %711 = vmatprep.subr.bf16.mxu0 0
    %712 = vmatpush1.bf16.msra.mxu0 0
    %713 = vmatprep.subr.bf16.mxu0 0
    %714 = vmatpush1.bf16.msra.mxu0 0
    %715 = vmatprep.subr.bf16.mxu0 0
    %716 = vmatpush1.bf16.msra.mxu0 0
    %717 = vmatprep.subr.bf16.mxu0 0
    %718 = vmatpush1.bf16.msra.mxu0 0
    %719 = vmatprep.subr.bf16.mxu0 0
    %720 = vmatpush1.bf16.msra.mxu0 0
    %721 = vmatprep.subr.bf16.mxu0 0
    %722 = vmatpush1.bf16.msra.mxu0 0
    %723 = vmatprep.subr.bf16.mxu0 0
    %724 = vmatpush1.bf16.msra.mxu0 0
    %725 = vmatprep.subr.bf16.mxu0 0
    %726 = vmatpush1.bf16.msra.mxu0 0
    %727 = vmatprep.subr.bf16.mxu0 0
    %728 = vmatpush1.bf16.msra.mxu0 0
    %729 = vmatprep.subr.bf16.mxu0 0
    %730 = vmatpush1.bf16.msra.mxu0 0
    %731 = vmatprep.subr.bf16.mxu0 0
    %732 = vmatpush1.bf16.msra.mxu0 0
    %733 = vmatprep.subr.bf16.mxu0 0
    %734 = vmatpush1.bf16.msra.mxu0 0
    %735 = vmatprep.mubr.bf16.mxu0 0
    %736 = vmatmul.mubr.bf16.gmra.mrb[0].mxu0 %v701
    %v737 = vpop.f32.mrb[0].mxu0
    %v738 = vadd.f32 0.0, %v737
    %v739 = vpop.f32.mrb[0].mxu0
    %v740 = vpop.f32.mrb[0].mxu0
    %v741 = vadd.f32 0.0, %v740
    %v742 = vpop.f32.mrb[0].mxu0
    %743 = vdwg.mxu0
    %v744 = vpack.c.bf16 %v741, %v738
    %s745 = scalar_lea.vmem %s7, 8
    %v746 = vld [vmem:[%s745] sm:$0xf]
    %v747 = vld [vmem:[%s745 + $0x4] sm:$0xf]
    %v750 = vunpack.c.l.b16 %v746
    %v751 = vunpack.c.l.b16 %v747
    %v752 = vpack.c.b16 %v751, %v750
    %v755 = vsel %vm310, %v744, 0
    %757 = vmatprep.subr.bf16.mxu0 0
    %758 = vmatpush1.bf16.msra.mxu0 %v752
    %759 = vmatprep.subr.bf16.mxu0 0
    %760 = vmatpush1.bf16.msra.mxu0 0
    %761 = vmatprep.subr.bf16.mxu0 0
    %762 = vmatpush1.bf16.msra.mxu0 0
    %763 = vmatprep.subr.bf16.mxu0 0
    %764 = vmatpush1.bf16.msra.mxu0 0
    %765 = vmatprep.subr.bf16.mxu0 0
    %766 = vmatpush1.bf16.msra.mxu0 0
    %767 = vmatprep.subr.bf16.mxu0 0
    %768 = vmatpush1.bf16.msra.mxu0 0
    %769 = vmatprep.subr.bf16.mxu0 0
    %770 = vmatpush1.bf16.msra.mxu0 0
    %771 = vmatprep.subr.bf16.mxu0 0
    %772 = vmatpush1.bf16.msra.mxu0 0
    %773 = vmatprep.subr.bf16.mxu0 0
    %774 = vmatpush1.bf16.msra.mxu0 0
    %775 = vmatprep.subr.bf16.mxu0 0
    %776 = vmatpush1.bf16.msra.mxu0 0
    %777 = vmatprep.subr.bf16.mxu0 0
    %778 = vmatpush1.bf16.msra.mxu0 0
    %779 = vmatprep.subr.bf16.mxu0 0
    %780 = vmatpush1.bf16.msra.mxu0 0
    %781 = vmatprep.subr.bf16.mxu0 0
    %782 = vmatpush1.bf16.msra.mxu0 0
    %783 = vmatprep.subr.bf16.mxu0 0
    %784 = vmatpush1.bf16.msra.mxu0 0
    %785 = vmatprep.subr.bf16.mxu0 0
    %786 = vmatpush1.bf16.msra.mxu0 0
    %787 = vmatprep.subr.bf16.mxu0 0
    %788 = vmatpush1.bf16.msra.mxu0 0
    %789 = vmatprep.mubr.bf16.mxu0 0
    %790 = vmatmul.mubr.bf16.gmra.mrb[0].mxu0 %v755
    %v791 = vpop.f32.mrb[0].mxu0
    %v792 = vadd.f32 0.0, %v791
    %v793 = vpop.f32.mrb[0].mxu0
    %v794 = vpop.f32.mrb[0].mxu0
    %v795 = vadd.f32 0.0, %v794
    %v796 = vpop.f32.mrb[0].mxu0
    %797 = vdwg.mxu0
    %v800 = vunpack.c.l.b16 %v427
    %v801 = vunpack.c.l.b16 %v428
    %v802 = vpack.c.b16 %v801, %v800
    %v805 = vsel %vm310, %v426, 0
    %807 = vmatprep.subr.bf16.mxu0 0
    %808 = vmatpush1.bf16.msra.mxu0 %v802
    %809 = vmatprep.subr.bf16.mxu0 0
    %810 = vmatpush1.bf16.msra.mxu0 0
    %811 = vmatprep.subr.bf16.mxu0 0
    %812 = vmatpush1.bf16.msra.mxu0 0
    %813 = vmatprep.subr.bf16.mxu0 0
    %814 = vmatpush1.bf16.msra.mxu0 0
    %815 = vmatprep.subr.bf16.mxu0 0
    %816 = vmatpush1.bf16.msra.mxu0 0
    %817 = vmatprep.subr.bf16.mxu0 0
    %818 = vmatpush1.bf16.msra.mxu0 0
    %819 = vmatprep.subr.bf16.mxu0 0
    %820 = vmatpush1.bf16.msra.mxu0 0
    %821 = vmatprep.subr.bf16.mxu0 0
    %822 = vmatpush1.bf16.msra.mxu0 0
    %823 = vmatprep.subr.bf16.mxu0 0
    %824 = vmatpush1.bf16.msra.mxu0 0
    %825 = vmatprep.subr.bf16.mxu0 0
    %826 = vmatpush1.bf16.msra.mxu0 0
    %827 = vmatprep.subr.bf16.mxu0 0
    %828 = vmatpush1.bf16.msra.mxu0 0
    %829 = vmatprep.subr.bf16.mxu0 0
    %830 = vmatpush1.bf16.msra.mxu0 0
    %831 = vmatprep.subr.bf16.mxu0 0
    %832 = vmatpush1.bf16.msra.mxu0 0
    %833 = vmatprep.subr.bf16.mxu0 0
    %834 = vmatpush1.bf16.msra.mxu0 0
    %835 = vmatprep.subr.bf16.mxu0 0
    %836 = vmatpush1.bf16.msra.mxu0 0
    %837 = vmatprep.subr.bf16.mxu0 0
    %838 = vmatpush1.bf16.msra.mxu0 0
    %839 = vmatprep.mubr.bf16.mxu0 0
    %840 = vmatmul.mubr.bf16.gmra.mrb[0].mxu0 %v805
    %v841 = vpop.f32.mrb[0].mxu0
    %v842 = vadd.f32 %v792, %v841
    %v843 = vpop.f32.mrb[0].mxu0
    %v844 = vpop.f32.mrb[0].mxu0
    %v845 = vadd.f32 %v795, %v844
    %v846 = vpop.f32.mrb[0].mxu0
    %847 = vdwg.mxu0
    %v848 = vld [vmem:[%s8] sm:$0x1]
    %v850 = vlaneseq
    %v851 = vshrl.u32 %v850, 7
    %v852 = vsub.s32 0, %v851
    %v853 = vrot.slane %v848, %v852
    %v855 = vadd.f32 %v842, %v853
    %v856 = vadd.f32 %v845, %v853
    %v857 = vadd.f32 %v855, %v104
    %v858 = vadd.f32 %v856, %v105
    %v859 = vld [vmem:[%s9] sm:$0x1]
    %v860 = vld [vmem:[%s10] sm:$0x1]
    %v861 = vsel %vm62, %v857, 0.0
    %862 = vadd.xlane.f32.xlu0 %v861
    %v863 = vpop.xlane.xlu0 %862
    %v864 = vsel %vm62, %v858, 0.0
    %865 = vadd.xlane.f32.xlu0 %v864
    %v866 = vpop.xlane.xlu0 %865
    %v867 = vmul.f32 %v863, %v69
    %v868 = vmul.f32 %v866, %v69
    %v869 = vsub.f32 %v857, %v867
    %v870 = vsub.f32 %v858, %v868
    %v871 = vmul.f32 %v869, %v869
    %v872 = vmul.f32 %v870, %v870
    %v873 = vsel %vm62, %v871, 0.0
    %874 = vadd.xlane.f32.xlu0 %v873
    %v875 = vpop.xlane.xlu0 %874
    %v876 = vsel %vm62, %v872, 0.0
    %877 = vadd.xlane.f32.xlu0 %v876
    %v878 = vpop.xlane.xlu0 %877
    %v879 = vmul.f32 %v875, %v69
    %v880 = vmul.f32 %v878, %v69
    %v881 = vadd.f32 %v879, 1e-12
    %v882 = vadd.f32 %v880, 1e-12
    %v883 = vrsqrt.pop %v881
    %v884 = vrsqrt.pop %v882
    %v885 = vmul.f32 %v869, %v883
    %v886 = vmul.f32 %v870, %v884
    %v888 = vlaneseq
    %v889 = vshrl.u32 %v888, 7
    %v890 = vsub.s32 0, %v889
    %v891 = vrot.slane %v859, %v890
    %v893 = vmul.f32 %v885, %v891
    %v894 = vmul.f32 %v886, %v891
    %v896 = vlaneseq
    %v897 = vshrl.u32 %v896, 7
    %v898 = vsub.s32 0, %v897
    %v899 = vrot.slane %v860, %v898
    %v901 = vadd.f32 %v893, %v899
    %v902 = vadd.f32 %v894, %v899
    %v903 = vpack.c.bf16 %v902, %v901
    %v904 = vld [vmem:[%s11] sm:$0xf]
    %v905 = vld [vmem:[%s11 + $0x4] sm:$0xf]
    %v906 = vld [vmem:[%s11 + $0x8] sm:$0xf]
    %v907 = vld [vmem:[%s11 + $0xc] sm:$0xf]
    %v908 = vld [vmem:[%s12] sm:$0x1]
    %v910 = vlaneseq
    %v911 = vshrl.u32 %v910, 7
    %v912 = vsub.s32 0, %v911
    %v913 = vrot.slane %v908, %v912
    %v919 = vunpack.c.l.b16 %v904
    %v920 = vunpack.c.l.b16 %v905
    %v921 = vunpack.c.l.b16 %v906
    %v922 = vunpack.c.l.b16 %v907
    %v923 = vpack.c.b16 %v920, %v919
    %v924 = vpack.c.b16 %v922, %v921
    %v928 = vsel %vm62, %v903, 0
    %930 = vmatprep.subr.bf16.mxu0 0
    %931 = vmatpush1.bf16.msra.mxu0 %v923
    %932 = vmatprep.subr.bf16.mxu0 0
    %933 = vmatpush1.bf16.msra.mxu0 %v924
    %934 = vmatprep.subr.bf16.mxu0 0
    %935 = vmatpush1.bf16.msra.mxu0 0
    %936 = vmatprep.subr.bf16.mxu0 0
    %937 = vmatpush1.bf16.msra.mxu0 0
    %938 = vmatprep.subr.bf16.mxu0 0
    %939 = vmatpush1.bf16.msra.mxu0 0
    %940 = vmatprep.subr.bf16.mxu0 0
    %941 = vmatpush1.bf16.msra.mxu0 0
    %942 = vmatprep.subr.bf16.mxu0 0
    %943 = vmatpush1.bf16.msra.mxu0 0
    %944 = vmatprep.subr.bf16.mxu0 0
    %945 = vmatpush1.bf16.msra.mxu0 0
    %946 = vmatprep.subr.bf16.mxu0 0
    %947 = vmatpush1.bf16.msra.mxu0 0
    %948 = vmatprep.subr.bf16.mxu0 0
    %949 = vmatpush1.bf16.msra.mxu0 0
    %950 = vmatprep.subr.bf16.mxu0 0
    %951 = vmatpush1.bf16.msra.mxu0 0
    %952 = vmatprep.subr.bf16.mxu0 0
    %953 = vmatpush1.bf16.msra.mxu0 0
    %954 = vmatprep.subr.bf16.mxu0 0
    %955 = vmatpush1.bf16.msra.mxu0 0
    %956 = vmatprep.subr.bf16.mxu0 0
    %957 = vmatpush1.bf16.msra.mxu0 0
    %958 = vmatprep.subr.bf16.mxu0 0
    %959 = vmatpush1.bf16.msra.mxu0 0
    %960 = vmatprep.subr.bf16.mxu0 0
    %961 = vmatpush1.bf16.msra.mxu0 0
    %962 = vmatprep.mubr.bf16.mxu0 0
    %963 = vmatmul.mubr.bf16.gmra.mrb[0].mxu0 %v928
    %v964 = vpop.f32.mrb[0].mxu0
    %v965 = vadd.f32 %v913, %v964
    %v966 = vpop.f32.mrb[0].mxu0
    %v967 = vpop.f32.mrb[0].mxu0
    %v968 = vadd.f32 %v913, %v967
    %v969 = vpop.f32.mrb[0].mxu0
    %970 = vdwg.mxu0
    %v971 = vmul.f32 %v965, %v965
    %v972 = vmul.f32 %v968, %v968
    %v973 = vmul.f32 %v965, %v971
    %v974 = vmul.f32 %v968, %v972
    %v975 = vmul.f32 %v973, 0.044715
    %v976 = vmul.f32 %v974, 0.044715
    %v977 = vadd.f32 %v965, %v975
    %v978 = vadd.f32 %v968, %v976
    %v979 = vmul.f32 %v977, 0.7978846
    %v980 = vmul.f32 %v978, 0.7978846
    %v981 = vtanh.pop %v979
    %v982 = vtanh.pop %v980
    %v983 = vadd.f32 %v981, 1.0
    %v984 = vadd.f32 %v982, 1.0
    %v985 = vmul.f32 %v983, 0.5
    %v986 = vmul.f32 %v984, 0.5
    %v987 = vmul.f32 %v965, %v985
    %v988 = vmul.f32 %v968, %v986
    %v989 = vpack.c.bf16 %v988, %v987
    %v990 = vld [vmem:[%s13] sm:$0xf]
    %v991 = vld [vmem:[%s13 + $0x4] sm:$0xf]
    %v992 = vld [vmem:[%s13 + $0x8] sm:$0xf]
    %v993 = vld [vmem:[%s13 + $0xc] sm:$0xf]
    %v994 = vld [vmem:[%s13 + $0x10] sm:$0xf]
    %v995 = vld [vmem:[%s13 + $0x14] sm:$0xf]
    %v996 = vld [vmem:[%s13 + $0x18] sm:$0xf]
    %v997 = vld [vmem:[%s13 + $0x1c] sm:$0xf]
    %v998 = vld [vmem:[%s14] sm:$0x1]
    %v1000 = vlaneseq
    %v1001 = vshrl.u32 %v1000, 7
    %v1002 = vsub.s32 0, %v1001
    %v1003 = vrot.slane %v998, %v1002
    %v1013 = vunpack.c.l.b16 %v990
    %v1014 = vunpack.c.l.b16 %v991
    %v1015 = vunpack.c.l.b16 %v992
    %v1016 = vunpack.c.l.b16 %v993
    %v1017 = vunpack.c.l.b16 %v994
    %v1018 = vunpack.c.l.b16 %v995
    %v1019 = vunpack.c.l.b16 %v996
    %v1020 = vunpack.c.l.b16 %v997
    %v1021 = vpack.c.b16 %v1014, %v1013
    %v1022 = vpack.c.b16 %v1016, %v1015
    %v1023 = vpack.c.b16 %v1018, %v1017
    %v1024 = vpack.c.b16 %v1020, %v1019
    %vm1029 = vcmask 523264
    %v1031 = vsel %vm1029, %v989, 0
    %1033 = vmatprep.subr.bf16.mxu0 0
    %1034 = vmatpush1.bf16.msra.mxu0 %v1021
    %1035 = vmatprep.subr.bf16.mxu0 0
    %1036 = vmatpush1.bf16.msra.mxu0 %v1022
    %1037 = vmatprep.subr.bf16.mxu0 0
    %1038 = vmatpush1.bf16.msra.mxu0 %v1023
    %1039 = vmatprep.subr.bf16.mxu0 0
    %1040 = vmatpush1.bf16.msra.mxu0 %v1024
    %1041 = vmatprep.subr.bf16.mxu0 0
    %1042 = vmatpush1.bf16.msra.mxu0 0
    %1043 = vmatprep.subr.bf16.mxu0 0
    %1044 = vmatpush1.bf16.msra.mxu0 0
    %1045 = vmatprep.subr.bf16.mxu0 0
    %1046 = vmatpush1.bf16.msra.mxu0 0
    %1047 = vmatprep.subr.bf16.mxu0 0
    %1048 = vmatpush1.bf16.msra.mxu0 0
    %1049 = vmatprep.subr.bf16.mxu0 0
    %1050 = vmatpush1.bf16.msra.mxu0 0
    %1051 = vmatprep.subr.bf16.mxu0 0
    %1052 = vmatpush1.bf16.msra.mxu0 0
    %1053 = vmatprep.subr.bf16.mxu0 0
    %1054 = vmatpush1.bf16.msra.mxu0 0
    %1055 = vmatprep.subr.bf16.mxu0 0
    %1056 = vmatpush1.bf16.msra.mxu0 0
    %1057 = vmatprep.subr.bf16.mxu0 0
    %1058 = vmatpush1.bf16.msra.mxu0 0
    %1059 = vmatprep.subr.bf16.mxu0 0
    %1060 = vmatpush1.bf16.msra.mxu0 0
    %1061 = vmatprep.subr.bf16.mxu0 0
    %1062 = vmatpush1.bf16.msra.mxu0 0
    %1063 = vmatprep.subr.bf16.mxu0 0
    %1064 = vmatpush1.bf16.msra.mxu0 0
    %1065 = vmatprep.mubr.bf16.mxu0 0
    %1066 = vmatmul.mubr.bf16.gmra.mrb[0].mxu0 %v1031
    %v1067 = vpop.f32.mrb[0].mxu0
    %v1068 = vadd.f32 %v1003, %v1067
    %v1069 = vpop.f32.mrb[0].mxu0
    %v1070 = vpop.f32.mrb[0].mxu0
    %v1071 = vadd.f32 %v1003, %v1070
    %v1072 = vpop.f32.mrb[0].mxu0
    %1073 = vdwg.mxu0
    %v1074 = vadd.f32 %v1068, %v901
    %v1075 = vadd.f32 %v1071, %v902
    %v1076 = vld [vmem:[%s15] sm:$0x1]
    %v1077 = vld [vmem:[%s16] sm:$0x1]
    %v1078 = vsel %vm62, %v1074, 0.0
    %1079 = vadd.xlane.f32.xlu0 %v1078
    %v1080 = vpop.xlane.xlu0 %1079
    %v1081 = vsel %vm62, %v1075, 0.0
    %1082 = vadd.xlane.f32.xlu0 %v1081
    %v1083 = vpop.xlane.xlu0 %1082
    %v1084 = vmul.f32 %v1080, %v69
    %v1085 = vmul.f32 %v1083, %v69
    %v1086 = vsub.f32 %v1074, %v1084
    %v1087 = vsub.f32 %v1075, %v1085
    %v1088 = vmul.f32 %v1086, %v1086
    %v1089 = vmul.f32 %v1087, %v1087
    %v1090 = vsel %vm62, %v1088, 0.0
    %1091 = vadd.xlane.f32.xlu0 %v1090
    %v1092 = vpop.xlane.xlu0 %1091
    %v1093 = vsel %vm62, %v1089, 0.0
    %1094 = vadd.xlane.f32.xlu0 %v1093
    %v1095 = vpop.xlane.xlu0 %1094
    %v1096 = vmul.f32 %v1092, %v69
    %v1097 = vmul.f32 %v1095, %v69
    %v1098 = vadd.f32 %v1096, 1e-12
    %v1099 = vadd.f32 %v1097, 1e-12
    %v1100 = vrsqrt.pop %v1098
    %v1101 = vrsqrt.pop %v1099
    %v1102 = vmul.f32 %v1086, %v1100
    %v1103 = vmul.f32 %v1087, %v1101
    %v1105 = vlaneseq
    %v1106 = vshrl.u32 %v1105, 7
    %v1107 = vsub.s32 0, %v1106
    %v1108 = vrot.slane %v1076, %v1107
    %v1110 = vmul.f32 %v1102, %v1108
    %v1111 = vmul.f32 %v1103, %v1108
    %v1113 = vlaneseq
    %v1114 = vshrl.u32 %v1113, 7
    %v1115 = vsub.s32 0, %v1114
    %v1116 = vrot.slane %v1077, %v1115
    %v1118 = vadd.f32 %v1110, %v1116
    %v1119 = vadd.f32 %v1111, %v1116
    %v1120 = vpack.c.bf16 %v1119, %v1118
    %s1121 = scalar_lea.vmem %s5, 96
    %v1122 = vld [vmem:[%s1121] sm:$0xf]
    %v1123 = vld [vmem:[%s1121 + $0x4] sm:$0xf]
    %v1124 = vld [vmem:[%s1121 + $0x8] sm:$0xf]
    %v1125 = vld [vmem:[%s1121 + $0xc] sm:$0xf]
    %s1126 = scalar_lea.vmem %s6, 6
    %v1127 = vld [vmem:[%s1126] sm:$0x1]
    %v1129 = vlaneseq
    %v1130 = vshrl.u32 %v1129, 7
    %v1131 = vsub.s32 0, %v1130
    %v1132 = vrot.slane %v1127, %v1131
    %v1138 = vunpack.c.l.b16 %v1122
    %v1139 = vunpack.c.l.b16 %v1123
    %v1140 = vunpack.c.l.b16 %v1124
    %v1141 = vunpack.c.l.b16 %v1125
    %v1142 = vpack.c.b16 %v1139, %v1138
    %v1143 = vpack.c.b16 %v1141, %v1140
    %v1147 = vsel %vm62, %v1120, 0
    %1149 = vmatprep.subr.bf16.mxu0 0
    %1150 = vmatpush1.bf16.msra.mxu0 %v1142
    %1151 = vmatprep.subr.bf16.mxu0 0
    %1152 = vmatpush1.bf16.msra.mxu0 %v1143
    %1153 = vmatprep.subr.bf16.mxu0 0
    %1154 = vmatpush1.bf16.msra.mxu0 0
    %1155 = vmatprep.subr.bf16.mxu0 0
    %1156 = vmatpush1.bf16.msra.mxu0 0
    %1157 = vmatprep.subr.bf16.mxu0 0
    %1158 = vmatpush1.bf16.msra.mxu0 0
    %1159 = vmatprep.subr.bf16.mxu0 0
    %1160 = vmatpush1.bf16.msra.mxu0 0
    %1161 = vmatprep.subr.bf16.mxu0 0
    %1162 = vmatpush1.bf16.msra.mxu0 0
    %1163 = vmatprep.subr.bf16.mxu0 0
    %1164 = vmatpush1.bf16.msra.mxu0 0
    %1165 = vmatprep.subr.bf16.mxu0 0
    %1166 = vmatpush1.bf16.msra.mxu0 0
    %1167 = vmatprep.subr.bf16.mxu0 0
    %1168 = vmatpush1.bf16.msra.mxu0 0
    %1169 = vmatprep.subr.bf16.mxu0 0
    %1170 = vmatpush1.bf16.msra.mxu0 0
    %1171 = vmatprep.subr.bf16.mxu0 0
    %1172 = vmatpush1.bf16.msra.mxu0 0
    %1173 = vmatprep.subr.bf16.mxu0 0
    %1174 = vmatpush1.bf16.msra.mxu0 0
    %1175 = vmatprep.subr.bf16.mxu0 0
    %1176 = vmatpush1.bf16.msra.mxu0 0
    %1177 = vmatprep.subr.bf16.mxu0 0
    %1178 = vmatpush1.bf16.msra.mxu0 0
    %1179 = vmatprep.subr.bf16.mxu0 0
    %1180 = vmatpush1.bf16.msra.mxu0 0
    %1181 = vmatprep.mubr.bf16.mxu0 0
    %1182 = vmatmul.mubr.bf16.gmra.mrb[0].mxu0 %v1147
    %v1183 = vpop.f32.mrb[0].mxu0
    %v1184 = vadd.f32 %v1132, %v1183
    %v1185 = vpop.f32.mrb[0].mxu0
    %v1186 = vpop.f32.mrb[0].mxu0
    %v1187 = vadd.f32 %v1132, %v1186
    %v1188 = vpop.f32.mrb[0].mxu0
    %1189 = vdwg.mxu0
    %s1190 = scalar_lea.vmem %s5, 128
    %v1191 = vld [vmem:[%s1190] sm:$0xf]
    %v1192 = vld [vmem:[%s1190 + $0x4] sm:$0xf]
    %v1193 = vld [vmem:[%s1190 + $0x8] sm:$0xf]
    %v1194 = vld [vmem:[%s1190 + $0xc] sm:$0xf]
    %s1195 = scalar_lea.vmem %s6, 8
    %v1196 = vld [vmem:[%s1195] sm:$0x1]
    %v1198 = vlaneseq
    %v1199 = vshrl.u32 %v1198, 7
    %v1200 = vsub.s32 0, %v1199
    %v1201 = vrot.slane %v1196, %v1200
    %v1207 = vunpack.c.l.b16 %v1191
    %v1208 = vunpack.c.l.b16 %v1192
    %v1209 = vunpack.c.l.b16 %v1193
    %v1210 = vunpack.c.l.b16 %v1194
    %v1211 = vpack.c.b16 %v1208, %v1207
    %v1212 = vpack.c.b16 %v1210, %v1209
    %1215 = vmatprep.subr.bf16.mxu0 0
    %1216 = vmatpush1.bf16.msra.mxu0 %v1211
    %1217 = vmatprep.subr.bf16.mxu0 0
    %1218 = vmatpush1.bf16.msra.mxu0 %v1212
    %1219 = vmatprep.subr.bf16.mxu0 0
    %1220 = vmatpush1.bf16.msra.mxu0 0
    %1221 = vmatprep.subr.bf16.mxu0 0
    %1222 = vmatpush1.bf16.msra.mxu0 0
    %1223 = vmatprep.subr.bf16.mxu0 0
    %1224 = vmatpush1.bf16.msra.mxu0 0
    %1225 = vmatprep.subr.bf16.mxu0 0
    %1226 = vmatpush1.bf16.msra.mxu0 0
    %1227 = vmatprep.subr.bf16.mxu0 0
    %1228 = vmatpush1.bf16.msra.mxu0 0
    %1229 = vmatprep.subr.bf16.mxu0 0
    %1230 = vmatpush1.bf16.msra.mxu0 0
    %1231 = vmatprep.subr.bf16.mxu0 0
    %1232 = vmatpush1.bf16.msra.mxu0 0
    %1233 = vmatprep.subr.bf16.mxu0 0
    %1234 = vmatpush1.bf16.msra.mxu0 0
    %1235 = vmatprep.subr.bf16.mxu0 0
    %1236 = vmatpush1.bf16.msra.mxu0 0
    %1237 = vmatprep.subr.bf16.mxu0 0
    %1238 = vmatpush1.bf16.msra.mxu0 0
    %1239 = vmatprep.subr.bf16.mxu0 0
    %1240 = vmatpush1.bf16.msra.mxu0 0
    %1241 = vmatprep.subr.bf16.mxu0 0
    %1242 = vmatpush1.bf16.msra.mxu0 0
    %1243 = vmatprep.subr.bf16.mxu0 0
    %1244 = vmatpush1.bf16.msra.mxu0 0
    %1245 = vmatprep.subr.bf16.mxu0 0
    %1246 = vmatpush1.bf16.msra.mxu0 0
    %1247 = vmatprep.mubr.bf16.mxu0 0
    %1248 = vmatmul.mubr.bf16.gmra.mrb[0].mxu0 %v1147
    %v1249 = vpop.f32.mrb[0].mxu0
    %v1250 = vadd.f32 %v1201, %v1249
    %v1251 = vpop.f32.mrb[0].mxu0
    %v1252 = vpop.f32.mrb[0].mxu0
    %v1253 = vadd.f32 %v1201, %v1252
    %v1254 = vpop.f32.mrb[0].mxu0
    %1255 = vdwg.mxu0
    %s1256 = scalar_lea.vmem %s5, 160
    %v1257 = vld [vmem:[%s1256] sm:$0xf]
    %v1258 = vld [vmem:[%s1256 + $0x4] sm:$0xf]
    %v1259 = vld [vmem:[%s1256 + $0x8] sm:$0xf]
    %v1260 = vld [vmem:[%s1256 + $0xc] sm:$0xf]
    %s1261 = scalar_lea.vmem %s6, 10
    %v1262 = vld [vmem:[%s1261] sm:$0x1]
    %v1264 = vlaneseq
    %v1265 = vshrl.u32 %v1264, 7
    %v1266 = vsub.s32 0, %v1265
    %v1267 = vrot.slane %v1262, %v1266
    %v1273 = vunpack.c.l.b16 %v1257
    %v1274 = vunpack.c.l.b16 %v1258
    %v1275 = vunpack.c.l.b16 %v1259
    %v1276 = vunpack.c.l.b16 %v1260
    %v1277 = vpack.c.b16 %v1274, %v1273
    %v1278 = vpack.c.b16 %v1276, %v1275
    %1281 = vmatprep.subr.bf16.mxu0 0
    %1282 = vmatpush1.bf16.msra.mxu0 %v1277
    %1283 = vmatprep.subr.bf16.mxu0 0
    %1284 = vmatpush1.bf16.msra.mxu0 %v1278
    %1285 = vmatprep.subr.bf16.mxu0 0
    %1286 = vmatpush1.bf16.msra.mxu0 0
    %1287 = vmatprep.subr.bf16.mxu0 0
    %1288 = vmatpush1.bf16.msra.mxu0 0
    %1289 = vmatprep.subr.bf16.mxu0 0
    %1290 = vmatpush1.bf16.msra.mxu0 0
    %1291 = vmatprep.subr.bf16.mxu0 0
    %1292 = vmatpush1.bf16.msra.mxu0 0
    %1293 = vmatprep.subr.bf16.mxu0 0
    %1294 = vmatpush1.bf16.msra.mxu0 0
    %1295 = vmatprep.subr.bf16.mxu0 0
    %1296 = vmatpush1.bf16.msra.mxu0 0
    %1297 = vmatprep.subr.bf16.mxu0 0
    %1298 = vmatpush1.bf16.msra.mxu0 0
    %1299 = vmatprep.subr.bf16.mxu0 0
    %1300 = vmatpush1.bf16.msra.mxu0 0
    %1301 = vmatprep.subr.bf16.mxu0 0
    %1302 = vmatpush1.bf16.msra.mxu0 0
    %1303 = vmatprep.subr.bf16.mxu0 0
    %1304 = vmatpush1.bf16.msra.mxu0 0
    %1305 = vmatprep.subr.bf16.mxu0 0
    %1306 = vmatpush1.bf16.msra.mxu0 0
    %1307 = vmatprep.subr.bf16.mxu0 0
    %1308 = vmatpush1.bf16.msra.mxu0 0
    %1309 = vmatprep.subr.bf16.mxu0 0
    %1310 = vmatpush1.bf16.msra.mxu0 0
    %1311 = vmatprep.subr.bf16.mxu0 0
    %1312 = vmatpush1.bf16.msra.mxu0 0
    %1313 = vmatprep.mubr.bf16.mxu0 0
    %1314 = vmatmul.mubr.bf16.gmra.mrb[0].mxu0 %v1147
    %v1315 = vpop.f32.mrb[0].mxu0
    %v1316 = vadd.f32 %v1267, %v1315
    %v1317 = vpop.f32.mrb[0].mxu0
    %v1318 = vpop.f32.mrb[0].mxu0
    %v1319 = vadd.f32 %v1267, %v1318
    %v1320 = vpop.f32.mrb[0].mxu0
    %1321 = vdwg.mxu0
    %v1322 = vpack.c.bf16 %v1187, %v1184
    %v1323 = vpack.c.bf16 %v1253, %v1250
    %v1325 = vsel %vm310, %v1322, 0
    %v1328 = vsel %vm310, %v1323, 0
    %1330 = vmatprep.subr.bf16.mxu0 0
    %1331 = vmatpush1.bf16.xpose.msra.mxu0 %v1328
    %1332 = vmatprep.subr.bf16.mxu0 0
    %1333 = vmatpush1.bf16.xpose.msra.mxu0 0
    %1334 = vmatprep.subr.bf16.mxu0 0
    %1335 = vmatpush1.bf16.xpose.msra.mxu0 0
    %1336 = vmatprep.subr.bf16.mxu0 0
    %1337 = vmatpush1.bf16.xpose.msra.mxu0 0
    %1338 = vmatprep.subr.bf16.mxu0 0
    %1339 = vmatpush1.bf16.xpose.msra.mxu0 0
    %1340 = vmatprep.subr.bf16.mxu0 0
    %1341 = vmatpush1.bf16.xpose.msra.mxu0 0
    %1342 = vmatprep.subr.bf16.mxu0 0
    %1343 = vmatpush1.bf16.xpose.msra.mxu0 0
    %1344 = vmatprep.subr.bf16.mxu0 0
    %1345 = vmatpush1.bf16.xpose.msra.mxu0 0
    %1346 = vmatprep.subr.bf16.mxu0 0
    %1347 = vmatpush1.bf16.xpose.msra.mxu0 0
    %1348 = vmatprep.subr.bf16.mxu0 0
    %1349 = vmatpush1.bf16.xpose.msra.mxu0 0
    %1350 = vmatprep.subr.bf16.mxu0 0
    %1351 = vmatpush1.bf16.xpose.msra.mxu0 0
    %1352 = vmatprep.subr.bf16.mxu0 0
    %1353 = vmatpush1.bf16.xpose.msra.mxu0 0
    %1354 = vmatprep.subr.bf16.mxu0 0
    %1355 = vmatpush1.bf16.xpose.msra.mxu0 0
    %1356 = vmatprep.subr.bf16.mxu0 0
    %1357 = vmatpush1.bf16.xpose.msra.mxu0 0
    %1358 = vmatprep.subr.bf16.mxu0 0
    %1359 = vmatpush1.bf16.xpose.msra.mxu0 0
    %1360 = vmatprep.subr.bf16.mxu0 0
    %1361 = vmatpush1.bf16.xpose.msra.mxu0 0
    %1362 = vmatprep.mubr.bf16.mxu0 0
    %1363 = vmatmul.mubr.bf16.gmra.mrb[0].mxu0 %v1325
    %v1364 = vpop.f32.mrb[0].mxu0
    %v1365 = vadd.f32 %v106, %v1364
    %v1366 = vpop.f32.mrb[0].mxu0
    %v1367 = vpop.f32.mrb[0].mxu0
    %v1368 = vadd.f32 %v107, %v1367
    %v1369 = vpop.f32.mrb[0].mxu0
    %1370 = vdwg.mxu0
    %v1371 = vsel %vm310, %v1365, -inf
    %1372 = vmax.xlane.f32.xlu0 %v1371
    %v1373 = vpop.xlane.xlu0 %1372
    %v1374 = vsel %vm310, %v1368, -inf
    %1375 = vmax.xlane.f32.xlu0 %v1374
    %v1376 = vpop.xlane.xlu0 %1375
    %v1377 = vsub.f32 %v1365, %v1373
    %v1378 = vsub.f32 %v1368, %v1376
    %v1379 = vmul.f32 %v1377, 1.442695
    %v1380 = vpow.pop %v1379
    %v1381 = vmul.f32 %v1378, 1.442695
    %v1382 = vpow.pop %v1381
    %v1383 = vsel %vm310, %v1380, 0.0
    %1384 = vadd.xlane.f32.xlu0 %v1383
    %v1385 = vpop.xlane.xlu0 %1384
    %v1386 = vsel %vm310, %v1382, 0.0
    %1387 = vadd.xlane.f32.xlu0 %v1386
    %v1388 = vpop.xlane.xlu0 %1387
    %v1389 = vrcp.pop %v1385
    %v1390 = vrcp.pop %v1388
    %v1391 = vmul.f32 %v1380, %v1389
    %v1392 = vmul.f32 %v1382, %v1390
    %v1393 = vpack.c.bf16 %v1392, %v1391
    %v1394 = vpack.c.bf16 %v1319, %v1316
    %v1396 = vsel %vm310, %v1393, 0
    %1398 = vmatprep.subr.bf16.mxu0 0
    %1399 = vmatpush1.bf16.msra.mxu0 %v1394
    %1400 = vmatprep.subr.bf16.mxu0 0
    %1401 = vmatpush1.bf16.msra.mxu0 0
    %1402 = vmatprep.subr.bf16.mxu0 0
    %1403 = vmatpush1.bf16.msra.mxu0 0
    %1404 = vmatprep.subr.bf16.mxu0 0
    %1405 = vmatpush1.bf16.msra.mxu0 0
    %1406 = vmatprep.subr.bf16.mxu0 0
    %1407 = vmatpush1.bf16.msra.mxu0 0
    %1408 = vmatprep.subr.bf16.mxu0 0
    %1409 = vmatpush1.bf16.msra.mxu0 0
    %1410 = vmatprep.subr.bf16.mxu0 0
    %1411 = vmatpush1.bf16.msra.mxu0 0
    %1412 = vmatprep.subr.bf16.mxu0 0
    %1413 = vmatpush1.bf16.msra.mxu0 0
    %1414 = vmatprep.subr.bf16.mxu0 0
    %1415 = vmatpush1.bf16.msra.mxu0 0
    %1416 = vmatprep.subr.bf16.mxu0 0
    %1417 = vmatpush1.bf16.msra.mxu0 0
    %1418 = vmatprep.subr.bf16.mxu0 0
    %1419 = vmatpush1.bf16.msra.mxu0 0
    %1420 = vmatprep.subr.bf16.mxu0 0
    %1421 = vmatpush1.bf16.msra.mxu0 0
    %1422 = vmatprep.subr.bf16.mxu0 0
    %1423 = vmatpush1.bf16.msra.mxu0 0
    %1424 = vmatprep.subr.bf16.mxu0 0
    %1425 = vmatpush1.bf16.msra.mxu0 0
    %1426 = vmatprep.subr.bf16.mxu0 0
    %1427 = vmatpush1.bf16.msra.mxu0 0
    %1428 = vmatprep.subr.bf16.mxu0 0
    %1429 = vmatpush1.bf16.msra.mxu0 0
    %1430 = vmatprep.mubr.bf16.mxu0 0
    %1431 = vmatmul.mubr.bf16.gmra.mrb[0].mxu0 %v1396
    %v1432 = vpop.f32.mrb[0].mxu0
    %v1433 = vadd.f32 0.0, %v1432
    %v1434 = vpop.f32.mrb[0].mxu0
    %v1435 = vpop.f32.mrb[0].mxu0
    %v1436 = vadd.f32 0.0, %v1435
    %v1437 = vpop.f32.mrb[0].mxu0
    %1438 = vdwg.mxu0
    %v1439 = vpack.c.bf16 %v1436, %v1433
    %s1440 = scalar_lea.vmem %s7, 16
    %v1441 = vld [vmem:[%s1440] sm:$0xf]
    %v1442 = vld [vmem:[%s1440 + $0x4] sm:$0xf]
    %s1443 = scalar_lea.vmem %s5, 112
    %v1444 = vld [vmem:[%s1443] sm:$0xf]
    %v1445 = vld [vmem:[%s1443 + $0x4] sm:$0xf]
    %v1446 = vld [vmem:[%s1443 + $0x8] sm:$0xf]
    %v1447 = vld [vmem:[%s1443 + $0xc] sm:$0xf]
    %s1448 = scalar_lea.vmem %s6, 7
    %v1449 = vld [vmem:[%s1448] sm:$0x1]
    %v1451 = vlaneseq
    %v1452 = vshrl.u32 %v1451, 7
    %v1453 = vsub.s32 0, %v1452
    %v1454 = vrot.slane %v1449, %v1453
    %v1460 = vunpack.c.l.b16 %v1444
    %v1461 = vunpack.c.l.b16 %v1445
    %v1462 = vunpack.c.l.b16 %v1446
    %v1463 = vunpack.c.l.b16 %v1447
    %v1464 = vpack.c.b16 %v1461, %v1460
    %v1465 = vpack.c.b16 %v1463, %v1462
    %1468 = vmatprep.subr.bf16.mxu0 0
    %1469 = vmatpush1.bf16.msra.mxu0 %v1464
    %1470 = vmatprep.subr.bf16.mxu0 0
    %1471 = vmatpush1.bf16.msra.mxu0 %v1465
    %1472 = vmatprep.subr.bf16.mxu0 0
    %1473 = vmatpush1.bf16.msra.mxu0 0
    %1474 = vmatprep.subr.bf16.mxu0 0
    %1475 = vmatpush1.bf16.msra.mxu0 0
    %1476 = vmatprep.subr.bf16.mxu0 0
    %1477 = vmatpush1.bf16.msra.mxu0 0
    %1478 = vmatprep.subr.bf16.mxu0 0
    %1479 = vmatpush1.bf16.msra.mxu0 0
    %1480 = vmatprep.subr.bf16.mxu0 0
    %1481 = vmatpush1.bf16.msra.mxu0 0
    %1482 = vmatprep.subr.bf16.mxu0 0
    %1483 = vmatpush1.bf16.msra.mxu0 0
    %1484 = vmatprep.subr.bf16.mxu0 0
    %1485 = vmatpush1.bf16.msra.mxu0 0
    %1486 = vmatprep.subr.bf16.mxu0 0
    %1487 = vmatpush1.bf16.msra.mxu0 0
    %1488 = vmatprep.subr.bf16.mxu0 0
    %1489 = vmatpush1.bf16.msra.mxu0 0
    %1490 = vmatprep.subr.bf16.mxu0 0
    %1491 = vmatpush1.bf16.msra.mxu0 0
    %1492 = vmatprep.subr.bf16.mxu0 0
    %1493 = vmatpush1.bf16.msra.mxu0 0
    %1494 = vmatprep.subr.bf16.mxu0 0
    %1495 = vmatpush1.bf16.msra.mxu0 0
    %1496 = vmatprep.subr.bf16.mxu0 0
    %1497 = vmatpush1.bf16.msra.mxu0 0
    %1498 = vmatprep.subr.bf16.mxu0 0
    %1499 = vmatpush1.bf16.msra.mxu0 0
    %1500 = vmatprep.mubr.bf16.mxu0 0
    %1501 = vmatmul.mubr.bf16.gmra.mrb[0].mxu0 %v1147
    %v1502 = vpop.f32.mrb[0].mxu0
    %v1503 = vadd.f32 %v1454, %v1502
    %v1504 = vpop.f32.mrb[0].mxu0
    %v1505 = vpop.f32.mrb[0].mxu0
    %v1506 = vadd.f32 %v1454, %v1505
    %v1507 = vpop.f32.mrb[0].mxu0
    %1508 = vdwg.mxu0
    %s1509 = scalar_lea.vmem %s5, 144
    %v1510 = vld [vmem:[%s1509] sm:$0xf]
    %v1511 = vld [vmem:[%s1509 + $0x4] sm:$0xf]
    %v1512 = vld [vmem:[%s1509 + $0x8] sm:$0xf]
    %v1513 = vld [vmem:[%s1509 + $0xc] sm:$0xf]
    %s1514 = scalar_lea.vmem %s6, 9
    %v1515 = vld [vmem:[%s1514] sm:$0x1]
    %v1517 = vlaneseq
    %v1518 = vshrl.u32 %v1517, 7
    %v1519 = vsub.s32 0, %v1518
    %v1520 = vrot.slane %v1515, %v1519
    %v1526 = vunpack.c.l.b16 %v1510
    %v1527 = vunpack.c.l.b16 %v1511
    %v1528 = vunpack.c.l.b16 %v1512
    %v1529 = vunpack.c.l.b16 %v1513
    %v1530 = vpack.c.b16 %v1527, %v1526
    %v1531 = vpack.c.b16 %v1529, %v1528
    %1534 = vmatprep.subr.bf16.mxu0 0
    %1535 = vmatpush1.bf16.msra.mxu0 %v1530
    %1536 = vmatprep.subr.bf16.mxu0 0
    %1537 = vmatpush1.bf16.msra.mxu0 %v1531
    %1538 = vmatprep.subr.bf16.mxu0 0
    %1539 = vmatpush1.bf16.msra.mxu0 0
    %1540 = vmatprep.subr.bf16.mxu0 0
    %1541 = vmatpush1.bf16.msra.mxu0 0
    %1542 = vmatprep.subr.bf16.mxu0 0
    %1543 = vmatpush1.bf16.msra.mxu0 0
    %1544 = vmatprep.subr.bf16.mxu0 0
    %1545 = vmatpush1.bf16.msra.mxu0 0
    %1546 = vmatprep.subr.bf16.mxu0 0
    %1547 = vmatpush1.bf16.msra.mxu0 0
    %1548 = vmatprep.subr.bf16.mxu0 0
    %1549 = vmatpush1.bf16.msra.mxu0 0
    %1550 = vmatprep.subr.bf16.mxu0 0
    %1551 = vmatpush1.bf16.msra.mxu0 0
    %1552 = vmatprep.subr.bf16.mxu0 0
    %1553 = vmatpush1.bf16.msra.mxu0 0
    %1554 = vmatprep.subr.bf16.mxu0 0
    %1555 = vmatpush1.bf16.msra.mxu0 0
    %1556 = vmatprep.subr.bf16.mxu0 0
    %1557 = vmatpush1.bf16.msra.mxu0 0
    %1558 = vmatprep.subr.bf16.mxu0 0
    %1559 = vmatpush1.bf16.msra.mxu0 0
    %1560 = vmatprep.subr.bf16.mxu0 0
    %1561 = vmatpush1.bf16.msra.mxu0 0
    %1562 = vmatprep.subr.bf16.mxu0 0
    %1563 = vmatpush1.bf16.msra.mxu0 0
    %1564 = vmatprep.subr.bf16.mxu0 0
    %1565 = vmatpush1.bf16.msra.mxu0 0
    %1566 = vmatprep.mubr.bf16.mxu0 0
    %1567 = vmatmul.mubr.bf16.gmra.mrb[0].mxu0 %v1147
    %v1568 = vpop.f32.mrb[0].mxu0
    %v1569 = vadd.f32 %v1520, %v1568
    %v1570 = vpop.f32.mrb[0].mxu0
    %v1571 = vpop.f32.mrb[0].mxu0
    %v1572 = vadd.f32 %v1520, %v1571
    %v1573 = vpop.f32.mrb[0].mxu0
    %1574 = vdwg.mxu0
    %s1575 = scalar_lea.vmem %s5, 176
    %v1576 = vld [vmem:[%s1575] sm:$0xf]
    %v1577 = vld [vmem:[%s1575 + $0x4] sm:$0xf]
    %v1578 = vld [vmem:[%s1575 + $0x8] sm:$0xf]
    %v1579 = vld [vmem:[%s1575 + $0xc] sm:$0xf]
    %s1580 = scalar_lea.vmem %s6, 11
    %v1581 = vld [vmem:[%s1580] sm:$0x1]
    %v1583 = vlaneseq
    %v1584 = vshrl.u32 %v1583, 7
    %v1585 = vsub.s32 0, %v1584
    %v1586 = vrot.slane %v1581, %v1585
    %v1592 = vunpack.c.l.b16 %v1576
    %v1593 = vunpack.c.l.b16 %v1577
    %v1594 = vunpack.c.l.b16 %v1578
    %v1595 = vunpack.c.l.b16 %v1579
    %v1596 = vpack.c.b16 %v1593, %v1592
    %v1597 = vpack.c.b16 %v1595, %v1594
    %1600 = vmatprep.subr.bf16.mxu0 0
    %1601 = vmatpush1.bf16.msra.mxu0 %v1596
    %1602 = vmatprep.subr.bf16.mxu0 0
    %1603 = vmatpush1.bf16.msra.mxu0 %v1597
    %1604 = vmatprep.subr.bf16.mxu0 0
    %1605 = vmatpush1.bf16.msra.mxu0 0
    %1606 = vmatprep.subr.bf16.mxu0 0
    %1607 = vmatpush1.bf16.msra.mxu0 0
    %1608 = vmatprep.subr.bf16.mxu0 0
    %1609 = vmatpush1.bf16.msra.mxu0 0
    %1610 = vmatprep.subr.bf16.mxu0 0
    %1611 = vmatpush1.bf16.msra.mxu0 0
    %1612 = vmatprep.subr.bf16.mxu0 0
    %1613 = vmatpush1.bf16.msra.mxu0 0
    %1614 = vmatprep.subr.bf16.mxu0 0
    %1615 = vmatpush1.bf16.msra.mxu0 0
    %1616 = vmatprep.subr.bf16.mxu0 0
    %1617 = vmatpush1.bf16.msra.mxu0 0
    %1618 = vmatprep.subr.bf16.mxu0 0
    %1619 = vmatpush1.bf16.msra.mxu0 0
    %1620 = vmatprep.subr.bf16.mxu0 0
    %1621 = vmatpush1.bf16.msra.mxu0 0
    %1622 = vmatprep.subr.bf16.mxu0 0
    %1623 = vmatpush1.bf16.msra.mxu0 0
    %1624 = vmatprep.subr.bf16.mxu0 0
    %1625 = vmatpush1.bf16.msra.mxu0 0
    %1626 = vmatprep.subr.bf16.mxu0 0
    %1627 = vmatpush1.bf16.msra.mxu0 0
    %1628 = vmatprep.subr.bf16.mxu0 0
    %1629 = vmatpush1.bf16.msra.mxu0 0
    %1630 = vmatprep.subr.bf16.mxu0 0
    %1631 = vmatpush1.bf16.msra.mxu0 0
    %1632 = vmatprep.mubr.bf16.mxu0 0
    %1633 = vmatmul.mubr.bf16.gmra.mrb[0].mxu0 %v1147
    %v1634 = vpop.f32.mrb[0].mxu0
    %v1635 = vadd.f32 %v1586, %v1634
    %v1636 = vpop.f32.mrb[0].mxu0
    %v1637 = vpop.f32.mrb[0].mxu0
    %v1638 = vadd.f32 %v1586, %v1637
    %v1639 = vpop.f32.mrb[0].mxu0
    %1640 = vdwg.mxu0
    %v1641 = vpack.c.bf16 %v1506, %v1503
    %v1642 = vpack.c.bf16 %v1572, %v1569
    %v1644 = vsel %vm310, %v1641, 0
    %v1647 = vsel %vm310, %v1642, 0
    %1649 = vmatprep.subr.bf16.mxu0 0
    %1650 = vmatpush1.bf16.xpose.msra.mxu0 %v1647
    %1651 = vmatprep.subr.bf16.mxu0 0
    %1652 = vmatpush1.bf16.xpose.msra.mxu0 0
    %1653 = vmatprep.subr.bf16.mxu0 0
    %1654 = vmatpush1.bf16.xpose.msra.mxu0 0
    %1655 = vmatprep.subr.bf16.mxu0 0
    %1656 = vmatpush1.bf16.xpose.msra.mxu0 0
    %1657 = vmatprep.subr.bf16.mxu0 0
    %1658 = vmatpush1.bf16.xpose.msra.mxu0 0
    %1659 = vmatprep.subr.bf16.mxu0 0
    %1660 = vmatpush1.bf16.xpose.msra.mxu0 0
    %1661 = vmatprep.subr.bf16.mxu0 0
    %1662 = vmatpush1.bf16.xpose.msra.mxu0 0
    %1663 = vmatprep.subr.bf16.mxu0 0
    %1664 = vmatpush1.bf16.xpose.msra.mxu0 0
    %1665 = vmatprep.subr.bf16.mxu0 0
    %1666 = vmatpush1.bf16.xpose.msra.mxu0 0
    %1667 = vmatprep.subr.bf16.mxu0 0
    %1668 = vmatpush1.bf16.xpose.msra.mxu0 0
    %1669 = vmatprep.subr.bf16.mxu0 0
    %1670 = vmatpush1.bf16.xpose.msra.mxu0 0
    %1671 = vmatprep.subr.bf16.mxu0 0
    %1672 = vmatpush1.bf16.xpose.msra.mxu0 0
    %1673 = vmatprep.subr.bf16.mxu0 0
    %1674 = vmatpush1.bf16.xpose.msra.mxu0 0
    %1675 = vmatprep.subr.bf16.mxu0 0
    %1676 = vmatpush1.bf16.xpose.msra.mxu0 0
    %1677 = vmatprep.subr.bf16.mxu0 0
    %1678 = vmatpush1.bf16.xpose.msra.mxu0 0
    %1679 = vmatprep.subr.bf16.mxu0 0
    %1680 = vmatpush1.bf16.xpose.msra.mxu0 0
    %1681 = vmatprep.mubr.bf16.mxu0 0
    %1682 = vmatmul.mubr.bf16.gmra.mrb[0].mxu0 %v1644
    %v1683 = vpop.f32.mrb[0].mxu0
    %v1684 = vadd.f32 %v106, %v1683
    %v1685 = vpop.f32.mrb[0].mxu0
    %v1686 = vpop.f32.mrb[0].mxu0
    %v1687 = vadd.f32 %v107, %v1686
    %v1688 = vpop.f32.mrb[0].mxu0
    %1689 = vdwg.mxu0
    %v1690 = vsel %vm310, %v1684, -inf
    %1691 = vmax.xlane.f32.xlu0 %v1690
    %v1692 = vpop.xlane.xlu0 %1691
    %v1693 = vsel %vm310, %v1687, -inf
    %1694 = vmax.xlane.f32.xlu0 %v1693
    %v1695 = vpop.xlane.xlu0 %1694
    %v1696 = vsub.f32 %v1684, %v1692
    %v1697 = vsub.f32 %v1687, %v1695
    %v1698 = vmul.f32 %v1696, 1.442695
    %v1699 = vpow.pop %v1698
    %v1700 = vmul.f32 %v1697, 1.442695
    %v1701 = vpow.pop %v1700
    %v1702 = vsel %vm310, %v1699, 0.0
    %1703 = vadd.xlane.f32.xlu0 %v1702
    %v1704 = vpop.xlane.xlu0 %1703
    %v1705 = vsel %vm310, %v1701, 0.0
    %1706 = vadd.xlane.f32.xlu0 %v1705
    %v1707 = vpop.xlane.xlu0 %1706
    %v1708 = vrcp.pop %v1704
    %v1709 = vrcp.pop %v1707
    %v1710 = vmul.f32 %v1699, %v1708
    %v1711 = vmul.f32 %v1701, %v1709
    %v1712 = vpack.c.bf16 %v1711, %v1710
    %v1713 = vpack.c.bf16 %v1638, %v1635
    %v1715 = vsel %vm310, %v1712, 0
    %1717 = vmatprep.subr.bf16.mxu0 0
    %1718 = vmatpush1.bf16.msra.mxu0 %v1713
    %1719 = vmatprep.subr.bf16.mxu0 0
    %1720 = vmatpush1.bf16.msra.mxu0 0
    %1721 = vmatprep.subr.bf16.mxu0 0
    %1722 = vmatpush1.bf16.msra.mxu0 0
    %1723 = vmatprep.subr.bf16.mxu0 0
    %1724 = vmatpush1.bf16.msra.mxu0 0
    %1725 = vmatprep.subr.bf16.mxu0 0
    %1726 = vmatpush1.bf16.msra.mxu0 0
    %1727 = vmatprep.subr.bf16.mxu0 0
    %1728 = vmatpush1.bf16.msra.mxu0 0
    %1729 = vmatprep.subr.bf16.mxu0 0
    %1730 = vmatpush1.bf16.msra.mxu0 0
    %1731 = vmatprep.subr.bf16.mxu0 0
    %1732 = vmatpush1.bf16.msra.mxu0 0
    %1733 = vmatprep.subr.bf16.mxu0 0
    %1734 = vmatpush1.bf16.msra.mxu0 0
    %1735 = vmatprep.subr.bf16.mxu0 0
    %1736 = vmatpush1.bf16.msra.mxu0 0
    %1737 = vmatprep.subr.bf16.mxu0 0
    %1738 = vmatpush1.bf16.msra.mxu0 0
    %1739 = vmatprep.subr.bf16.mxu0 0
    %1740 = vmatpush1.bf16.msra.mxu0 0
    %1741 = vmatprep.subr.bf16.mxu0 0
    %1742 = vmatpush1.bf16.msra.mxu0 0
    %1743 = vmatprep.subr.bf16.mxu0 0
    %1744 = vmatpush1.bf16.msra.mxu0 0
    %1745 = vmatprep.subr.bf16.mxu0 0
    %1746 = vmatpush1.bf16.msra.mxu0 0
    %1747 = vmatprep.subr.bf16.mxu0 0
    %1748 = vmatpush1.bf16.msra.mxu0 0
    %1749 = vmatprep.mubr.bf16.mxu0 0
    %1750 = vmatmul.mubr.bf16.gmra.mrb[0].mxu0 %v1715
    %v1751 = vpop.f32.mrb[0].mxu0
    %v1752 = vadd.f32 0.0, %v1751
    %v1753 = vpop.f32.mrb[0].mxu0
    %v1754 = vpop.f32.mrb[0].mxu0
    %v1755 = vadd.f32 0.0, %v1754
    %v1756 = vpop.f32.mrb[0].mxu0
    %1757 = vdwg.mxu0
    %v1758 = vpack.c.bf16 %v1755, %v1752
    %s1759 = scalar_lea.vmem %s7, 24
    %v1760 = vld [vmem:[%s1759] sm:$0xf]
    %v1761 = vld [vmem:[%s1759 + $0x4] sm:$0xf]
    %v1764 = vunpack.c.l.b16 %v1760
    %v1765 = vunpack.c.l.b16 %v1761
    %v1766 = vpack.c.b16 %v1765, %v1764
    %v1769 = vsel %vm310, %v1758, 0
    %1771 = vmatprep.subr.bf16.mxu0 0
    %1772 = vmatpush1.bf16.msra.mxu0 %v1766
    %1773 = vmatprep.subr.bf16.mxu0 0
    %1774 = vmatpush1.bf16.msra.mxu0 0
    %1775 = vmatprep.subr.bf16.mxu0 0
    %1776 = vmatpush1.bf16.msra.mxu0 0
    %1777 = vmatprep.subr.bf16.mxu0 0
    %1778 = vmatpush1.bf16.msra.mxu0 0
    %1779 = vmatprep.subr.bf16.mxu0 0
    %1780 = vmatpush1.bf16.msra.mxu0 0
    %1781 = vmatprep.subr.bf16.mxu0 0
    %1782 = vmatpush1.bf16.msra.mxu0 0
    %1783 = vmatprep.subr.bf16.mxu0 0
    %1784 = vmatpush1.bf16.msra.mxu0 0
    %1785 = vmatprep.subr.bf16.mxu0 0
    %1786 = vmatpush1.bf16.msra.mxu0 0
    %1787 = vmatprep.subr.bf16.mxu0 0
    %1788 = vmatpush1.bf16.msra.mxu0 0
    %1789 = vmatprep.subr.bf16.mxu0 0
    %1790 = vmatpush1.bf16.msra.mxu0 0
    %1791 = vmatprep.subr.bf16.mxu0 0
    %1792 = vmatpush1.bf16.msra.mxu0 0
    %1793 = vmatprep.subr.bf16.mxu0 0
    %1794 = vmatpush1.bf16.msra.mxu0 0
    %1795 = vmatprep.subr.bf16.mxu0 0
    %1796 = vmatpush1.bf16.msra.mxu0 0
    %1797 = vmatprep.subr.bf16.mxu0 0
    %1798 = vmatpush1.bf16.msra.mxu0 0
    %1799 = vmatprep.subr.bf16.mxu0 0
    %1800 = vmatpush1.bf16.msra.mxu0 0
    %1801 = vmatprep.subr.bf16.mxu0 0
    %1802 = vmatpush1.bf16.msra.mxu0 0
    %1803 = vmatprep.mubr.bf16.mxu0 0
    %1804 = vmatmul.mubr.bf16.gmra.mrb[0].mxu0 %v1769
    %v1805 = vpop.f32.mrb[0].mxu0
    %v1806 = vadd.f32 0.0, %v1805
    %v1807 = vpop.f32.mrb[0].mxu0
    %v1808 = vpop.f32.mrb[0].mxu0
    %v1809 = vadd.f32 0.0, %v1808
    %v1810 = vpop.f32.mrb[0].mxu0
    %1811 = vdwg.mxu0
    %v1814 = vunpack.c.l.b16 %v1441
    %v1815 = vunpack.c.l.b16 %v1442
    %v1816 = vpack.c.b16 %v1815, %v1814
    %v1819 = vsel %vm310, %v1439, 0
    %1821 = vmatprep.subr.bf16.mxu0 0
    %1822 = vmatpush1.bf16.msra.mxu0 %v1816
    %1823 = vmatprep.subr.bf16.mxu0 0
    %1824 = vmatpush1.bf16.msra.mxu0 0
    %1825 = vmatprep.subr.bf16.mxu0 0
    %1826 = vmatpush1.bf16.msra.mxu0 0
    %1827 = vmatprep.subr.bf16.mxu0 0
    %1828 = vmatpush1.bf16.msra.mxu0 0
    %1829 = vmatprep.subr.bf16.mxu0 0
    %1830 = vmatpush1.bf16.msra.mxu0 0
    %1831 = vmatprep.subr.bf16.mxu0 0
    %1832 = vmatpush1.bf16.msra.mxu0 0
    %1833 = vmatprep.subr.bf16.mxu0 0
    %1834 = vmatpush1.bf16.msra.mxu0 0
    %1835 = vmatprep.subr.bf16.mxu0 0
    %1836 = vmatpush1.bf16.msra.mxu0 0
    %1837 = vmatprep.subr.bf16.mxu0 0
    %1838 = vmatpush1.bf16.msra.mxu0 0
    %1839 = vmatprep.subr.bf16.mxu0 0
    %1840 = vmatpush1.bf16.msra.mxu0 0
    %1841 = vmatprep.subr.bf16.mxu0 0
    %1842 = vmatpush1.bf16.msra.mxu0 0
    %1843 = vmatprep.subr.bf16.mxu0 0
    %1844 = vmatpush1.bf16.msra.mxu0 0
    %1845 = vmatprep.subr.bf16.mxu0 0
    %1846 = vmatpush1.bf16.msra.mxu0 0
    %1847 = vmatprep.subr.bf16.mxu0 0
    %1848 = vmatpush1.bf16.msra.mxu0 0
    %1849 = vmatprep.subr.bf16.mxu0 0
    %1850 = vmatpush1.bf16.msra.mxu0 0
    %1851 = vmatprep.subr.bf16.mxu0 0
    %1852 = vmatpush1.bf16.msra.mxu0 0
    %1853 = vmatprep.mubr.bf16.mxu0 0
    %1854 = vmatmul.mubr.bf16.gmra.mrb[0].mxu0 %v1819
    %v1855 = vpop.f32.mrb[0].mxu0
    %v1856 = vadd.f32 %v1806, %v1855
    %v1857 = vpop.f32.mrb[0].mxu0
    %v1858 = vpop.f32.mrb[0].mxu0
    %v1859 = vadd.f32 %v1809, %v1858
    %v1860 = vpop.f32.mrb[0].mxu0
    %1861 = vdwg.mxu0
    %s1862 = scalar_lea.vmem %s8, 1
    %v1863 = vld [vmem:[%s1862] sm:$0x1]
    %v1865 = vlaneseq
    %v1866 = vshrl.u32 %v1865, 7
    %v1867 = vsub.s32 0, %v1866
    %v1868 = vrot.slane %v1863, %v1867
    %v1870 = vadd.f32 %v1856, %v1868
    %v1871 = vadd.f32 %v1859, %v1868
    %v1872 = vadd.f32 %v1870, %v1118
    %v1873 = vadd.f32 %v1871, %v1119
    %s1874 = scalar_lea.vmem %s9, 1
    %v1875 = vld [vmem:[%s1874] sm:$0x1]
    %s1876 = scalar_lea.vmem %s10, 1
    %v1877 = vld [vmem:[%s1876] sm:$0x1]
    %v1878 = vsel %vm62, %v1872, 0.0
    %1879 = vadd.xlane.f32.xlu0 %v1878
    %v1880 = vpop.xlane.xlu0 %1879
    %v1881 = vsel %vm62, %v1873, 0.0
    %1882 = vadd.xlane.f32.xlu0 %v1881
    %v1883 = vpop.xlane.xlu0 %1882
    %v1884 = vmul.f32 %v1880, %v69
    %v1885 = vmul.f32 %v1883, %v69
    %v1886 = vsub.f32 %v1872, %v1884
    %v1887 = vsub.f32 %v1873, %v1885
    %v1888 = vmul.f32 %v1886, %v1886
    %v1889 = vmul.f32 %v1887, %v1887
    %v1890 = vsel %vm62, %v1888, 0.0
    %1891 = vadd.xlane.f32.xlu0 %v1890
    %v1892 = vpop.xlane.xlu0 %1891
    %v1893 = vsel %vm62, %v1889, 0.0
    %1894 = vadd.xlane.f32.xlu0 %v1893
    %v1895 = vpop.xlane.xlu0 %1894
    %v1896 = vmul.f32 %v1892, %v69
    %v1897 = vmul.f32 %v1895, %v69
    %v1898 = vadd.f32 %v1896, 1e-12
    %v1899 = vadd.f32 %v1897, 1e-12
    %v1900 = vrsqrt.pop %v1898
    %v1901 = vrsqrt.pop %v1899
    %v1902 = vmul.f32 %v1886, %v1900
    %v1903 = vmul.f32 %v1887, %v1901
    %v1905 = vlaneseq
    %v1906 = vshrl.u32 %v1905, 7
    %v1907 = vsub.s32 0, %v1906
    %v1908 = vrot.slane %v1875, %v1907
    %v1910 = vmul.f32 %v1902, %v1908
    %v1911 = vmul.f32 %v1903, %v1908
    %v1913 = vlaneseq
    %v1914 = vshrl.u32 %v1913, 7
    %v1915 = vsub.s32 0, %v1914
    %v1916 = vrot.slane %v1877, %v1915
    %v1918 = vadd.f32 %v1910, %v1916
    %v1919 = vadd.f32 %v1911, %v1916
    %v1920 = vpack.c.bf16 %v1919, %v1918
    %s1921 = scalar_lea.vmem %s11, 16
    %v1922 = vld [vmem:[%s1921] sm:$0xf]
    %v1923 = vld [vmem:[%s1921 + $0x4] sm:$0xf]
    %v1924 = vld [vmem:[%s1921 + $0x8] sm:$0xf]
    %v1925 = vld [vmem:[%s1921 + $0xc] sm:$0xf]
    %s1926 = scalar_lea.vmem %s12, 1
    %v1927 = vld [vmem:[%s1926] sm:$0x1]
    %v1929 = vlaneseq
    %v1930 = vshrl.u32 %v1929, 7
    %v1931 = vsub.s32 0, %v1930
    %v1932 = vrot.slane %v1927, %v1931
    %v1938 = vunpack.c.l.b16 %v1922
    %v1939 = vunpack.c.l.b16 %v1923
    %v1940 = vunpack.c.l.b16 %v1924
    %v1941 = vunpack.c.l.b16 %v1925
    %v1942 = vpack.c.b16 %v1939, %v1938
    %v1943 = vpack.c.b16 %v1941, %v1940
    %v1947 = vsel %vm62, %v1920, 0
    %1949 = vmatprep.subr.bf16.mxu0 0
    %1950 = vmatpush1.bf16.msra.mxu0 %v1942
    %1951 = vmatprep.subr.bf16.mxu0 0
    %1952 = vmatpush1.bf16.msra.mxu0 %v1943
    %1953 = vmatprep.subr.bf16.mxu0 0
    %1954 = vmatpush1.bf16.msra.mxu0 0
    %1955 = vmatprep.subr.bf16.mxu0 0
    %1956 = vmatpush1.bf16.msra.mxu0 0
    %1957 = vmatprep.subr.bf16.mxu0 0
    %1958 = vmatpush1.bf16.msra.mxu0 0
    %1959 = vmatprep.subr.bf16.mxu0 0
    %1960 = vmatpush1.bf16.msra.mxu0 0
    %1961 = vmatprep.subr.bf16.mxu0 0
    %1962 = vmatpush1.bf16.msra.mxu0 0
    %1963 = vmatprep.subr.bf16.mxu0 0
    %1964 = vmatpush1.bf16.msra.mxu0 0
    %1965 = vmatprep.subr.bf16.mxu0 0
    %1966 = vmatpush1.bf16.msra.mxu0 0
    %1967 = vmatprep.subr.bf16.mxu0 0
    %1968 = vmatpush1.bf16.msra.mxu0 0
    %1969 = vmatprep.subr.bf16.mxu0 0
    %1970 = vmatpush1.bf16.msra.mxu0 0
    %1971 = vmatprep.subr.bf16.mxu0 0
    %1972 = vmatpush1.bf16.msra.mxu0 0
    %1973 = vmatprep.subr.bf16.mxu0 0
    %1974 = vmatpush1.bf16.msra.mxu0 0
    %1975 = vmatprep.subr.bf16.mxu0 0
    %1976 = vmatpush1.bf16.msra.mxu0 0
    %1977 = vmatprep.subr.bf16.mxu0 0
    %1978 = vmatpush1.bf16.msra.mxu0 0
    %1979 = vmatprep.subr.bf16.mxu0 0
    %1980 = vmatpush1.bf16.msra.mxu0 0
    %1981 = vmatprep.mubr.bf16.mxu0 0
    %1982 = vmatmul.mubr.bf16.gmra.mrb[0].mxu0 %v1947
    %v1983 = vpop.f32.mrb[0].mxu0
    %v1984 = vadd.f32 %v1932, %v1983
    %v1985 = vpop.f32.mrb[0].mxu0
    %v1986 = vpop.f32.mrb[0].mxu0
    %v1987 = vadd.f32 %v1932, %v1986
    %v1988 = vpop.f32.mrb[0].mxu0
    %1989 = vdwg.mxu0
    %v1990 = vmul.f32 %v1984, %v1984
    %v1991 = vmul.f32 %v1987, %v1987
    %v1992 = vmul.f32 %v1984, %v1990
    %v1993 = vmul.f32 %v1987, %v1991
    %v1994 = vmul.f32 %v1992, 0.044715
    %v1995 = vmul.f32 %v1993, 0.044715
    %v1996 = vadd.f32 %v1984, %v1994
    %v1997 = vadd.f32 %v1987, %v1995
    %v1998 = vmul.f32 %v1996, 0.7978846
    %v1999 = vmul.f32 %v1997, 0.7978846
    %v2000 = vtanh.pop %v1998
    %v2001 = vtanh.pop %v1999
    %v2002 = vadd.f32 %v2000, 1.0
    %v2003 = vadd.f32 %v2001, 1.0
    %v2004 = vmul.f32 %v2002, 0.5
    %v2005 = vmul.f32 %v2003, 0.5
    %v2006 = vmul.f32 %v1984, %v2004
    %v2007 = vmul.f32 %v1987, %v2005
    %v2008 = vpack.c.bf16 %v2007, %v2006
    %s2009 = scalar_lea.vmem %s13, 32
    %v2010 = vld [vmem:[%s2009] sm:$0xf]
    %v2011 = vld [vmem:[%s2009 + $0x4] sm:$0xf]
    %v2012 = vld [vmem:[%s2009 + $0x8] sm:$0xf]
    %v2013 = vld [vmem:[%s2009 + $0xc] sm:$0xf]
    %v2014 = vld [vmem:[%s2009 + $0x10] sm:$0xf]
    %v2015 = vld [vmem:[%s2009 + $0x14] sm:$0xf]
    %v2016 = vld [vmem:[%s2009 + $0x18] sm:$0xf]
    %v2017 = vld [vmem:[%s2009 + $0x1c] sm:$0xf]
    %s2018 = scalar_lea.vmem %s14, 1
    %v2019 = vld [vmem:[%s2018] sm:$0x1]
    %v2021 = vlaneseq
    %v2022 = vshrl.u32 %v2021, 7
    %v2023 = vsub.s32 0, %v2022
    %v2024 = vrot.slane %v2019, %v2023
    %v2034 = vunpack.c.l.b16 %v2010
    %v2035 = vunpack.c.l.b16 %v2011
    %v2036 = vunpack.c.l.b16 %v2012
    %v2037 = vunpack.c.l.b16 %v2013
    %v2038 = vunpack.c.l.b16 %v2014
    %v2039 = vunpack.c.l.b16 %v2015
    %v2040 = vunpack.c.l.b16 %v2016
    %v2041 = vunpack.c.l.b16 %v2017
    %v2042 = vpack.c.b16 %v2035, %v2034
    %v2043 = vpack.c.b16 %v2037, %v2036
    %v2044 = vpack.c.b16 %v2039, %v2038
    %v2045 = vpack.c.b16 %v2041, %v2040
    %v2051 = vsel %vm1029, %v2008, 0
    %2053 = vmatprep.subr.bf16.mxu0 0
    %2054 = vmatpush1.bf16.msra.mxu0 %v2042
    %2055 = vmatprep.subr.bf16.mxu0 0
    %2056 = vmatpush1.bf16.msra.mxu0 %v2043
    %2057 = vmatprep.subr.bf16.mxu0 0
    %2058 = vmatpush1.bf16.msra.mxu0 %v2044
    %2059 = vmatprep.subr.bf16.mxu0 0
    %2060 = vmatpush1.bf16.msra.mxu0 %v2045
    %2061 = vmatprep.subr.bf16.mxu0 0
    %2062 = vmatpush1.bf16.msra.mxu0 0
    %2063 = vmatprep.subr.bf16.mxu0 0
    %2064 = vmatpush1.bf16.msra.mxu0 0
    %2065 = vmatprep.subr.bf16.mxu0 0
    %2066 = vmatpush1.bf16.msra.mxu0 0
    %2067 = vmatprep.subr.bf16.mxu0 0
    %2068 = vmatpush1.bf16.msra.mxu0 0
    %2069 = vmatprep.subr.bf16.mxu0 0
    %2070 = vmatpush1.bf16.msra.mxu0 0
    %2071 = vmatprep.subr.bf16.mxu0 0
    %2072 = vmatpush1.bf16.msra.mxu0 0
    %2073 = vmatprep.subr.bf16.mxu0 0
    %2074 = vmatpush1.bf16.msra.mxu0 0
    %2075 = vmatprep.subr.bf16.mxu0 0
    %2076 = vmatpush1.bf16.msra.mxu0 0
    %2077 = vmatprep.subr.bf16.mxu0 0
    %2078 = vmatpush1.bf16.msra.mxu0 0
    %2079 = vmatprep.subr.bf16.mxu0 0
    %2080 = vmatpush1.bf16.msra.mxu0 0
    %2081 = vmatprep.subr.bf16.mxu0 0
    %2082 = vmatpush1.bf16.msra.mxu0 0
    %2083 = vmatprep.subr.bf16.mxu0 0
    %2084 = vmatpush1.bf16.msra.mxu0 0
    %2085 = vmatprep.mubr.bf16.mxu0 0
    %2086 = vmatmul.mubr.bf16.gmra.mrb[0].mxu0 %v2051
    %v2087 = vpop.f32.mrb[0].mxu0
    %v2088 = vadd.f32 %v2024, %v2087
    %v2089 = vpop.f32.mrb[0].mxu0
    %v2090 = vpop.f32.mrb[0].mxu0
    %v2091 = vadd.f32 %v2024, %v2090
    %v2092 = vpop.f32.mrb[0].mxu0
    %2093 = vdwg.mxu0
    %v2094 = vadd.f32 %v2088, %v1918
    %v2095 = vadd.f32 %v2091, %v1919
    %s2096 = scalar_lea.vmem %s15, 1
    %v2097 = vld [vmem:[%s2096] sm:$0x1]
    %s2098 = scalar_lea.vmem %s16, 1
    %v2099 = vld [vmem:[%s2098] sm:$0x1]
    %v2100 = vsel %vm62, %v2094, 0.0
    %2101 = vadd.xlane.f32.xlu0 %v2100
    %v2102 = vpop.xlane.xlu0 %2101
    %v2103 = vsel %vm62, %v2095, 0.0
    %2104 = vadd.xlane.f32.xlu0 %v2103
    %v2105 = vpop.xlane.xlu0 %2104
    %v2106 = vmul.f32 %v2102, %v69
    %v2107 = vmul.f32 %v2105, %v69
    %v2108 = vsub.f32 %v2094, %v2106
    %v2109 = vsub.f32 %v2095, %v2107
    %v2110 = vmul.f32 %v2108, %v2108
    %v2111 = vmul.f32 %v2109, %v2109
    %v2112 = vsel %vm62, %v2110, 0.0
    %2113 = vadd.xlane.f32.xlu0 %v2112
    %v2114 = vpop.xlane.xlu0 %2113
    %v2115 = vsel %vm62, %v2111, 0.0
    %2116 = vadd.xlane.f32.xlu0 %v2115
    %v2117 = vpop.xlane.xlu0 %2116
    %v2118 = vmul.f32 %v2114, %v69
    %v2119 = vmul.f32 %v2117, %v69
    %v2120 = vadd.f32 %v2118, 1e-12
    %v2121 = vadd.f32 %v2119, 1e-12
    %v2122 = vrsqrt.pop %v2120
    %v2123 = vrsqrt.pop %v2121
    %v2124 = vmul.f32 %v2108, %v2122
    %v2125 = vmul.f32 %v2109, %v2123
    %v2127 = vlaneseq
    %v2128 = vshrl.u32 %v2127, 7
    %v2129 = vsub.s32 0, %v2128
    %v2130 = vrot.slane %v2097, %v2129
    %v2132 = vmul.f32 %v2124, %v2130
    %v2133 = vmul.f32 %v2125, %v2130
    %v2135 = vlaneseq
    %v2136 = vshrl.u32 %v2135, 7
    %v2137 = vsub.s32 0, %v2136
    %v2138 = vrot.slane %v2099, %v2137
    %v2140 = vadd.f32 %v2132, %v2138
    %v2141 = vadd.f32 %v2133, %v2138
    %v2142 = vld [vmem:[%s2] sm:$0x3]
    %v2144 = vsel %vm310, %v2142, 0
    %2146 = vmatprep.subr.mxu0 0.0
    %2147 = vmatpush1.msra.mxu0 %v2140
    %2148 = vmatprep.subr.mxu0 0.0
    %2149 = vmatpush1.msra.mxu0 %v2141
    %2150 = vmatprep.subr.mxu0 0.0
    %2151 = vmatpush1.msra.mxu0 0.0
    %2152 = vmatprep.subr.mxu0 0.0
    %2153 = vmatpush1.msra.mxu0 0.0
    %2154 = vmatprep.subr.mxu0 0.0
    %2155 = vmatpush1.msra.mxu0 0.0
    %2156 = vmatprep.subr.mxu0 0.0
    %2157 = vmatpush1.msra.mxu0 0.0
    %2158 = vmatprep.subr.mxu0 0.0
    %2159 = vmatpush1.msra.mxu0 0.0
    %2160 = vmatprep.subr.mxu0 0.0
    %2161 = vmatpush1.msra.mxu0 0.0
    %2162 = vmatprep.subr.mxu0 0.0
    %2163 = vmatpush1.msra.mxu0 0.0
    %2164 = vmatprep.subr.mxu0 0.0
    %2165 = vmatpush1.msra.mxu0 0.0
    %2166 = vmatprep.subr.mxu0 0.0
    %2167 = vmatpush1.msra.mxu0 0.0
    %2168 = vmatprep.subr.mxu0 0.0
    %2169 = vmatpush1.msra.mxu0 0.0
    %2170 = vmatprep.subr.mxu0 0.0
    %2171 = vmatpush1.msra.mxu0 0.0
    %2172 = vmatprep.subr.mxu0 0.0
    %2173 = vmatpush1.msra.mxu0 0.0
    %2174 = vmatprep.subr.mxu0 0.0
    %2175 = vmatpush1.msra.mxu0 0.0
    %2176 = vmatprep.subr.mxu0 0.0
    %2177 = vmatpush1.msra.mxu0 0.0
    %2178 = vmatprep.subr.mxu0 0.0
    %2179 = vmatpush1.msra.mxu0 0.0
    %2180 = vmatprep.subr.mxu0 0.0
    %2181 = vmatpush1.msra.mxu0 0.0
    %2182 = vmatprep.subr.mxu0 0.0
    %2183 = vmatpush1.msra.mxu0 0.0
    %2184 = vmatprep.subr.mxu0 0.0
    %2185 = vmatpush1.msra.mxu0 0.0
    %2186 = vmatprep.subr.mxu0 0.0
    %2187 = vmatpush1.msra.mxu0 0.0
    %2188 = vmatprep.subr.mxu0 0.0
    %2189 = vmatpush1.msra.mxu0 0.0
    %2190 = vmatprep.subr.mxu0 0.0
    %2191 = vmatpush1.msra.mxu0 0.0
    %2192 = vmatprep.subr.mxu0 0.0
    %2193 = vmatpush1.msra.mxu0 0.0
    %2194 = vmatprep.subr.mxu0 0.0
    %2195 = vmatpush1.msra.mxu0 0.0
    %2196 = vmatprep.subr.mxu0 0.0
    %2197 = vmatpush1.msra.mxu0 0.0
    %2198 = vmatprep.subr.mxu0 0.0
    %2199 = vmatpush1.msra.mxu0 0.0
    %2200 = vmatprep.subr.mxu0 0.0
    %2201 = vmatpush1.msra.mxu0 0.0
    %2202 = vmatprep.subr.mxu0 0.0
    %2203 = vmatpush1.msra.mxu0 0.0
    %2204 = vmatprep.subr.mxu0 0.0
    %2205 = vmatpush1.msra.mxu0 0.0
    %2206 = vmatprep.subr.mxu0 0.0
    %2207 = vmatpush1.msra.mxu0 0.0
    %2208 = vmatprep.subr.mxu0 0.0
    %2209 = vmatpush1.msra.mxu0 0.0
    %2210 = vmatprep.mubr.f32.mxu0 0.0
    %2211 = vmatmul.mubr.f32.gmra.mrb[0].mxu0 %v2144
    %v2212 = vpop.f32.mrb[0].mxu0
    %v2213 = vadd.f32 0.0, %v2212
    %v2214 = vpop.f32.mrb[0].mxu0
    %2215 = vdwg.mxu0
    %vm2216 = vcmask 123904
    %v2217 = vsel %vm2216, %v2142, 0.0
    %2218 = vadd.xlane.f32.xlu0 %v2217
    %v2219 = vpop.xlane.xlu0 %2218
    %v2220 = vmax.f32 %v2219, 1e-09
    %v2221 = vrcp.pop %v2220
    %v2222 = vmul.f32 %v2213, %v2221
    %vm2223 = vcmask 254976
    %2224 = vst.msk [vmem:[#allocation2] sm:$0x3] %vm2223, %v2222
    // Predicated region
    $region70: #{custom_sentence_transformer.1} parent=1 // pred_check
      _
    $region71: #{custom_sentence_transformer.1} parent=1 // pred_check_branch
      %2226 = sbr.rel (0) target = $region73
    $region72: #{custom_sentence_transformer.1} parent=1 // pred_region
      %s2228 = ssub.s32 32, 32
      %2229 = vsyncadd [#allocation3], %s2228
      %s2231 = sshll.u32 [#allocation2], 4
      %s2232 = int_to_ptr.vmem [resolvable:$true] %s2231
      %2234 = dma.vmem_to_hbm [thread:$0]  %s2232, 32, %s17, [#allocation3]
    $region73: #{custom_sentence_transformer.1} parent=1 // pred_fallthru
      _
    // Predicated region
    $region74: #{custom_sentence_transformer.1} parent=1 // pred_check
      _
    $region75: #{custom_sentence_transformer.1} parent=1 // pred_check_branch
      %2236 = sbr.rel (0) target = $region77
    $region76: #{custom_sentence_transformer.1} parent=1 // pred_region
      %2237 = dma.done [#allocation3], 32
    $region77: #{custom_sentence_transformer.1} parent=1 // pred_fallthru
      _
    %2238 = vsyncpa [#allocation3], 1

</llo_original>
